<compile_context>
chip_gen: v7x
topology: tpu7x:2x2x1
jax: 0.10.0
libtpu: 0.0.40
codegen_flags: <defaults>
</compile_context>

<pallas_src>
import functools

import jax
import jax.numpy as jnp
from jax.experimental import pallas as pl
from jax.experimental.pallas import tpu as pltpu


def _bottleneck_kernel(x_ref, w1_ref, s1_ref, b1_ref, w2_ref, s2_ref, b2_ref,
                       o_ref, mid_ref, *, TH, W):
    """Grid = (batch, row_strip).  One TH-row output strip per step.

    x_ref  : (1, H+4, W+2, Cin)  full image, rows padded by 2, cols by 1
    w1_ref : (9*Cin, Cmid)       conv1 weights, taps folded into contraction dim
    s1/b1  : (1, Cmid)           folded bn1 scale / bias (f32)
    w2_ref : (9*Cmid, Cout)      conv2 weights, taps folded into contraction dim
    s2/b2  : (1, Cout)           folded bn2 scale / bias (f32)
    o_ref  : (1, TH, W, Cout)    output strip
    mid_ref: (TH+2, W+2, Cmid)   VMEM scratch: padded bn1 intermediate (strip+halo)
    """
    r = pl.program_id(1)
    num_strips = pl.num_programs(1)

    Cin = x_ref.shape[3]
    Cmid = w1_ref.shape[1]
    Cout = w2_ref.shape[1]
    HALO = TH + 2  # bn1 rows this strip's conv2 needs (1-row halo each side)

    # ---- conv1 over strip + halo as ONE im2col matmul (K = 9*Cin) ----------
    # Strip r's extended conv1 output (rows r*TH-1 .. r*TH+TH) needs padded
    # input rows [r*TH, r*TH + TH + 4).
    slab = x_ref[0, pl.ds(r * TH, TH + 4), :, :]              # (TH+4, W+2, Cin)
    taps1 = [slab[kh:kh + HALO, kw:kw + W, :]
             for kh in range(3) for kw in range(3)]
    patch1 = jnp.concatenate(taps1, axis=-1).reshape(HALO * W, 9 * Cin)
    acc1 = jnp.dot(patch1, w1_ref[...], preferred_element_type=jnp.float32)
    y1 = acc1 * s1_ref[0] + b1_ref[0]                         # bn1 (f32)

    # ---- stage padded intermediate in VMEM scratch (interior fully rewritten,
    #      only the halo ring is zeroed; rows only at image boundaries) -------
    mid_ref[:, 1:W + 1, :] = y1.reshape(HALO, W, Cmid).astype(mid_ref.dtype)
    zero_col = jnp.zeros((HALO, 1, Cmid), mid_ref.dtype)
    mid_ref[:, 0:1, :] = zero_col                     # conv2 left zero pad
    mid_ref[:, W + 1:W + 2, :] = zero_col             # conv2 right zero pad

    zero_row = jnp.zeros((1, W + 2, Cmid), mid_ref.dtype)

    @pl.when(r == 0)
    def _():                                          # top image boundary
        mid_ref[0:1, :, :] = zero_row

    @pl.when(r == num_strips - 1)
    def _():                                          # bottom image boundary
        mid_ref[TH + 1:TH + 2, :, :] = zero_row

    # ---- conv2 as ONE im2col matmul (K = 9*Cmid) + bn2 + relu ---------------
    m = mid_ref[...]
    taps2 = [m[kh:kh + TH, kw:kw + W, :]
             for kh in range(3) for kw in range(3)]
    patch2 = jnp.concatenate(taps2, axis=-1).reshape(TH * W, 9 * Cmid)
    acc2 = jnp.dot(patch2, w2_ref[...], preferred_element_type=jnp.float32)
    y2 = jnp.maximum(acc2 * s2_ref[0] + b2_ref[0], 0.0)
    o_ref[0] = y2.reshape(TH, W, Cout).astype(o_ref.dtype)


def add_custom_bottleneck(x_nchw, params, *, row_tile=None,
                          matmul_dtype=jnp.bfloat16):
    """x_nchw: (N, Cin, H, W) f32.  Returns (N, 256, H, W) f32.

    matmul_dtype=jnp.bfloat16 uses bf16 MXU operands with f32 accumulation
    (recommended on v6e/v7x); pass jnp.float32 for exact f32 semantics.
    row_tile: output row-strip height (must divide H); None -> whole image.
    """
    eps = 1e-5
    w1 = params["w1"]                       # (3, 3, Cin, Cmid) HWIO
    w2 = params["w2"]                       # (3, 3, Cmid, 256) HWIO
    Cin, Cmid = int(w1.shape[2]), int(w1.shape[3])
    Cout = int(w2.shape[3])

    # Fold eval-mode BatchNorm into per-channel scale/bias (f32).
    s1 = params["bn1_gamma"] / jnp.sqrt(params["bn1_var"] + eps)
    b1 = params["bn1_beta"] - params["bn1_mean"] * s1
    s2 = params["bn2_gamma"] / jnp.sqrt(params["bn2_var"] + eps)
    b2 = params["bn2_beta"] - params["bn2_mean"] * s2
    s1 = s1.reshape(1, Cmid).astype(jnp.float32)
    b1 = b1.reshape(1, Cmid).astype(jnp.float32)
    s2 = s2.reshape(1, Cout).astype(jnp.float32)
    b2 = b2.reshape(1, Cout).astype(jnp.float32)

    # im2col-folded weights: (3,3,I,O) -> (9*I, O); row = (kh*3 + kw)*I + i.
    w1f = w1.reshape(9 * Cin, Cmid).astype(matmul_dtype)
    w2f = w2.reshape(9 * Cmid, Cout).astype(matmul_dtype)

    N, _, H, W = x_nchw.shape
    TH = H if row_tile is None else int(row_tile)
    if H % TH != 0:
        TH = H
    RS = H // TH

    # NCHW -> NHWC; pad rows by 2 (strip halo + conv1 pad) and cols by 1.
    x = jnp.transpose(x_nchw, (0, 2, 3, 1)).astype(matmul_dtype)
    x_pad = jnp.pad(x, ((0, 0), (2, 2), (1, 1), (0, 0)))

    kernel = functools.partial(_bottleneck_kernel, TH=TH, W=W)

    # Rough VMEM budget (double-buffered blocks + scratch + temporaries).
    itm = jnp.dtype(matmul_dtype).itemsize
    est = (2 * (H + 4) * (W + 2) * Cin * itm
           + 2 * TH * W * Cout * 4
           + (TH + 2) * (W + 2) * Cmid * itm
           + (9 * Cin * Cmid + 9 * Cmid * Cout) * itm
           + (2 * Cmid + 2 * Cout) * 4
           + (TH + 2) * W * 9 * Cin * itm
           + TH * W * 9 * Cmid * itm
           + 3 * TH * W * Cout * 4
           + (TH + 2) * W * Cmid * 4)
    est = int(2 * est + (2 << 20))
    vmem_limit = None if est <= (16 << 20) else min(est, 64 << 20)

    out_nhwc = pl.pallas_call(
        kernel,
        out_shape=jax.ShapeDtypeStruct((N, H, W, Cout), jnp.float32),
        grid_spec=pltpu.PrefetchScalarGridSpec(
            num_scalar_prefetch=0,
            grid=(N, RS),
            in_specs=[
                pl.BlockSpec((1, H + 4, W + 2, Cin), lambda n, r: (n, 0, 0, 0)),
                pl.BlockSpec((9 * Cin, Cmid), lambda n, r: (0, 0)),
                pl.BlockSpec((1, Cmid), lambda n, r: (0, 0)),
                pl.BlockSpec((1, Cmid), lambda n, r: (0, 0)),
                pl.BlockSpec((9 * Cmid, Cout), lambda n, r: (0, 0)),
                pl.BlockSpec((1, Cout), lambda n, r: (0, 0)),
                pl.BlockSpec((1, Cout), lambda n, r: (0, 0)),
            ],
            out_specs=pl.BlockSpec((1, TH, W, Cout), lambda n, r: (n, r, 0, 0)),
            scratch_shapes=[pltpu.VMEM((TH + 2, W + 2, Cmid), matmul_dtype)],
        ),
        compiler_params=pltpu.CompilerParams(
            dimension_semantics=("parallel", "parallel"),
            vmem_limit_bytes=vmem_limit),
    )(x_pad, w1f, s1, b1, w2f, s2, b2)

    # NHWC -> NCHW to match PyTorch.
    return jnp.transpose(out_nhwc, (0, 3, 1, 2))


def _reference(x_nchw, params, matmul_dtype=jnp.float32):
    """Pure-JAX reference (eval-mode BN) mirroring the kernel's dtype choices."""
    eps = 1e-5
    dn = ("NHWC", "HWIO", "NHWC")
    x = jnp.transpose(x_nchw, (0, 2, 3, 1)).astype(matmul_dtype)
    w1 = params["w1"].astype(matmul_dtype)
    w2 = params["w2"].astype(matmul_dtype)

    y = jax.lax.conv_general_dilated(x, w1, (1, 1), ((1, 1), (1, 1)),
                                     dimension_numbers=dn,
                                     preferred_element_type=jnp.float32)
    s1 = params["bn1_gamma"] / jnp.sqrt(params["bn1_var"] + eps)
    y = (y - params["bn1_mean"]) * s1 + params["bn1_beta"]
    y = y.astype(matmul_dtype)  # matches the kernel's staged intermediate

    y = jax.lax.conv_general_dilated(y, w2, (1, 1), ((1, 1), (1, 1)),
                                     dimension_numbers=dn,
                                     preferred_element_type=jnp.float32)
    s2 = params["bn2_gamma"] / jnp.sqrt(params["bn2_var"] + eps)
    y = (y - params["bn2_mean"]) * s2 + params["bn2_beta"]
    y = jnp.maximum(y, 0.0)
    return jnp.transpose(y, (0, 3, 1, 2))


def _init_params(key, in_channels, out_channels):
    """Deterministic parameter init matching the module's shapes."""
    ks = jax.random.split(key, 8)
    Cout2 = 256
    return {
        # conv weights in HWIO layout (PyTorch OIHW transposed).
        "w1": 0.1 * jax.random.normal(ks[0], (3, 3, in_channels, out_channels),
                                      jnp.float32),
        "w2": 0.1 * jax.random.normal(ks[1], (3, 3, out_channels, Cout2),
                                      jnp.float32),
        "bn1_gamma": 1.0 + 0.1 * jax.random.normal(ks[2], (out_channels,),
                                                   jnp.float32),
        "bn1_beta": 0.1 * jax.random.normal(ks[3], (out_channels,),
                                            jnp.float32),
        "bn1_mean": 0.05 * jax.random.normal(ks[4], (out_channels,),
                                             jnp.float32),
        "bn1_var": jnp.abs(jax.random.normal(ks[5], (out_channels,),
                                             jnp.float32)) + 0.5,
        "bn2_gamma": 1.0 + 0.1 * jax.random.normal(ks[6], (Cout2,),
                                                   jnp.float32),
        "bn2_beta": 0.1 * jax.random.normal(ks[7], (Cout2,), jnp.float32),
        "bn2_mean": jnp.zeros((Cout2,), jnp.float32),
        "bn2_var": jnp.ones((Cout2,), jnp.float32),
    }


if __name__ == "__main__":
    key = jax.random.PRNGKey(0)
    k_param, k_x = jax.random.split(key)

    N, Cin, Cmid, H, W = 2, 4, 8, 16, 16
    params = _init_params(k_param, in_channels=Cin, out_channels=Cmid)
    x = jax.random.normal(k_x, (N, Cin, H, W), jnp.float32)

    ref_f32 = jax.block_until_ready(_reference(x, params, jnp.float32))
    ref_bf16 = jax.block_until_ready(_reference(x, params, jnp.bfloat16))

    # 1) exact f32 path, whole-image strip.
    out = jax.block_until_ready(
        add_custom_bottleneck(x, params, matmul_dtype=jnp.float32))
    assert out.shape == (N, 256, H, W), out.shape
    assert jnp.allclose(out, ref_f32, atol=1e-4, rtol=1e-4), (
        float(jnp.max(jnp.abs(out - ref_f32))))

    # 2) f32 path with row-strip tiling (v7x VMEM / megacore feedback).
    out = jax.block_until_ready(
        add_custom_bottleneck(x, params, matmul_dtype=jnp.float32, row_tile=8))
    assert jnp.allclose(out, ref_f32, atol=1e-4, rtol=1e-4), (
        float(jnp.max(jnp.abs(out - ref_f32))))

    # 3) bf16 MXU operands + f32 accumulation (v6e/v7x feedback).
    out = jax.block_until_ready(
        add_custom_bottleneck(x, params, matmul_dtype=jnp.bfloat16))
    assert jnp.allclose(out, ref_bf16, atol=1e-2, rtol=1e-2), (
        float(jnp.max(jnp.abs(out - ref_bf16))))

    # 4) bf16 + row-strip tiling combined.
    out = jax.block_until_ready(
        add_custom_bottleneck(x, params, matmul_dtype=jnp.bfloat16, row_tile=8))
    assert jnp.allclose(out, ref_bf16, atol=1e-2, rtol=1e-2), (
        float(jnp.max(jnp.abs(out - ref_bf16))))

    print("KERNEL_OK")
</pallas_src>

<mosaic_0001>
module attributes {stable_mosaic.version = 11 : i64} {
  func.func @_bottleneck_kernel(%arg0: i32, %arg1: i32, %arg2: memref<1x20x18x4xf32, #tpu.memory_space<vmem>>, %arg3: memref<36x8xf32, #tpu.memory_space<vmem>>, %arg4: memref<1x8xf32, #tpu.memory_space<vmem>>, %arg5: memref<1x8xf32, #tpu.memory_space<vmem>>, %arg6: memref<72x256xf32, #tpu.memory_space<vmem>>, %arg7: memref<1x256xf32, #tpu.memory_space<vmem>>, %arg8: memref<1x256xf32, #tpu.memory_space<vmem>>, %arg9: memref<1x16x16x256xf32, #tpu.memory_space<vmem>>, %arg10: memref<18x18x8xf32, #tpu.memory_space<vmem>>) attributes {dimension_semantics = [#tpu.dimension_semantics<parallel>, #tpu.dimension_semantics<parallel>], iteration_bounds = array<i64: 2, 1>, scalar_prefetch = 0 : i64, scratch_operands = 1 : i64, tpu.core_type = #tpu.core_type<tc>, window_params = [{transform_indices = @transform_0, window_bounds = array<i64: 1, 20, 18, 4>}, {pipeline_mode = #tpu.pipeline_mode<synchronous>, transform_indices = @transform_1, window_bounds = array<i64: 36, 8>}, {pipeline_mode = #tpu.pipeline_mode<synchronous>, transform_indices = @transform_2, window_bounds = array<i64: 1, 8>}, {pipeline_mode = #tpu.pipeline_mode<synchronous>, transform_indices = @transform_3, window_bounds = array<i64: 1, 8>}, {pipeline_mode = #tpu.pipeline_mode<synchronous>, transform_indices = @transform_4, window_bounds = array<i64: 72, 256>}, {pipeline_mode = #tpu.pipeline_mode<synchronous>, transform_indices = @transform_5, window_bounds = array<i64: 1, 256>}, {pipeline_mode = #tpu.pipeline_mode<synchronous>, transform_indices = @transform_6, window_bounds = array<i64: 1, 256>}, {transform_indices = @transform_7, window_bounds = array<i64: 1, 16, 16, 256>}]} {
    %c16_i32 = arith.constant 16 : i32
    %0 = arith.muli %arg1, %c16_i32 : i32
    %c0 = arith.constant 0 : index
    %1 = arith.index_cast %0 : i32 to index
    %c0_0 = arith.constant 0 : index
    %c0_1 = arith.constant 0 : index
    %2 = vector.load %arg2[%c0, %1, %c0_0, %c0_1] : memref<1x20x18x4xf32, #tpu.memory_space<vmem>>, vector<1x20x18x4xf32>
    %3 = vector.shape_cast %2 : vector<1x20x18x4xf32> to vector<20x18x4xf32>
    %4 = vector.extract_strided_slice %3 {offsets = [0, 0, 0], sizes = [18, 16, 4], strides = [1, 1, 1]} : vector<20x18x4xf32> to vector<18x16x4xf32>
    %5 = vector.extract_strided_slice %3 {offsets = [0, 1, 0], sizes = [18, 16, 4], strides = [1, 1, 1]} : vector<20x18x4xf32> to vector<18x16x4xf32>
    %6 = vector.extract_strided_slice %3 {offsets = [0, 2, 0], sizes = [18, 16, 4], strides = [1, 1, 1]} : vector<20x18x4xf32> to vector<18x16x4xf32>
    %7 = vector.extract_strided_slice %3 {offsets = [1, 0, 0], sizes = [18, 16, 4], strides = [1, 1, 1]} : vector<20x18x4xf32> to vector<18x16x4xf32>
    %8 = vector.extract_strided_slice %3 {offsets = [1, 1, 0], sizes = [18, 16, 4], strides = [1, 1, 1]} : vector<20x18x4xf32> to vector<18x16x4xf32>
    %9 = vector.extract_strided_slice %3 {offsets = [1, 2, 0], sizes = [18, 16, 4], strides = [1, 1, 1]} : vector<20x18x4xf32> to vector<18x16x4xf32>
    %10 = vector.extract_strided_slice %3 {offsets = [2, 0, 0], sizes = [18, 16, 4], strides = [1, 1, 1]} : vector<20x18x4xf32> to vector<18x16x4xf32>
    %11 = vector.extract_strided_slice %3 {offsets = [2, 1, 0], sizes = [18, 16, 4], strides = [1, 1, 1]} : vector<20x18x4xf32> to vector<18x16x4xf32>
    %12 = vector.extract_strided_slice %3 {offsets = [2, 2, 0], sizes = [18, 16, 4], strides = [1, 1, 1]} : vector<20x18x4xf32> to vector<18x16x4xf32>
    %13 = tpu.concatenate %4, %5, %6, %7, %8, %9, %10, %11, %12 in 2 : vector<18x16x4xf32>, vector<18x16x4xf32>, vector<18x16x4xf32>, vector<18x16x4xf32>, vector<18x16x4xf32>, vector<18x16x4xf32>, vector<18x16x4xf32>, vector<18x16x4xf32>, vector<18x16x4xf32> -> vector<18x16x36xf32>
    %14 = vector.shape_cast %13 : vector<18x16x36xf32> to vector<288x36xf32>
    %c0_2 = arith.constant 0 : index
    %c0_3 = arith.constant 0 : index
    %15 = vector.load %arg3[%c0_2, %c0_3] : memref<36x8xf32, #tpu.memory_space<vmem>>, vector<36x8xf32>
    %cst = arith.constant dense<0.000000e+00> : vector<288x8xf32>
    %16 = tpu.matmul %14, %15, %cst {dimension_numbers = #tpu.dot_dimension_numbers<[1], [0], [0], [1], [0, 0, 1, 1], [], []>} : vector<288x36xf32>, vector<36x8xf32>, vector<288x8xf32> -> vector<288x8xf32>
    %c0_4 = arith.constant 0 : index
    %c0_5 = arith.constant 0 : index
    %17 = vector.load %arg4[%c0_4, %c0_5] : memref<1x8xf32, #tpu.memory_space<vmem>>, vector<1x8xf32>
    %18 = vector.shape_cast %17 : vector<1x8xf32> to vector<8xf32>
    %19 = vector.shape_cast %18 : vector<8xf32> to vector<1x8xf32>
    %20 = vector.broadcast %19 : vector<1x8xf32> to vector<288x8xf32>
    %21 = arith.mulf %16, %20 : vector<288x8xf32>
    %c0_6 = arith.constant 0 : index
    %c0_7 = arith.constant 0 : index
    %22 = vector.load %arg5[%c0_6, %c0_7] : memref<1x8xf32, #tpu.memory_space<vmem>>, vector<1x8xf32>
    %23 = vector.shape_cast %22 : vector<1x8xf32> to vector<8xf32>
    %24 = vector.shape_cast %23 : vector<8xf32> to vector<1x8xf32>
    %25 = vector.broadcast %24 : vector<1x8xf32> to vector<288x8xf32>
    %26 = arith.addf %21, %25 : vector<288x8xf32>
    %27 = vector.shape_cast %26 : vector<288x8xf32> to vector<18x16x8xf32>
    %c0_8 = arith.constant 0 : index
    %c1 = arith.constant 1 : index
    %c0_9 = arith.constant 0 : index
    %28 = vector.load %arg10[%c0_8, %c1, %c0_9] : memref<18x18x8xf32, #tpu.memory_space<vmem>>, vector<18x16x8xf32>
    tpu.vector_store %arg10[%c0_8, %c1, %c0_9], %27 {strides = array<i32>} : memref<18x18x8xf32, #tpu.memory_space<vmem>>, vector<18x16x8xf32>,
    %cst_10 = arith.constant 0.000000e+00 : f32
    %29 = vector.broadcast %cst_10 : f32 to vector<18x1x8xf32>
    %c0_11 = arith.constant 0 : index
    %c0_12 = arith.constant 0 : index
    %c0_13 = arith.constant 0 : index
    %30 = vector.load %arg10[%c0_11, %c0_12, %c0_13] : memref<18x18x8xf32, #tpu.memory_space<vmem>>, vector<18x1x8xf32>
    tpu.vector_store %arg10[%c0_11, %c0_12, %c0_13], %29 {strides = array<i32>} : memref<18x18x8xf32, #tpu.memory_space<vmem>>, vector<18x1x8xf32>,
    %c0_14 = arith.constant 0 : index
    %c17 = arith.constant 17 : index
    %c0_15 = arith.constant 0 : index
    %31 = vector.load %arg10[%c0_14, %c17, %c0_15] : memref<18x18x8xf32, #tpu.memory_space<vmem>>, vector<18x1x8xf32>
    tpu.vector_store %arg10[%c0_14, %c17, %c0_15], %29 {strides = array<i32>} : memref<18x18x8xf32, #tpu.memory_space<vmem>>, vector<18x1x8xf32>,
    %cst_16 = arith.constant 0.000000e+00 : f32
    %32 = vector.broadcast %cst_16 : f32 to vector<1x18x8xf32>
    %c0_i32 = arith.constant 0 : i32
    %33 = arith.cmpi eq, %arg1, %c0_i32 : i32
    %34 = arith.extui %33 : i1 to i32
    %c0_i32_17 = arith.constant 0 : i32
    %35 = arith.cmpi ne, %34, %c0_i32_17 : i32
    scf.if %35 {
      %c0_35 = arith.constant 0 : index
      %c0_36 = arith.constant 0 : index
      %c0_37 = arith.constant 0 : index
      %69 = vector.load %arg10[%c0_35, %c0_36, %c0_37] : memref<18x18x8xf32, #tpu.memory_space<vmem>>, vector<1x18x8xf32>
      tpu.vector_store %arg10[%c0_35, %c0_36, %c0_37], %32 {strides = array<i32>} : memref<18x18x8xf32, #tpu.memory_space<vmem>>, vector<1x18x8xf32>,
    } else {
    }
    %c0_i32_18 = arith.constant 0 : i32
    %36 = arith.cmpi eq, %arg1, %c0_i32_18 : i32
    %37 = arith.extui %36 : i1 to i32
    %c0_i32_19 = arith.constant 0 : i32
    %38 = arith.cmpi ne, %37, %c0_i32_19 : i32
    scf.if %38 {
      %c17_35 = arith.constant 17 : index
      %c0_36 = arith.constant 0 : index
      %c0_37 = arith.constant 0 : index
      %69 = vector.load %arg10[%c17_35, %c0_36, %c0_37] : memref<18x18x8xf32, #tpu.memory_space<vmem>>, vector<1x18x8xf32>
      tpu.vector_store %arg10[%c17_35, %c0_36, %c0_37], %32 {strides = array<i32>} : memref<18x18x8xf32, #tpu.memory_space<vmem>>, vector<1x18x8xf32>,
    } else {
    }
    %c0_20 = arith.constant 0 : index
    %c0_21 = arith.constant 0 : index
    %c0_22 = arith.constant 0 : index
    %39 = vector.load %arg10[%c0_20, %c0_21, %c0_22] : memref<18x18x8xf32, #tpu.memory_space<vmem>>, vector<18x18x8xf32>
    %40 = vector.extract_strided_slice %39 {offsets = [0, 0, 0], sizes = [16, 16, 8], strides = [1, 1, 1]} : vector<18x18x8xf32> to vector<16x16x8xf32>
    %41 = vector.extract_strided_slice %39 {offsets = [0, 1, 0], sizes = [16, 16, 8], strides = [1, 1, 1]} : vector<18x18x8xf32> to vector<16x16x8xf32>
    %42 = vector.extract_strided_slice %39 {offsets = [0, 2, 0], sizes = [16, 16, 8], strides = [1, 1, 1]} : vector<18x18x8xf32> to vector<16x16x8xf32>
    %43 = vector.extract_strided_slice %39 {offsets = [1, 0, 0], sizes = [16, 16, 8], strides = [1, 1, 1]} : vector<18x18x8xf32> to vector<16x16x8xf32>
    %44 = vector.extract_strided_slice %39 {offsets = [1, 1, 0], sizes = [16, 16, 8], strides = [1, 1, 1]} : vector<18x18x8xf32> to vector<16x16x8xf32>
    %45 = vector.extract_strided_slice %39 {offsets = [1, 2, 0], sizes = [16, 16, 8], strides = [1, 1, 1]} : vector<18x18x8xf32> to vector<16x16x8xf32>
    %46 = vector.extract_strided_slice %39 {offsets = [2, 0, 0], sizes = [16, 16, 8], strides = [1, 1, 1]} : vector<18x18x8xf32> to vector<16x16x8xf32>
    %47 = vector.extract_strided_slice %39 {offsets = [2, 1, 0], sizes = [16, 16, 8], strides = [1, 1, 1]} : vector<18x18x8xf32> to vector<16x16x8xf32>
    %48 = vector.extract_strided_slice %39 {offsets = [2, 2, 0], sizes = [16, 16, 8], strides = [1, 1, 1]} : vector<18x18x8xf32> to vector<16x16x8xf32>
    %49 = tpu.concatenate %40, %41, %42, %43, %44, %45, %46, %47, %48 in 2 : vector<16x16x8xf32>, vector<16x16x8xf32>, vector<16x16x8xf32>, vector<16x16x8xf32>, vector<16x16x8xf32>, vector<16x16x8xf32>, vector<16x16x8xf32>, vector<16x16x8xf32>, vector<16x16x8xf32> -> vector<16x16x72xf32>
    %50 = vector.shape_cast %49 : vector<16x16x72xf32> to vector<256x72xf32>
    %c0_23 = arith.constant 0 : index
    %c0_24 = arith.constant 0 : index
    %51 = vector.load %arg6[%c0_23, %c0_24] : memref<72x256xf32, #tpu.memory_space<vmem>>, vector<72x256xf32>
    %cst_25 = arith.constant dense<0.000000e+00> : vector<256x256xf32>
    %52 = tpu.matmul %50, %51, %cst_25 {dimension_numbers = #tpu.dot_dimension_numbers<[1], [0], [0], [1], [0, 0, 1, 1], [], []>} : vector<256x72xf32>, vector<72x256xf32>, vector<256x256xf32> -> vector<256x256xf32>
    %c0_26 = arith.constant 0 : index
    %c0_27 = arith.constant 0 : index
    %53 = vector.load %arg7[%c0_26, %c0_27] : memref<1x256xf32, #tpu.memory_space<vmem>>, vector<1x256xf32>
    %54 = vector.shape_cast %53 : vector<1x256xf32> to vector<256xf32>
    %55 = vector.shape_cast %54 : vector<256xf32> to vector<1x256xf32>
    %56 = vector.broadcast %55 : vector<1x256xf32> to vector<256x256xf32>
    %57 = arith.mulf %52, %56 : vector<256x256xf32>
    %c0_28 = arith.constant 0 : index
    %c0_29 = arith.constant 0 : index
    %58 = vector.load %arg8[%c0_28, %c0_29] : memref<1x256xf32, #tpu.memory_space<vmem>>, vector<1x256xf32>
    %59 = vector.shape_cast %58 : vector<1x256xf32> to vector<256xf32>
    %60 = vector.shape_cast %59 : vector<256xf32> to vector<1x256xf32>
    %61 = vector.broadcast %60 : vector<1x256xf32> to vector<256x256xf32>
    %62 = arith.addf %57, %61 : vector<256x256xf32>
    %cst_30 = arith.constant 0.000000e+00 : f32
    %63 = vector.broadcast %cst_30 : f32 to vector<256x256xf32>
    %64 = arith.maximumf %62, %63 : vector<256x256xf32>
    %65 = vector.shape_cast %64 : vector<256x256xf32> to vector<16x16x256xf32>
    %c0_31 = arith.constant 0 : index
    %c0_32 = arith.constant 0 : index
    %c0_33 = arith.constant 0 : index
    %c0_34 = arith.constant 0 : index
    %66 = vector.load %arg9[%c0_31, %c0_32, %c0_33, %c0_34] : memref<1x16x16x256xf32, #tpu.memory_space<vmem>>, vector<1x16x16x256xf32>
    %67 = vector.shape_cast %66 : vector<1x16x16x256xf32> to vector<16x16x256xf32>
    %68 = vector.shape_cast %65 : vector<16x16x256xf32> to vector<1x16x16x256xf32>
    tpu.vector_store %arg9[%c0_31, %c0_32, %c0_33, %c0_34], %68 {strides = array<i32>} : memref<1x16x16x256xf32, #tpu.memory_space<vmem>>, vector<1x16x16x256xf32>,
    return
  }
  func.func @transform_0(%arg0: i32, %arg1: i32) -> (i32, i32, i32, i32) {
    %c0_i32 = arith.constant 0 : i32
    %c0_i32_0 = arith.constant 0 : i32
    %c0_i32_1 = arith.constant 0 : i32
    %c0_i32_2 = arith.constant 0 : i32
    return %arg0, %c0_i32, %c0_i32_0, %c0_i32_1 : i32, i32, i32, i32
  }
  func.func @transform_1(%arg0: i32, %arg1: i32) -> (i32, i32) {
    %c0_i32 = arith.constant 0 : i32
    %c0_i32_0 = arith.constant 0 : i32
    %c0_i32_1 = arith.constant 0 : i32
    return %c0_i32, %c0_i32_0 : i32, i32
  }
  func.func @transform_2(%arg0: i32, %arg1: i32) -> (i32, i32) {
    %c0_i32 = arith.constant 0 : i32
    %c0_i32_0 = arith.constant 0 : i32
    %c0_i32_1 = arith.constant 0 : i32
    return %c0_i32, %c0_i32_0 : i32, i32
  }
  func.func @transform_3(%arg0: i32, %arg1: i32) -> (i32, i32) {
    %c0_i32 = arith.constant 0 : i32
    %c0_i32_0 = arith.constant 0 : i32
    %c0_i32_1 = arith.constant 0 : i32
    return %c0_i32, %c0_i32_0 : i32, i32
  }
  func.func @transform_4(%arg0: i32, %arg1: i32) -> (i32, i32) {
    %c0_i32 = arith.constant 0 : i32
    %c0_i32_0 = arith.constant 0 : i32
    %c0_i32_1 = arith.constant 0 : i32
    return %c0_i32, %c0_i32_0 : i32, i32
  }
  func.func @transform_5(%arg0: i32, %arg1: i32) -> (i32, i32) {
    %c0_i32 = arith.constant 0 : i32
    %c0_i32_0 = arith.constant 0 : i32
    %c0_i32_1 = arith.constant 0 : i32
    return %c0_i32, %c0_i32_0 : i32, i32
  }
  func.func @transform_6(%arg0: i32, %arg1: i32) -> (i32, i32) {
    %c0_i32 = arith.constant 0 : i32
    %c0_i32_0 = arith.constant 0 : i32
    %c0_i32_1 = arith.constant 0 : i32
    return %c0_i32, %c0_i32_0 : i32, i32
  }
  func.func @transform_7(%arg0: i32, %arg1: i32) -> (i32, i32, i32, i32) {
    %c0_i32 = arith.constant 0 : i32
    %c0_i32_0 = arith.constant 0 : i32
    %c0_i32_1 = arith.constant 0 : i32
    return %arg0, %arg1, %c0_i32, %c0_i32_0 : i32, i32, i32, i32
  }
}

</mosaic_0001>

<llo_original>
// kernel: tpu_custom_call.1
$region0: #{tpu_custom_call.1}
  #allocation0 [shape = 'u32[]', space=smem, size = 0x4, offset = 0x4, fixed_abs, tag = 'smem constant byte address 0x4 - core index']
  #allocation1 [shape = 'u32[144,128]{1,0:T(1,128)}', space=vmem, size = 0x12000, scoped, tag = 'internal scratch']
  #allocation2 [shape = 'f32[18,18,8]{2,1,0:T(8,128)}', space=vmem, size = 0x36000, scoped, tag = 'scratch operand']
  %s0 = inlined_call_operand.vmem [shape: f32[2,20,18,4], index: 0, kind: input, shape index: {}]
  %s1 = inlined_call_operand.vmem [shape: f32[36,8], index: 1, kind: input, shape index: {}]
  %s2 = inlined_call_operand.vmem [shape: f32[1,8], index: 2, kind: input, shape index: {}]
  %s3 = inlined_call_operand.vmem [shape: f32[1,8], index: 3, kind: input, shape index: {}]
  %s4 = inlined_call_operand.vmem [shape: f32[72,256], index: 4, kind: input, shape index: {}]
  %s5 = inlined_call_operand.vmem [shape: f32[1,256], index: 5, kind: input, shape index: {}]
  %s6 = inlined_call_operand.vmem [shape: f32[1,256], index: 6, kind: input, shape index: {}]
  %s7 = inlined_call_operand.hbm [shape: f32[2,16,16,256], index: 7, kind: output, shape index: {}]
  %s8 = sld [smem:[#allocation0]]
  $region65: #{tpu_custom_call.1} parent=0
    _
  %s10 = ssub.s32 1, %s8
  %s11 = scalar_select 0, %s10, %s8
  $region1: #{tpu_custom_call.1} parent=0
    #allocation3 [shape = 'u8[524288]{0}', space=vmem, size = 0x80000, scoped, tag = 'output window, operand 0']
    #allocation4 [shape = 's32[2]{0}', space=sflag, size = 0x8, scoped, tag = 'scoped memory for tpu_custom_call.1']
    %12 = vsyncpa [#allocation4], 0
    %s13 = scalar_lea.sflag [#allocation4], 1
    %14 = vsyncpa %s13, 0
    loop: start=0, step=1, limit=4
    $region2: #{tpu_custom_call.1} parent=1 // loop_pre_header
      _
    $region3: #{tpu_custom_call.1} parent=1 // loop_header
      %s16 = sphi 0, %s20
      %p17 = scmp.ge.s32.totalorder %s16, 4
      %s23 = sphi 0, %s35
      %s24 = sphi 0, %s31
      %s25 = sphi 0, %s23
      %s26 = sphi 0, %s24
      %s27 = sphi 0, %s25
      %s28 = sphi 0, %s26
      %s38 = sphi 0, %s40
      %s41 = sphi 0, %s38
      %s42 = sphi 0, %s41
      %s58 = sphi 0, %s42
      %s62 = sphi 0, %s62
      %s64 = sphi 0, %s62
      %s65 = sphi 0, %s64
      %s79 = sphi 0, %s65
      %s83 = sphi 0, %s83
      %s85 = sphi 0, %s83
      %s86 = sphi 0, %s85
      %s100 = sphi 0, %s86
      %s104 = sphi 0, %s104
      %s106 = sphi 0, %s104
      %s107 = sphi 0, %s106
      %s121 = sphi 0, %s107
      %s125 = sphi 0, %s125
      %s127 = sphi 0, %s125
      %s128 = sphi 0, %s127
      %s142 = sphi 0, %s128
      %s146 = sphi 0, %s146
      %s148 = sphi 0, %s146
      %s149 = sphi 0, %s148
      %s163 = sphi 0, %s149
      %s167 = sphi 0, %s167
      %s169 = sphi 0, %s167
      %s170 = sphi 0, %s169
      %s184 = sphi 0, %s170
      %s192 = sphi 0, %s194
      %s195 = sphi 0, %s192
      %s196 = sphi 0, %s195
      %s212 = sphi 0, %s196
    $region4: #{tpu_custom_call.1} parent=1 // loop_header_branch
      %19 = sbr.rel (%p17) target = $region8
    $region5: #{tpu_custom_call.1} parent=1 // loop_body
      %s21 = ssub.s32 %s16, 1
      %s22 = ssub.s32 %s16, 2
      %s29 = sadd.s32 1, %s24
      %p30 = scmp.ge.s32.totalorder %s29, 1
      %s31 = scalar_select %p30, 0, %s29
      %s32 = sadd.s32 1, %s23
      %s33 = scalar_select %p30, %s32, %s23
      %p34 = scmp.ge.s32.totalorder %s33, 2
      %s35 = scalar_select %p34, 0, %s33
      %s36 = ssub.s32 %s23, %s35
      %p37 = scmp.eq.s32.totalorder %s36, 0
      %s39 = sadd.s32 %s38, 1
      %s40 = scalar_select %p37, %s38, %s39
      %p43 = pneg %p37
      %p44 = scmp.eq.s32.totalorder %s16, 1
      %p45 = por %p43, %p44
      %p46 = scmp.ne.s32.totalorder %s38, %s41
      %p47 = scmp.eq.s32.totalorder %s16, 0
      %p48 = por %p46, %p47
      %p49 = scmp.ne.s32.totalorder %s38, %s41
      %p50 = scmp.eq.s32.totalorder %s21, 1
      %p51 = por %p49, %p50
      %p52 = scmp.ne.s32.totalorder %s41, %s42
      %p53 = scmp.eq.s32.totalorder %s21, 0
      %p54 = por %p52, %p53
      %p55 = scmp.ne.s32.totalorder %s41, %s42
      %p56 = scmp.eq.s32.totalorder %s22, 1
      %p57 = por %p55, %p56
      %p59 = scmp.ne.s32.totalorder %s42, %s58
      %p60 = scmp.eq.s32.totalorder %s22, 0
      %p61 = por %p59, %p60
      %s63 = sadd.s32 %s62, 1
      %p66 = scmp.eq.s32.totalorder %s16, 1
      %p67 = scmp.ne.s32.totalorder %s62, %s64
      %p68 = scmp.eq.s32.totalorder %s16, 0
      %p69 = por %p67, %p68
      %p70 = scmp.ne.s32.totalorder %s62, %s64
      %p71 = scmp.eq.s32.totalorder %s21, 1
      %p72 = por %p70, %p71
      %p73 = scmp.ne.s32.totalorder %s64, %s65
      %p74 = scmp.eq.s32.totalorder %s21, 0
      %p75 = por %p73, %p74
      %p76 = scmp.ne.s32.totalorder %s64, %s65
      %p77 = scmp.eq.s32.totalorder %s22, 1
      %p78 = por %p76, %p77
      %p80 = scmp.ne.s32.totalorder %s65, %s79
      %p81 = scmp.eq.s32.totalorder %s22, 0
      %p82 = por %p80, %p81
      %s84 = sadd.s32 %s83, 1
      %p87 = scmp.eq.s32.totalorder %s16, 1
      %p88 = scmp.ne.s32.totalorder %s83, %s85
      %p89 = scmp.eq.s32.totalorder %s16, 0
      %p90 = por %p88, %p89
      %p91 = scmp.ne.s32.totalorder %s83, %s85
      %p92 = scmp.eq.s32.totalorder %s21, 1
      %p93 = por %p91, %p92
      %p94 = scmp.ne.s32.totalorder %s85, %s86
      %p95 = scmp.eq.s32.totalorder %s21, 0
      %p96 = por %p94, %p95
      %p97 = scmp.ne.s32.totalorder %s85, %s86
      %p98 = scmp.eq.s32.totalorder %s22, 1
      %p99 = por %p97, %p98
      %p101 = scmp.ne.s32.totalorder %s86, %s100
      %p102 = scmp.eq.s32.totalorder %s22, 0
      %p103 = por %p101, %p102
      %s105 = sadd.s32 %s104, 1
      %p108 = scmp.eq.s32.totalorder %s16, 1
      %p109 = scmp.ne.s32.totalorder %s104, %s106
      %p110 = scmp.eq.s32.totalorder %s16, 0
      %p111 = por %p109, %p110
      %p112 = scmp.ne.s32.totalorder %s104, %s106
      %p113 = scmp.eq.s32.totalorder %s21, 1
      %p114 = por %p112, %p113
      %p115 = scmp.ne.s32.totalorder %s106, %s107
      %p116 = scmp.eq.s32.totalorder %s21, 0
      %p117 = por %p115, %p116
      %p118 = scmp.ne.s32.totalorder %s106, %s107
      %p119 = scmp.eq.s32.totalorder %s22, 1
      %p120 = por %p118, %p119
      %p122 = scmp.ne.s32.totalorder %s107, %s121
      %p123 = scmp.eq.s32.totalorder %s22, 0
      %p124 = por %p122, %p123
      %s126 = sadd.s32 %s125, 1
      %p129 = scmp.eq.s32.totalorder %s16, 1
      %p130 = scmp.ne.s32.totalorder %s125, %s127
      %p131 = scmp.eq.s32.totalorder %s16, 0
      %p132 = por %p130, %p131
      %p133 = scmp.ne.s32.totalorder %s125, %s127
      %p134 = scmp.eq.s32.totalorder %s21, 1
      %p135 = por %p133, %p134
      %p136 = scmp.ne.s32.totalorder %s127, %s128
      %p137 = scmp.eq.s32.totalorder %s21, 0
      %p138 = por %p136, %p137
      %p139 = scmp.ne.s32.totalorder %s127, %s128
      %p140 = scmp.eq.s32.totalorder %s22, 1
      %p141 = por %p139, %p140
      %p143 = scmp.ne.s32.totalorder %s128, %s142
      %p144 = scmp.eq.s32.totalorder %s22, 0
      %p145 = por %p143, %p144
      %s147 = sadd.s32 %s146, 1
      %p150 = scmp.eq.s32.totalorder %s16, 1
      %p151 = scmp.ne.s32.totalorder %s146, %s148
      %p152 = scmp.eq.s32.totalorder %s16, 0
      %p153 = por %p151, %p152
      %p154 = scmp.ne.s32.totalorder %s146, %s148
      %p155 = scmp.eq.s32.totalorder %s21, 1
      %p156 = por %p154, %p155
      %p157 = scmp.ne.s32.totalorder %s148, %s149
      %p158 = scmp.eq.s32.totalorder %s21, 0
      %p159 = por %p157, %p158
      %p160 = scmp.ne.s32.totalorder %s148, %s149
      %p161 = scmp.eq.s32.totalorder %s22, 1
      %p162 = por %p160, %p161
      %p164 = scmp.ne.s32.totalorder %s149, %s163
      %p165 = scmp.eq.s32.totalorder %s22, 0
      %p166 = por %p164, %p165
      %s168 = sadd.s32 %s167, 1
      %p171 = scmp.eq.s32.totalorder %s16, 1
      %p172 = scmp.ne.s32.totalorder %s167, %s169
      %p173 = scmp.eq.s32.totalorder %s16, 0
      %p174 = por %p172, %p173
      %p175 = scmp.ne.s32.totalorder %s167, %s169
      %p176 = scmp.eq.s32.totalorder %s21, 1
      %p177 = por %p175, %p176
      %p178 = scmp.ne.s32.totalorder %s169, %s170
      %p179 = scmp.eq.s32.totalorder %s21, 0
      %p180 = por %p178, %p179
      %p181 = scmp.ne.s32.totalorder %s169, %s170
      %p182 = scmp.eq.s32.totalorder %s22, 1
      %p183 = por %p181, %p182
      %p185 = scmp.ne.s32.totalorder %s170, %s184
      %p186 = scmp.eq.s32.totalorder %s22, 0
      %p187 = por %p185, %p186
      %s188 = ssub.s32 %s23, %s35
      %s189 = ssub.s32 %s24, %s31
      %s190 = sor.u32 %s188, %s189
      %p191 = scmp.eq.s32.totalorder %s190, 0
      %s193 = sadd.s32 %s192, 1
      %s194 = scalar_select %p191, %s192, %s193
      %p197 = pneg %p191
      %p198 = scmp.eq.s32.totalorder %s16, 1
      %p199 = por %p197, %p198
      %p200 = scmp.ne.s32.totalorder %s192, %s195
      %p201 = scmp.eq.s32.totalorder %s16, 0
      %p202 = por %p200, %p201
      %p203 = scmp.ne.s32.totalorder %s192, %s195
      %p204 = scmp.eq.s32.totalorder %s21, 1
      %p205 = por %p203, %p204
      %p206 = scmp.ne.s32.totalorder %s195, %s196
      %p207 = scmp.eq.s32.totalorder %s21, 0
      %p208 = por %p206, %p207
      %p209 = scmp.ne.s32.totalorder %s195, %s196
      %p210 = scmp.eq.s32.totalorder %s22, 1
      %p211 = por %p209, %p210
      %p213 = scmp.ne.s32.totalorder %s196, %s212
      %p214 = scmp.eq.s32.totalorder %s22, 0
      %p215 = por %p213, %p214
      %p216 = scmp.le.s32.totalorder 1, %s16
      %p217 = scmp.lt.s32.totalorder %s16, 3
      %p218 = pnand %p216, %p217
      %p219 = pneg %p218
      // Predicated region
      $region9: #{tpu_custom_call.1} parent=5 // pred_check
        _
      $region10: #{tpu_custom_call.1} parent=5 // pred_check_branch
        %221 = sbr.rel (%p218) target = $region12
      $region11: #{tpu_custom_call.1} parent=5 // pred_region
        %s222 = ssub.s32 %s16, 1
        // Predicated region
        $region13: #{tpu_custom_call.1} parent=11 // pred_check
          %p223 = pneg %p75
        $region14: #{tpu_custom_call.1} parent=11 // pred_check_branch
          %225 = sbr.rel (%p223) target = $region16
        $region15: #{tpu_custom_call.1} parent=11 // pred_region
          _
        $region16: #{tpu_custom_call.1} parent=11 // pred_fallthru
          _
        // Predicated region
        $region17: #{tpu_custom_call.1} parent=11 // pred_check
          %p226 = pneg %p96
        $region18: #{tpu_custom_call.1} parent=11 // pred_check_branch
          %228 = sbr.rel (%p226) target = $region20
        $region19: #{tpu_custom_call.1} parent=11 // pred_region
          _
        $region20: #{tpu_custom_call.1} parent=11 // pred_fallthru
          _
        // Predicated region
        $region21: #{tpu_custom_call.1} parent=11 // pred_check
          %p229 = pneg %p117
        $region22: #{tpu_custom_call.1} parent=11 // pred_check_branch
          %231 = sbr.rel (%p229) target = $region24
        $region23: #{tpu_custom_call.1} parent=11 // pred_region
          _
        $region24: #{tpu_custom_call.1} parent=11 // pred_fallthru
          _
        // Predicated region
        $region25: #{tpu_custom_call.1} parent=11 // pred_check
          %p232 = pneg %p138
        $region26: #{tpu_custom_call.1} parent=11 // pred_check_branch
          %234 = sbr.rel (%p232) target = $region28
        $region27: #{tpu_custom_call.1} parent=11 // pred_region
          _
        $region28: #{tpu_custom_call.1} parent=11 // pred_fallthru
          _
        // Predicated region
        $region29: #{tpu_custom_call.1} parent=11 // pred_check
          %p235 = pneg %p159
        $region30: #{tpu_custom_call.1} parent=11 // pred_check_branch
          %237 = sbr.rel (%p235) target = $region32
        $region31: #{tpu_custom_call.1} parent=11 // pred_region
          _
        $region32: #{tpu_custom_call.1} parent=11 // pred_fallthru
          _
        // Predicated region
        $region33: #{tpu_custom_call.1} parent=11 // pred_check
          %p238 = pneg %p180
        $region34: #{tpu_custom_call.1} parent=11 // pred_check_branch
          %240 = sbr.rel (%p238) target = $region36
        $region35: #{tpu_custom_call.1} parent=11 // pred_region
          _
        $region36: #{tpu_custom_call.1} parent=11 // pred_fallthru
          _
      $region12: #{tpu_custom_call.1} parent=5 // pred_fallthru
        _
      %p241 = scmp.lt.s32.totalorder %s16, 2
      // Predicated region
      $region37: #{tpu_custom_call.1} parent=5 // pred_check
        %p242 = pneg %p241
      $region38: #{tpu_custom_call.1} parent=5 // pred_check_branch
        %244 = sbr.rel (%p242) target = $region40
      $region39: #{tpu_custom_call.1} parent=5 // pred_region
        // Predicated region
        $region41: #{tpu_custom_call.1} parent=39 // pred_check
          %p245 = pneg %p48
        $region42: #{tpu_custom_call.1} parent=39 // pred_check_branch
          %247 = sbr.rel (%p245) target = $region44
        $region43: #{tpu_custom_call.1} parent=39 // pred_region
          %p248 = scmp.lt.s32.totalorder %s23, 1
          %s249 = scalar_select %p248, %s23, 1
          %s250 = smul.addr %s249, 60
          %s251 = smul.addr %s250, 8
          %s252 = scalar_lea.vmem %s0, %s251
        $region44: #{tpu_custom_call.1} parent=39 // pred_fallthru
          _
      $region40: #{tpu_custom_call.1} parent=5 // pred_fallthru
        _
      %p253 = scmp.le.s32.totalorder 1, %s16
      %p254 = scmp.lt.s32.totalorder %s16, 3
      %p255 = pnand %p253, %p254
      %p256 = pneg %p255
      // Predicated region
      $region45: #{tpu_custom_call.1} parent=5 // pred_check
        _
      $region46: #{tpu_custom_call.1} parent=5 // pred_check_branch
        %258 = sbr.rel (%p255) target = $region48
      $region47: #{tpu_custom_call.1} parent=5 // pred_region
        %s259 = ssub.s32 %s16, 1
        %p260 = scmp.lt.s32.totalorder %s25, 1
        %s261 = scalar_select %p260, %s25, 1
        %s262 = smul.addr %s261, 60
        %s263 = smul.addr %s262, 8
        %s264 = scalar_lea.vmem %s0, %s263
        %p265 = pneg %p54
        %p266 = pneg %p51
        %p267 = pneg %p75
        %p268 = pneg %p72
        %p269 = pneg %p96
        %p270 = pneg %p93
        %p271 = pneg %p117
        %p272 = pneg %p114
        %p273 = pneg %p138
        %p274 = pneg %p135
        %p275 = pneg %p159
        %p276 = pneg %p156
        %p277 = pneg %p180
        %p278 = pneg %p177
        %p279 = pneg %p208
        %p280 = pneg %p205
        %s281 = sand.u32 %s195, 1
        %s282 = scalar_lea.sflag [#allocation4], %s281
        %s283 = sand.u32 %s195, 1
        %s284 = smul.addr %s283, 512
        %s285 = scalar_lea.vmem [#allocation3], %s284
        %p286 = scmp.lt.s32.totalorder %s25, 1
        %s287 = scalar_select %p286, %s25, 1
        %s288 = smul.addr %s287, 60
        %s289 = smul.addr %s288, 8
        %s290 = scalar_lea.vmem %s0, %s289
        %s291 = smul.u32 16, %s26
        %s292 = smul.u32 %s26, 16
        %s293 = smul.u32 %s292, 24
        %s294 = scalar_lea.vmem %s290, %s293
        %v295 = vld [vmem:[%s294] sm:$0xff]
        %v296 = vld [vmem:[%s294 + $0x8] sm:$0xff]
        %v297 = vld [vmem:[%s294 + $0x10] sm:$0x3]
        %v298 = vld [vmem:[%s294 + $0x18] sm:$0xff]
        %v299 = vld [vmem:[%s294 + $0x20] sm:$0xff]
        %v300 = vld [vmem:[%s294 + $0x28] sm:$0x3]
        %v301 = vld [vmem:[%s294 + $0x30] sm:$0xff]
        %v302 = vld [vmem:[%s294 + $0x38] sm:$0xff]
        %v303 = vld [vmem:[%s294 + $0x40] sm:$0x3]
        %v304 = vld [vmem:[%s294 + $0x48] sm:$0xff]
        %v305 = vld [vmem:[%s294 + $0x50] sm:$0xff]
        %v306 = vld [vmem:[%s294 + $0x58] sm:$0x3]
        %v307 = vld [vmem:[%s294 + $0x60] sm:$0xff]
        %v308 = vld [vmem:[%s294 + $0x68] sm:$0xff]
        %v309 = vld [vmem:[%s294 + $0x70] sm:$0x3]
        %v310 = vld [vmem:[%s294 + $0x78] sm:$0xff]
        %v311 = vld [vmem:[%s294 + $0x80] sm:$0xff]
        %v312 = vld [vmem:[%s294 + $0x88] sm:$0x3]
        %v313 = vld [vmem:[%s294 + $0x90] sm:$0xff]
        %v314 = vld [vmem:[%s294 + $0x98] sm:$0xff]
        %v315 = vld [vmem:[%s294 + $0xa0] sm:$0x3]
        %v316 = vld [vmem:[%s294 + $0xa8] sm:$0xff]
        %v317 = vld [vmem:[%s294 + $0xb0] sm:$0xff]
        %v318 = vld [vmem:[%s294 + $0xb8] sm:$0x3]
        %v319 = vld [vmem:[%s294 + $0xc0] sm:$0xff]
        %v320 = vld [vmem:[%s294 + $0xc8] sm:$0xff]
        %v321 = vld [vmem:[%s294 + $0xd0] sm:$0x3]
        %v322 = vld [vmem:[%s294 + $0xd8] sm:$0xff]
        %v323 = vld [vmem:[%s294 + $0xe0] sm:$0xff]
        %v324 = vld [vmem:[%s294 + $0xe8] sm:$0x3]
        %v325 = vld [vmem:[%s294 + $0xf0] sm:$0xff]
        %v326 = vld [vmem:[%s294 + $0xf8] sm:$0xff]
        %v327 = vld [vmem:[%s294 + $0x100] sm:$0x3]
        %v328 = vld [vmem:[%s294 + $0x108] sm:$0xff]
        %v329 = vld [vmem:[%s294 + $0x110] sm:$0xff]
        %v330 = vld [vmem:[%s294 + $0x118] sm:$0x3]
        %v331 = vld [vmem:[%s294 + $0x120] sm:$0xff]
        %v332 = vld [vmem:[%s294 + $0x128] sm:$0xff]
        %v333 = vld [vmem:[%s294 + $0x130] sm:$0x3]
        %v334 = vld [vmem:[%s294 + $0x138] sm:$0xff]
        %v335 = vld [vmem:[%s294 + $0x140] sm:$0xff]
        %v336 = vld [vmem:[%s294 + $0x148] sm:$0x3]
        %v337 = vld [vmem:[%s294 + $0x150] sm:$0xff]
        %v338 = vld [vmem:[%s294 + $0x158] sm:$0xff]
        %v339 = vld [vmem:[%s294 + $0x160] sm:$0x3]
        %v340 = vld [vmem:[%s294 + $0x168] sm:$0xff]
        %v341 = vld [vmem:[%s294 + $0x170] sm:$0xff]
        %v342 = vld [vmem:[%s294 + $0x178] sm:$0x3]
        %v343 = vld [vmem:[%s294 + $0x180] sm:$0xff]
        %v344 = vld [vmem:[%s294 + $0x188] sm:$0xff]
        %v345 = vld [vmem:[%s294 + $0x190] sm:$0x3]
        %v346 = vld [vmem:[%s294 + $0x198] sm:$0xff]
        %v347 = vld [vmem:[%s294 + $0x1a0] sm:$0xff]
        %v348 = vld [vmem:[%s294 + $0x1a8] sm:$0x3]
        %v349 = vld [vmem:[%s294 + $0x1b0] sm:$0xff]
        %v350 = vld [vmem:[%s294 + $0x1b8] sm:$0xff]
        %v351 = vld [vmem:[%s294 + $0x1c0] sm:$0x3]
        %v352 = vld [vmem:[%s294 + $0x1c8] sm:$0xff]
        %v353 = vld [vmem:[%s294 + $0x1d0] sm:$0xff]
        %v354 = vld [vmem:[%s294 + $0x1d8] sm:$0x3]
        %vm409 = vcmask 1046528
        %v410 = vrot.slane %v295, 1
        %v411 = vrot.slane %v296, 1
        %v412 = vsel %vm409, %v410, %v411
        %v413 = vrot.slane %v297, 1
        %v414 = vsel %vm409, %v411, %v413
        %v415 = vrot.slane %v298, 1
        %v416 = vrot.slane %v299, 1
        %v417 = vsel %vm409, %v415, %v416
        %v418 = vrot.slane %v300, 1
        %v419 = vsel %vm409, %v416, %v418
        %v420 = vrot.slane %v301, 1
        %v421 = vrot.slane %v302, 1
        %v422 = vsel %vm409, %v420, %v421
        %v423 = vrot.slane %v303, 1
        %v424 = vsel %vm409, %v421, %v423
        %v425 = vrot.slane %v304, 1
        %v426 = vrot.slane %v305, 1
        %v427 = vsel %vm409, %v425, %v426
        %v428 = vrot.slane %v306, 1
        %v429 = vsel %vm409, %v426, %v428
        %v430 = vrot.slane %v307, 1
        %v431 = vrot.slane %v308, 1
        %v432 = vsel %vm409, %v430, %v431
        %v433 = vrot.slane %v309, 1
        %v434 = vsel %vm409, %v431, %v433
        %v435 = vrot.slane %v310, 1
        %v436 = vrot.slane %v311, 1
        %v437 = vsel %vm409, %v435, %v436
        %v438 = vrot.slane %v312, 1
        %v439 = vsel %vm409, %v436, %v438
        %v440 = vrot.slane %v313, 1
        %v441 = vrot.slane %v314, 1
        %v442 = vsel %vm409, %v440, %v441
        %v443 = vrot.slane %v315, 1
        %v444 = vsel %vm409, %v441, %v443
        %v445 = vrot.slane %v316, 1
        %v446 = vrot.slane %v317, 1
        %v447 = vsel %vm409, %v445, %v446
        %v448 = vrot.slane %v318, 1
        %v449 = vsel %vm409, %v446, %v448
        %v450 = vrot.slane %v319, 1
        %v451 = vrot.slane %v320, 1
        %v452 = vsel %vm409, %v450, %v451
        %v453 = vrot.slane %v321, 1
        %v454 = vsel %vm409, %v451, %v453
        %v455 = vrot.slane %v322, 1
        %v456 = vrot.slane %v323, 1
        %v457 = vsel %vm409, %v455, %v456
        %v458 = vrot.slane %v324, 1
        %v459 = vsel %vm409, %v456, %v458
        %v460 = vrot.slane %v325, 1
        %v461 = vrot.slane %v326, 1
        %v462 = vsel %vm409, %v460, %v461
        %v463 = vrot.slane %v327, 1
        %v464 = vsel %vm409, %v461, %v463
        %v465 = vrot.slane %v328, 1
        %v466 = vrot.slane %v329, 1
        %v467 = vsel %vm409, %v465, %v466
        %v468 = vrot.slane %v330, 1
        %v469 = vsel %vm409, %v466, %v468
        %v470 = vrot.slane %v331, 1
        %v471 = vrot.slane %v332, 1
        %v472 = vsel %vm409, %v470, %v471
        %v473 = vrot.slane %v333, 1
        %v474 = vsel %vm409, %v471, %v473
        %v475 = vrot.slane %v334, 1
        %v476 = vrot.slane %v335, 1
        %v477 = vsel %vm409, %v475, %v476
        %v478 = vrot.slane %v336, 1
        %v479 = vsel %vm409, %v476, %v478
        %v480 = vrot.slane %v337, 1
        %v481 = vrot.slane %v338, 1
        %v482 = vsel %vm409, %v480, %v481
        %v483 = vrot.slane %v339, 1
        %v484 = vsel %vm409, %v481, %v483
        %v485 = vrot.slane %v340, 1
        %v486 = vrot.slane %v341, 1
        %v487 = vsel %vm409, %v485, %v486
        %v488 = vrot.slane %v342, 1
        %v489 = vsel %vm409, %v486, %v488
        %v490 = vrot.slane %v343, 1
        %v491 = vrot.slane %v344, 1
        %v492 = vsel %vm409, %v490, %v491
        %v493 = vrot.slane %v345, 1
        %v494 = vsel %vm409, %v491, %v493
        %v495 = vrot.slane %v346, 1
        %v496 = vrot.slane %v347, 1
        %v497 = vsel %vm409, %v495, %v496
        %v498 = vrot.slane %v348, 1
        %v499 = vsel %vm409, %v496, %v498
        %500 = vrot.lane.b32.xlu0 %v412, 4
        %v501 = vpop.permute.xlu0 %500
        %502 = vrot.lane.b32.xlu0 %v414, 4
        %v503 = vpop.permute.xlu0 %502
        %504 = vrot.lane.b32.xlu0 %v417, 4
        %v505 = vpop.permute.xlu0 %504
        %506 = vrot.lane.b32.xlu0 %v419, 4
        %v507 = vpop.permute.xlu0 %506
        %508 = vrot.lane.b32.xlu0 %v422, 4
        %v509 = vpop.permute.xlu0 %508
        %510 = vrot.lane.b32.xlu0 %v424, 4
        %v511 = vpop.permute.xlu0 %510
        %512 = vrot.lane.b32.xlu0 %v427, 4
        %v513 = vpop.permute.xlu0 %512
        %514 = vrot.lane.b32.xlu0 %v429, 4
        %v515 = vpop.permute.xlu0 %514
        %516 = vrot.lane.b32.xlu0 %v432, 4
        %v517 = vpop.permute.xlu0 %516
        %518 = vrot.lane.b32.xlu0 %v434, 4
        %v519 = vpop.permute.xlu0 %518
        %520 = vrot.lane.b32.xlu0 %v437, 4
        %v521 = vpop.permute.xlu0 %520
        %522 = vrot.lane.b32.xlu0 %v439, 4
        %v523 = vpop.permute.xlu0 %522
        %524 = vrot.lane.b32.xlu0 %v442, 4
        %v525 = vpop.permute.xlu0 %524
        %526 = vrot.lane.b32.xlu0 %v444, 4
        %v527 = vpop.permute.xlu0 %526
        %528 = vrot.lane.b32.xlu0 %v447, 4
        %v529 = vpop.permute.xlu0 %528
        %530 = vrot.lane.b32.xlu0 %v449, 4
        %v531 = vpop.permute.xlu0 %530
        %532 = vrot.lane.b32.xlu0 %v452, 4
        %v533 = vpop.permute.xlu0 %532
        %534 = vrot.lane.b32.xlu0 %v454, 4
        %v535 = vpop.permute.xlu0 %534
        %536 = vrot.lane.b32.xlu0 %v457, 4
        %v537 = vpop.permute.xlu0 %536
        %538 = vrot.lane.b32.xlu0 %v459, 4
        %v539 = vpop.permute.xlu0 %538
        %540 = vrot.lane.b32.xlu0 %v462, 4
        %v541 = vpop.permute.xlu0 %540
        %542 = vrot.lane.b32.xlu0 %v464, 4
        %v543 = vpop.permute.xlu0 %542
        %544 = vrot.lane.b32.xlu0 %v467, 4
        %v545 = vpop.permute.xlu0 %544
        %546 = vrot.lane.b32.xlu0 %v469, 4
        %v547 = vpop.permute.xlu0 %546
        %548 = vrot.lane.b32.xlu0 %v472, 4
        %v549 = vpop.permute.xlu0 %548
        %550 = vrot.lane.b32.xlu0 %v474, 4
        %v551 = vpop.permute.xlu0 %550
        %552 = vrot.lane.b32.xlu0 %v477, 4
        %v553 = vpop.permute.xlu0 %552
        %554 = vrot.lane.b32.xlu0 %v479, 4
        %v555 = vpop.permute.xlu0 %554
        %556 = vrot.lane.b32.xlu0 %v482, 4
        %v557 = vpop.permute.xlu0 %556
        %558 = vrot.lane.b32.xlu0 %v484, 4
        %v559 = vpop.permute.xlu0 %558
        %560 = vrot.lane.b32.xlu0 %v487, 4
        %v561 = vpop.permute.xlu0 %560
        %562 = vrot.lane.b32.xlu0 %v489, 4
        %v563 = vpop.permute.xlu0 %562
        %564 = vrot.lane.b32.xlu0 %v492, 4
        %v565 = vpop.permute.xlu0 %564
        %566 = vrot.lane.b32.xlu0 %v494, 4
        %v567 = vpop.permute.xlu0 %566
        %568 = vrot.lane.b32.xlu0 %v497, 4
        %v569 = vpop.permute.xlu0 %568
        %570 = vrot.lane.b32.xlu0 %v499, 4
        %v571 = vpop.permute.xlu0 %570
        %vm608 = vcmask 1045504
        %v609 = vrot.slane %v295, 2
        %v610 = vrot.slane %v296, 2
        %v611 = vsel %vm608, %v609, %v610
        %v612 = vrot.slane %v297, 2
        %v613 = vsel %vm608, %v610, %v612
        %v614 = vrot.slane %v298, 2
        %v615 = vrot.slane %v299, 2
        %v616 = vsel %vm608, %v614, %v615
        %v617 = vrot.slane %v300, 2
        %v618 = vsel %vm608, %v615, %v617
        %v619 = vrot.slane %v301, 2
        %v620 = vrot.slane %v302, 2
        %v621 = vsel %vm608, %v619, %v620
        %v622 = vrot.slane %v303, 2
        %v623 = vsel %vm608, %v620, %v622
        %v624 = vrot.slane %v304, 2
        %v625 = vrot.slane %v305, 2
        %v626 = vsel %vm608, %v624, %v625
        %v627 = vrot.slane %v306, 2
        %v628 = vsel %vm608, %v625, %v627
        %v629 = vrot.slane %v307, 2
        %v630 = vrot.slane %v308, 2
        %v631 = vsel %vm608, %v629, %v630
        %v632 = vrot.slane %v309, 2
        %v633 = vsel %vm608, %v630, %v632
        %v634 = vrot.slane %v310, 2
        %v635 = vrot.slane %v311, 2
        %v636 = vsel %vm608, %v634, %v635
        %v637 = vrot.slane %v312, 2
        %v638 = vsel %vm608, %v635, %v637
        %v639 = vrot.slane %v313, 2
        %v640 = vrot.slane %v314, 2
        %v641 = vsel %vm608, %v639, %v640
        %v642 = vrot.slane %v315, 2
        %v643 = vsel %vm608, %v640, %v642
        %v644 = vrot.slane %v316, 2
        %v645 = vrot.slane %v317, 2
        %v646 = vsel %vm608, %v644, %v645
        %v647 = vrot.slane %v318, 2
        %v648 = vsel %vm608, %v645, %v647
        %v649 = vrot.slane %v319, 2
        %v650 = vrot.slane %v320, 2
        %v651 = vsel %vm608, %v649, %v650
        %v652 = vrot.slane %v321, 2
        %v653 = vsel %vm608, %v650, %v652
        %v654 = vrot.slane %v322, 2
        %v655 = vrot.slane %v323, 2
        %v656 = vsel %vm608, %v654, %v655
        %v657 = vrot.slane %v324, 2
        %v658 = vsel %vm608, %v655, %v657
        %v659 = vrot.slane %v325, 2
        %v660 = vrot.slane %v326, 2
        %v661 = vsel %vm608, %v659, %v660
        %v662 = vrot.slane %v327, 2
        %v663 = vsel %vm608, %v660, %v662
        %v664 = vrot.slane %v328, 2
        %v665 = vrot.slane %v329, 2
        %v666 = vsel %vm608, %v664, %v665
        %v667 = vrot.slane %v330, 2
        %v668 = vsel %vm608, %v665, %v667
        %v669 = vrot.slane %v331, 2
        %v670 = vrot.slane %v332, 2
        %v671 = vsel %vm608, %v669, %v670
        %v672 = vrot.slane %v333, 2
        %v673 = vsel %vm608, %v670, %v672
        %v674 = vrot.slane %v334, 2
        %v675 = vrot.slane %v335, 2
        %v676 = vsel %vm608, %v674, %v675
        %v677 = vrot.slane %v336, 2
        %v678 = vsel %vm608, %v675, %v677
        %v679 = vrot.slane %v337, 2
        %v680 = vrot.slane %v338, 2
        %v681 = vsel %vm608, %v679, %v680
        %v682 = vrot.slane %v339, 2
        %v683 = vsel %vm608, %v680, %v682
        %v684 = vrot.slane %v340, 2
        %v685 = vrot.slane %v341, 2
        %v686 = vsel %vm608, %v684, %v685
        %v687 = vrot.slane %v342, 2
        %v688 = vsel %vm608, %v685, %v687
        %v689 = vrot.slane %v343, 2
        %v690 = vrot.slane %v344, 2
        %v691 = vsel %vm608, %v689, %v690
        %v692 = vrot.slane %v345, 2
        %v693 = vsel %vm608, %v690, %v692
        %v694 = vrot.slane %v346, 2
        %v695 = vrot.slane %v347, 2
        %v696 = vsel %vm608, %v694, %v695
        %v697 = vrot.slane %v348, 2
        %v698 = vsel %vm608, %v695, %v697
        %699 = vrot.lane.b32.xlu0 %v611, 8
        %v700 = vpop.permute.xlu0 %699
        %701 = vrot.lane.b32.xlu0 %v613, 8
        %v702 = vpop.permute.xlu0 %701
        %703 = vrot.lane.b32.xlu0 %v616, 8
        %v704 = vpop.permute.xlu0 %703
        %705 = vrot.lane.b32.xlu0 %v618, 8
        %v706 = vpop.permute.xlu0 %705
        %707 = vrot.lane.b32.xlu0 %v621, 8
        %v708 = vpop.permute.xlu0 %707
        %709 = vrot.lane.b32.xlu0 %v623, 8
        %v710 = vpop.permute.xlu0 %709
        %711 = vrot.lane.b32.xlu0 %v626, 8
        %v712 = vpop.permute.xlu0 %711
        %713 = vrot.lane.b32.xlu0 %v628, 8
        %v714 = vpop.permute.xlu0 %713
        %715 = vrot.lane.b32.xlu0 %v631, 8
        %v716 = vpop.permute.xlu0 %715
        %717 = vrot.lane.b32.xlu0 %v633, 8
        %v718 = vpop.permute.xlu0 %717
        %719 = vrot.lane.b32.xlu0 %v636, 8
        %v720 = vpop.permute.xlu0 %719
        %721 = vrot.lane.b32.xlu0 %v638, 8
        %v722 = vpop.permute.xlu0 %721
        %723 = vrot.lane.b32.xlu0 %v641, 8
        %v724 = vpop.permute.xlu0 %723
        %725 = vrot.lane.b32.xlu0 %v643, 8
        %v726 = vpop.permute.xlu0 %725
        %727 = vrot.lane.b32.xlu0 %v646, 8
        %v728 = vpop.permute.xlu0 %727
        %729 = vrot.lane.b32.xlu0 %v648, 8
        %v730 = vpop.permute.xlu0 %729
        %731 = vrot.lane.b32.xlu0 %v651, 8
        %v732 = vpop.permute.xlu0 %731
        %733 = vrot.lane.b32.xlu0 %v653, 8
        %v734 = vpop.permute.xlu0 %733
        %735 = vrot.lane.b32.xlu0 %v656, 8
        %v736 = vpop.permute.xlu0 %735
        %737 = vrot.lane.b32.xlu0 %v658, 8
        %v738 = vpop.permute.xlu0 %737
        %739 = vrot.lane.b32.xlu0 %v661, 8
        %v740 = vpop.permute.xlu0 %739
        %741 = vrot.lane.b32.xlu0 %v663, 8
        %v742 = vpop.permute.xlu0 %741
        %743 = vrot.lane.b32.xlu0 %v666, 8
        %v744 = vpop.permute.xlu0 %743
        %745 = vrot.lane.b32.xlu0 %v668, 8
        %v746 = vpop.permute.xlu0 %745
        %747 = vrot.lane.b32.xlu0 %v671, 8
        %v748 = vpop.permute.xlu0 %747
        %749 = vrot.lane.b32.xlu0 %v673, 8
        %v750 = vpop.permute.xlu0 %749
        %751 = vrot.lane.b32.xlu0 %v676, 8
        %v752 = vpop.permute.xlu0 %751
        %753 = vrot.lane.b32.xlu0 %v678, 8
        %v754 = vpop.permute.xlu0 %753
        %755 = vrot.lane.b32.xlu0 %v681, 8
        %v756 = vpop.permute.xlu0 %755
        %757 = vrot.lane.b32.xlu0 %v683, 8
        %v758 = vpop.permute.xlu0 %757
        %759 = vrot.lane.b32.xlu0 %v686, 8
        %v760 = vpop.permute.xlu0 %759
        %761 = vrot.lane.b32.xlu0 %v688, 8
        %v762 = vpop.permute.xlu0 %761
        %763 = vrot.lane.b32.xlu0 %v691, 8
        %v764 = vpop.permute.xlu0 %763
        %765 = vrot.lane.b32.xlu0 %v693, 8
        %v766 = vpop.permute.xlu0 %765
        %767 = vrot.lane.b32.xlu0 %v696, 8
        %v768 = vpop.permute.xlu0 %767
        %769 = vrot.lane.b32.xlu0 %v698, 8
        %v770 = vpop.permute.xlu0 %769
        %809 = vrot.lane.b32.xlu0 %v298, 12
        %v810 = vpop.permute.xlu0 %809
        %811 = vrot.lane.b32.xlu0 %v299, 12
        %v812 = vpop.permute.xlu0 %811
        %813 = vrot.lane.b32.xlu0 %v301, 12
        %v814 = vpop.permute.xlu0 %813
        %815 = vrot.lane.b32.xlu0 %v302, 12
        %v816 = vpop.permute.xlu0 %815
        %817 = vrot.lane.b32.xlu0 %v304, 12
        %v818 = vpop.permute.xlu0 %817
        %819 = vrot.lane.b32.xlu0 %v305, 12
        %v820 = vpop.permute.xlu0 %819
        %821 = vrot.lane.b32.xlu0 %v307, 12
        %v822 = vpop.permute.xlu0 %821
        %823 = vrot.lane.b32.xlu0 %v308, 12
        %v824 = vpop.permute.xlu0 %823
        %825 = vrot.lane.b32.xlu0 %v310, 12
        %v826 = vpop.permute.xlu0 %825
        %827 = vrot.lane.b32.xlu0 %v311, 12
        %v828 = vpop.permute.xlu0 %827
        %829 = vrot.lane.b32.xlu0 %v313, 12
        %v830 = vpop.permute.xlu0 %829
        %831 = vrot.lane.b32.xlu0 %v314, 12
        %v832 = vpop.permute.xlu0 %831
        %833 = vrot.lane.b32.xlu0 %v316, 12
        %v834 = vpop.permute.xlu0 %833
        %835 = vrot.lane.b32.xlu0 %v317, 12
        %v836 = vpop.permute.xlu0 %835
        %837 = vrot.lane.b32.xlu0 %v319, 12
        %v838 = vpop.permute.xlu0 %837
        %839 = vrot.lane.b32.xlu0 %v320, 12
        %v840 = vpop.permute.xlu0 %839
        %841 = vrot.lane.b32.xlu0 %v322, 12
        %v842 = vpop.permute.xlu0 %841
        %843 = vrot.lane.b32.xlu0 %v323, 12
        %v844 = vpop.permute.xlu0 %843
        %845 = vrot.lane.b32.xlu0 %v325, 12
        %v846 = vpop.permute.xlu0 %845
        %847 = vrot.lane.b32.xlu0 %v326, 12
        %v848 = vpop.permute.xlu0 %847
        %849 = vrot.lane.b32.xlu0 %v328, 12
        %v850 = vpop.permute.xlu0 %849
        %851 = vrot.lane.b32.xlu0 %v329, 12
        %v852 = vpop.permute.xlu0 %851
        %853 = vrot.lane.b32.xlu0 %v331, 12
        %v854 = vpop.permute.xlu0 %853
        %855 = vrot.lane.b32.xlu0 %v332, 12
        %v856 = vpop.permute.xlu0 %855
        %857 = vrot.lane.b32.xlu0 %v334, 12
        %v858 = vpop.permute.xlu0 %857
        %859 = vrot.lane.b32.xlu0 %v335, 12
        %v860 = vpop.permute.xlu0 %859
        %861 = vrot.lane.b32.xlu0 %v337, 12
        %v862 = vpop.permute.xlu0 %861
        %863 = vrot.lane.b32.xlu0 %v338, 12
        %v864 = vpop.permute.xlu0 %863
        %865 = vrot.lane.b32.xlu0 %v340, 12
        %v866 = vpop.permute.xlu0 %865
        %867 = vrot.lane.b32.xlu0 %v341, 12
        %v868 = vpop.permute.xlu0 %867
        %869 = vrot.lane.b32.xlu0 %v343, 12
        %v870 = vpop.permute.xlu0 %869
        %871 = vrot.lane.b32.xlu0 %v344, 12
        %v872 = vpop.permute.xlu0 %871
        %873 = vrot.lane.b32.xlu0 %v346, 12
        %v874 = vpop.permute.xlu0 %873
        %875 = vrot.lane.b32.xlu0 %v347, 12
        %v876 = vpop.permute.xlu0 %875
        %877 = vrot.lane.b32.xlu0 %v349, 12
        %v878 = vpop.permute.xlu0 %877
        %879 = vrot.lane.b32.xlu0 %v350, 12
        %v880 = vpop.permute.xlu0 %879
        %v918 = vrot.slane %v349, 1
        %v919 = vrot.slane %v350, 1
        %v920 = vsel %vm409, %v918, %v919
        %v921 = vrot.slane %v351, 1
        %v922 = vsel %vm409, %v919, %v921
        %923 = vrot.lane.b32.xlu0 %v417, 16
        %v924 = vpop.permute.xlu0 %923
        %925 = vrot.lane.b32.xlu0 %v419, 16
        %v926 = vpop.permute.xlu0 %925
        %927 = vrot.lane.b32.xlu0 %v422, 16
        %v928 = vpop.permute.xlu0 %927
        %929 = vrot.lane.b32.xlu0 %v424, 16
        %v930 = vpop.permute.xlu0 %929
        %931 = vrot.lane.b32.xlu0 %v427, 16
        %v932 = vpop.permute.xlu0 %931
        %933 = vrot.lane.b32.xlu0 %v429, 16
        %v934 = vpop.permute.xlu0 %933
        %935 = vrot.lane.b32.xlu0 %v432, 16
        %v936 = vpop.permute.xlu0 %935
        %937 = vrot.lane.b32.xlu0 %v434, 16
        %v938 = vpop.permute.xlu0 %937
        %939 = vrot.lane.b32.xlu0 %v437, 16
        %v940 = vpop.permute.xlu0 %939
        %941 = vrot.lane.b32.xlu0 %v439, 16
        %v942 = vpop.permute.xlu0 %941
        %943 = vrot.lane.b32.xlu0 %v442, 16
        %v944 = vpop.permute.xlu0 %943
        %945 = vrot.lane.b32.xlu0 %v444, 16
        %v946 = vpop.permute.xlu0 %945
        %947 = vrot.lane.b32.xlu0 %v447, 16
        %v948 = vpop.permute.xlu0 %947
        %949 = vrot.lane.b32.xlu0 %v449, 16
        %v950 = vpop.permute.xlu0 %949
        %951 = vrot.lane.b32.xlu0 %v452, 16
        %v952 = vpop.permute.xlu0 %951
        %953 = vrot.lane.b32.xlu0 %v454, 16
        %v954 = vpop.permute.xlu0 %953
        %955 = vrot.lane.b32.xlu0 %v457, 16
        %v956 = vpop.permute.xlu0 %955
        %957 = vrot.lane.b32.xlu0 %v459, 16
        %v958 = vpop.permute.xlu0 %957
        %959 = vrot.lane.b32.xlu0 %v462, 16
        %v960 = vpop.permute.xlu0 %959
        %961 = vrot.lane.b32.xlu0 %v464, 16
        %v962 = vpop.permute.xlu0 %961
        %963 = vrot.lane.b32.xlu0 %v467, 16
        %v964 = vpop.permute.xlu0 %963
        %965 = vrot.lane.b32.xlu0 %v469, 16
        %v966 = vpop.permute.xlu0 %965
        %967 = vrot.lane.b32.xlu0 %v472, 16
        %v968 = vpop.permute.xlu0 %967
        %969 = vrot.lane.b32.xlu0 %v474, 16
        %v970 = vpop.permute.xlu0 %969
        %971 = vrot.lane.b32.xlu0 %v477, 16
        %v972 = vpop.permute.xlu0 %971
        %973 = vrot.lane.b32.xlu0 %v479, 16
        %v974 = vpop.permute.xlu0 %973
        %975 = vrot.lane.b32.xlu0 %v482, 16
        %v976 = vpop.permute.xlu0 %975
        %977 = vrot.lane.b32.xlu0 %v484, 16
        %v978 = vpop.permute.xlu0 %977
        %979 = vrot.lane.b32.xlu0 %v487, 16
        %v980 = vpop.permute.xlu0 %979
        %981 = vrot.lane.b32.xlu0 %v489, 16
        %v982 = vpop.permute.xlu0 %981
        %983 = vrot.lane.b32.xlu0 %v492, 16
        %v984 = vpop.permute.xlu0 %983
        %985 = vrot.lane.b32.xlu0 %v494, 16
        %v986 = vpop.permute.xlu0 %985
        %987 = vrot.lane.b32.xlu0 %v497, 16
        %v988 = vpop.permute.xlu0 %987
        %989 = vrot.lane.b32.xlu0 %v499, 16
        %v990 = vpop.permute.xlu0 %989
        %991 = vrot.lane.b32.xlu0 %v920, 16
        %v992 = vpop.permute.xlu0 %991
        %993 = vrot.lane.b32.xlu0 %v922, 16
        %v994 = vpop.permute.xlu0 %993
        %v1031 = vrot.slane %v349, 2
        %v1032 = vrot.slane %v350, 2
        %v1033 = vsel %vm608, %v1031, %v1032
        %v1034 = vrot.slane %v351, 2
        %v1035 = vsel %vm608, %v1032, %v1034
        %1036 = vrot.lane.b32.xlu0 %v616, 20
        %v1037 = vpop.permute.xlu0 %1036
        %1038 = vrot.lane.b32.xlu0 %v618, 20
        %v1039 = vpop.permute.xlu0 %1038
        %1040 = vrot.lane.b32.xlu0 %v621, 20
        %v1041 = vpop.permute.xlu0 %1040
        %1042 = vrot.lane.b32.xlu0 %v623, 20
        %v1043 = vpop.permute.xlu0 %1042
        %1044 = vrot.lane.b32.xlu0 %v626, 20
        %v1045 = vpop.permute.xlu0 %1044
        %1046 = vrot.lane.b32.xlu0 %v628, 20
        %v1047 = vpop.permute.xlu0 %1046
        %1048 = vrot.lane.b32.xlu0 %v631, 20
        %v1049 = vpop.permute.xlu0 %1048
        %1050 = vrot.lane.b32.xlu0 %v633, 20
        %v1051 = vpop.permute.xlu0 %1050
        %1052 = vrot.lane.b32.xlu0 %v636, 20
        %v1053 = vpop.permute.xlu0 %1052
        %1054 = vrot.lane.b32.xlu0 %v638, 20
        %v1055 = vpop.permute.xlu0 %1054
        %1056 = vrot.lane.b32.xlu0 %v641, 20
        %v1057 = vpop.permute.xlu0 %1056
        %1058 = vrot.lane.b32.xlu0 %v643, 20
        %v1059 = vpop.permute.xlu0 %1058
        %1060 = vrot.lane.b32.xlu0 %v646, 20
        %v1061 = vpop.permute.xlu0 %1060
        %1062 = vrot.lane.b32.xlu0 %v648, 20
        %v1063 = vpop.permute.xlu0 %1062
        %1064 = vrot.lane.b32.xlu0 %v651, 20
        %v1065 = vpop.permute.xlu0 %1064
        %1066 = vrot.lane.b32.xlu0 %v653, 20
        %v1067 = vpop.permute.xlu0 %1066
        %1068 = vrot.lane.b32.xlu0 %v656, 20
        %v1069 = vpop.permute.xlu0 %1068
        %1070 = vrot.lane.b32.xlu0 %v658, 20
        %v1071 = vpop.permute.xlu0 %1070
        %1072 = vrot.lane.b32.xlu0 %v661, 20
        %v1073 = vpop.permute.xlu0 %1072
        %1074 = vrot.lane.b32.xlu0 %v663, 20
        %v1075 = vpop.permute.xlu0 %1074
        %1076 = vrot.lane.b32.xlu0 %v666, 20
        %v1077 = vpop.permute.xlu0 %1076
        %1078 = vrot.lane.b32.xlu0 %v668, 20
        %v1079 = vpop.permute.xlu0 %1078
        %1080 = vrot.lane.b32.xlu0 %v671, 20
        %v1081 = vpop.permute.xlu0 %1080
        %1082 = vrot.lane.b32.xlu0 %v673, 20
        %v1083 = vpop.permute.xlu0 %1082
        %1084 = vrot.lane.b32.xlu0 %v676, 20
        %v1085 = vpop.permute.xlu0 %1084
        %1086 = vrot.lane.b32.xlu0 %v678, 20
        %v1087 = vpop.permute.xlu0 %1086
        %1088 = vrot.lane.b32.xlu0 %v681, 20
        %v1089 = vpop.permute.xlu0 %1088
        %1090 = vrot.lane.b32.xlu0 %v683, 20
        %v1091 = vpop.permute.xlu0 %1090
        %1092 = vrot.lane.b32.xlu0 %v686, 20
        %v1093 = vpop.permute.xlu0 %1092
        %1094 = vrot.lane.b32.xlu0 %v688, 20
        %v1095 = vpop.permute.xlu0 %1094
        %1096 = vrot.lane.b32.xlu0 %v691, 20
        %v1097 = vpop.permute.xlu0 %1096
        %1098 = vrot.lane.b32.xlu0 %v693, 20
        %v1099 = vpop.permute.xlu0 %1098
        %1100 = vrot.lane.b32.xlu0 %v696, 20
        %v1101 = vpop.permute.xlu0 %1100
        %1102 = vrot.lane.b32.xlu0 %v698, 20
        %v1103 = vpop.permute.xlu0 %1102
        %1104 = vrot.lane.b32.xlu0 %v1033, 20
        %v1105 = vpop.permute.xlu0 %1104
        %1106 = vrot.lane.b32.xlu0 %v1035, 20
        %v1107 = vpop.permute.xlu0 %1106
        %1146 = vrot.lane.b32.xlu0 %v301, 24
        %v1147 = vpop.permute.xlu0 %1146
        %1148 = vrot.lane.b32.xlu0 %v302, 24
        %v1149 = vpop.permute.xlu0 %1148
        %1150 = vrot.lane.b32.xlu0 %v304, 24
        %v1151 = vpop.permute.xlu0 %1150
        %1152 = vrot.lane.b32.xlu0 %v305, 24
        %v1153 = vpop.permute.xlu0 %1152
        %1154 = vrot.lane.b32.xlu0 %v307, 24
        %v1155 = vpop.permute.xlu0 %1154
        %1156 = vrot.lane.b32.xlu0 %v308, 24
        %v1157 = vpop.permute.xlu0 %1156
        %1158 = vrot.lane.b32.xlu0 %v310, 24
        %v1159 = vpop.permute.xlu0 %1158
        %1160 = vrot.lane.b32.xlu0 %v311, 24
        %v1161 = vpop.permute.xlu0 %1160
        %1162 = vrot.lane.b32.xlu0 %v313, 24
        %v1163 = vpop.permute.xlu0 %1162
        %1164 = vrot.lane.b32.xlu0 %v314, 24
        %v1165 = vpop.permute.xlu0 %1164
        %1166 = vrot.lane.b32.xlu0 %v316, 24
        %v1167 = vpop.permute.xlu0 %1166
        %1168 = vrot.lane.b32.xlu0 %v317, 24
        %v1169 = vpop.permute.xlu0 %1168
        %1170 = vrot.lane.b32.xlu0 %v319, 24
        %v1171 = vpop.permute.xlu0 %1170
        %1172 = vrot.lane.b32.xlu0 %v320, 24
        %v1173 = vpop.permute.xlu0 %1172
        %1174 = vrot.lane.b32.xlu0 %v322, 24
        %v1175 = vpop.permute.xlu0 %1174
        %1176 = vrot.lane.b32.xlu0 %v323, 24
        %v1177 = vpop.permute.xlu0 %1176
        %1178 = vrot.lane.b32.xlu0 %v325, 24
        %v1179 = vpop.permute.xlu0 %1178
        %1180 = vrot.lane.b32.xlu0 %v326, 24
        %v1181 = vpop.permute.xlu0 %1180
        %1182 = vrot.lane.b32.xlu0 %v328, 24
        %v1183 = vpop.permute.xlu0 %1182
        %1184 = vrot.lane.b32.xlu0 %v329, 24
        %v1185 = vpop.permute.xlu0 %1184
        %1186 = vrot.lane.b32.xlu0 %v331, 24
        %v1187 = vpop.permute.xlu0 %1186
        %1188 = vrot.lane.b32.xlu0 %v332, 24
        %v1189 = vpop.permute.xlu0 %1188
        %1190 = vrot.lane.b32.xlu0 %v334, 24
        %v1191 = vpop.permute.xlu0 %1190
        %1192 = vrot.lane.b32.xlu0 %v335, 24
        %v1193 = vpop.permute.xlu0 %1192
        %1194 = vrot.lane.b32.xlu0 %v337, 24
        %v1195 = vpop.permute.xlu0 %1194
        %1196 = vrot.lane.b32.xlu0 %v338, 24
        %v1197 = vpop.permute.xlu0 %1196
        %1198 = vrot.lane.b32.xlu0 %v340, 24
        %v1199 = vpop.permute.xlu0 %1198
        %1200 = vrot.lane.b32.xlu0 %v341, 24
        %v1201 = vpop.permute.xlu0 %1200
        %1202 = vrot.lane.b32.xlu0 %v343, 24
        %v1203 = vpop.permute.xlu0 %1202
        %1204 = vrot.lane.b32.xlu0 %v344, 24
        %v1205 = vpop.permute.xlu0 %1204
        %1206 = vrot.lane.b32.xlu0 %v346, 24
        %v1207 = vpop.permute.xlu0 %1206
        %1208 = vrot.lane.b32.xlu0 %v347, 24
        %v1209 = vpop.permute.xlu0 %1208
        %1210 = vrot.lane.b32.xlu0 %v349, 24
        %v1211 = vpop.permute.xlu0 %1210
        %1212 = vrot.lane.b32.xlu0 %v350, 24
        %v1213 = vpop.permute.xlu0 %1212
        %1214 = vrot.lane.b32.xlu0 %v352, 24
        %v1215 = vpop.permute.xlu0 %1214
        %1216 = vrot.lane.b32.xlu0 %v353, 24
        %v1217 = vpop.permute.xlu0 %1216
        %v1255 = vrot.slane %v352, 1
        %v1256 = vrot.slane %v353, 1
        %v1257 = vsel %vm409, %v1255, %v1256
        %v1258 = vrot.slane %v354, 1
        %v1259 = vsel %vm409, %v1256, %v1258
        %1260 = vrot.lane.b32.xlu0 %v422, 28
        %v1261 = vpop.permute.xlu0 %1260
        %1262 = vrot.lane.b32.xlu0 %v424, 28
        %v1263 = vpop.permute.xlu0 %1262
        %1264 = vrot.lane.b32.xlu0 %v427, 28
        %v1265 = vpop.permute.xlu0 %1264
        %1266 = vrot.lane.b32.xlu0 %v429, 28
        %v1267 = vpop.permute.xlu0 %1266
        %1268 = vrot.lane.b32.xlu0 %v432, 28
        %v1269 = vpop.permute.xlu0 %1268
        %1270 = vrot.lane.b32.xlu0 %v434, 28
        %v1271 = vpop.permute.xlu0 %1270
        %1272 = vrot.lane.b32.xlu0 %v437, 28
        %v1273 = vpop.permute.xlu0 %1272
        %1274 = vrot.lane.b32.xlu0 %v439, 28
        %v1275 = vpop.permute.xlu0 %1274
        %1276 = vrot.lane.b32.xlu0 %v442, 28
        %v1277 = vpop.permute.xlu0 %1276
        %1278 = vrot.lane.b32.xlu0 %v444, 28
        %v1279 = vpop.permute.xlu0 %1278
        %1280 = vrot.lane.b32.xlu0 %v447, 28
        %v1281 = vpop.permute.xlu0 %1280
        %1282 = vrot.lane.b32.xlu0 %v449, 28
        %v1283 = vpop.permute.xlu0 %1282
        %1284 = vrot.lane.b32.xlu0 %v452, 28
        %v1285 = vpop.permute.xlu0 %1284
        %1286 = vrot.lane.b32.xlu0 %v454, 28
        %v1287 = vpop.permute.xlu0 %1286
        %1288 = vrot.lane.b32.xlu0 %v457, 28
        %v1289 = vpop.permute.xlu0 %1288
        %1290 = vrot.lane.b32.xlu0 %v459, 28
        %v1291 = vpop.permute.xlu0 %1290
        %1292 = vrot.lane.b32.xlu0 %v462, 28
        %v1293 = vpop.permute.xlu0 %1292
        %1294 = vrot.lane.b32.xlu0 %v464, 28
        %v1295 = vpop.permute.xlu0 %1294
        %1296 = vrot.lane.b32.xlu0 %v467, 28
        %v1297 = vpop.permute.xlu0 %1296
        %1298 = vrot.lane.b32.xlu0 %v469, 28
        %v1299 = vpop.permute.xlu0 %1298
        %1300 = vrot.lane.b32.xlu0 %v472, 28
        %v1301 = vpop.permute.xlu0 %1300
        %1302 = vrot.lane.b32.xlu0 %v474, 28
        %v1303 = vpop.permute.xlu0 %1302
        %1304 = vrot.lane.b32.xlu0 %v477, 28
        %v1305 = vpop.permute.xlu0 %1304
        %1306 = vrot.lane.b32.xlu0 %v479, 28
        %v1307 = vpop.permute.xlu0 %1306
        %1308 = vrot.lane.b32.xlu0 %v482, 28
        %v1309 = vpop.permute.xlu0 %1308
        %1310 = vrot.lane.b32.xlu0 %v484, 28
        %v1311 = vpop.permute.xlu0 %1310
        %1312 = vrot.lane.b32.xlu0 %v487, 28
        %v1313 = vpop.permute.xlu0 %1312
        %1314 = vrot.lane.b32.xlu0 %v489, 28
        %v1315 = vpop.permute.xlu0 %1314
        %1316 = vrot.lane.b32.xlu0 %v492, 28
        %v1317 = vpop.permute.xlu0 %1316
        %1318 = vrot.lane.b32.xlu0 %v494, 28
        %v1319 = vpop.permute.xlu0 %1318
        %1320 = vrot.lane.b32.xlu0 %v497, 28
        %v1321 = vpop.permute.xlu0 %1320
        %1322 = vrot.lane.b32.xlu0 %v499, 28
        %v1323 = vpop.permute.xlu0 %1322
        %1324 = vrot.lane.b32.xlu0 %v920, 28
        %v1325 = vpop.permute.xlu0 %1324
        %1326 = vrot.lane.b32.xlu0 %v922, 28
        %v1327 = vpop.permute.xlu0 %1326
        %1328 = vrot.lane.b32.xlu0 %v1257, 28
        %v1329 = vpop.permute.xlu0 %1328
        %1330 = vrot.lane.b32.xlu0 %v1259, 28
        %v1331 = vpop.permute.xlu0 %1330
        %v1368 = vrot.slane %v352, 2
        %v1369 = vrot.slane %v353, 2
        %v1370 = vsel %vm608, %v1368, %v1369
        %v1371 = vrot.slane %v354, 2
        %v1372 = vsel %vm608, %v1369, %v1371
        %1373 = vrot.lane.b32.xlu0 %v621, 32
        %v1374 = vpop.permute.xlu0 %1373
        %1375 = vrot.lane.b32.xlu0 %v623, 32
        %v1376 = vpop.permute.xlu0 %1375
        %1377 = vrot.lane.b32.xlu0 %v626, 32
        %v1378 = vpop.permute.xlu0 %1377
        %1379 = vrot.lane.b32.xlu0 %v628, 32
        %v1380 = vpop.permute.xlu0 %1379
        %1381 = vrot.lane.b32.xlu0 %v631, 32
        %v1382 = vpop.permute.xlu0 %1381
        %1383 = vrot.lane.b32.xlu0 %v633, 32
        %v1384 = vpop.permute.xlu0 %1383
        %1385 = vrot.lane.b32.xlu0 %v636, 32
        %v1386 = vpop.permute.xlu0 %1385
        %1387 = vrot.lane.b32.xlu0 %v638, 32
        %v1388 = vpop.permute.xlu0 %1387
        %1389 = vrot.lane.b32.xlu0 %v641, 32
        %v1390 = vpop.permute.xlu0 %1389
        %1391 = vrot.lane.b32.xlu0 %v643, 32
        %v1392 = vpop.permute.xlu0 %1391
        %1393 = vrot.lane.b32.xlu0 %v646, 32
        %v1394 = vpop.permute.xlu0 %1393
        %1395 = vrot.lane.b32.xlu0 %v648, 32
        %v1396 = vpop.permute.xlu0 %1395
        %1397 = vrot.lane.b32.xlu0 %v651, 32
        %v1398 = vpop.permute.xlu0 %1397
        %1399 = vrot.lane.b32.xlu0 %v653, 32
        %v1400 = vpop.permute.xlu0 %1399
        %1401 = vrot.lane.b32.xlu0 %v656, 32
        %v1402 = vpop.permute.xlu0 %1401
        %1403 = vrot.lane.b32.xlu0 %v658, 32
        %v1404 = vpop.permute.xlu0 %1403
        %1405 = vrot.lane.b32.xlu0 %v661, 32
        %v1406 = vpop.permute.xlu0 %1405
        %1407 = vrot.lane.b32.xlu0 %v663, 32
        %v1408 = vpop.permute.xlu0 %1407
        %1409 = vrot.lane.b32.xlu0 %v666, 32
        %v1410 = vpop.permute.xlu0 %1409
        %1411 = vrot.lane.b32.xlu0 %v668, 32
        %v1412 = vpop.permute.xlu0 %1411
        %1413 = vrot.lane.b32.xlu0 %v671, 32
        %v1414 = vpop.permute.xlu0 %1413
        %1415 = vrot.lane.b32.xlu0 %v673, 32
        %v1416 = vpop.permute.xlu0 %1415
        %1417 = vrot.lane.b32.xlu0 %v676, 32
        %v1418 = vpop.permute.xlu0 %1417
        %1419 = vrot.lane.b32.xlu0 %v678, 32
        %v1420 = vpop.permute.xlu0 %1419
        %1421 = vrot.lane.b32.xlu0 %v681, 32
        %v1422 = vpop.permute.xlu0 %1421
        %1423 = vrot.lane.b32.xlu0 %v683, 32
        %v1424 = vpop.permute.xlu0 %1423
        %1425 = vrot.lane.b32.xlu0 %v686, 32
        %v1426 = vpop.permute.xlu0 %1425
        %1427 = vrot.lane.b32.xlu0 %v688, 32
        %v1428 = vpop.permute.xlu0 %1427
        %1429 = vrot.lane.b32.xlu0 %v691, 32
        %v1430 = vpop.permute.xlu0 %1429
        %1431 = vrot.lane.b32.xlu0 %v693, 32
        %v1432 = vpop.permute.xlu0 %1431
        %1433 = vrot.lane.b32.xlu0 %v696, 32
        %v1434 = vpop.permute.xlu0 %1433
        %1435 = vrot.lane.b32.xlu0 %v698, 32
        %v1436 = vpop.permute.xlu0 %1435
        %1437 = vrot.lane.b32.xlu0 %v1033, 32
        %v1438 = vpop.permute.xlu0 %1437
        %1439 = vrot.lane.b32.xlu0 %v1035, 32
        %v1440 = vpop.permute.xlu0 %1439
        %1441 = vrot.lane.b32.xlu0 %v1370, 32
        %v1442 = vpop.permute.xlu0 %1441
        %1443 = vrot.lane.b32.xlu0 %v1372, 32
        %v1444 = vpop.permute.xlu0 %1443
        %vm1481 = vcmask 31744
        %v1482 = vsel %vm1481, %v295, %v501
        %v1483 = vsel %vm1481, %v296, %v503
        %v1484 = vsel %vm1481, %v298, %v505
        %v1485 = vsel %vm1481, %v299, %v507
        %v1486 = vsel %vm1481, %v301, %v509
        %v1487 = vsel %vm1481, %v302, %v511
        %v1488 = vsel %vm1481, %v304, %v513
        %v1489 = vsel %vm1481, %v305, %v515
        %v1490 = vsel %vm1481, %v307, %v517
        %v1491 = vsel %vm1481, %v308, %v519
        %v1492 = vsel %vm1481, %v310, %v521
        %v1493 = vsel %vm1481, %v311, %v523
        %v1494 = vsel %vm1481, %v313, %v525
        %v1495 = vsel %vm1481, %v314, %v527
        %v1496 = vsel %vm1481, %v316, %v529
        %v1497 = vsel %vm1481, %v317, %v531
        %v1498 = vsel %vm1481, %v319, %v533
        %v1499 = vsel %vm1481, %v320, %v535
        %v1500 = vsel %vm1481, %v322, %v537
        %v1501 = vsel %vm1481, %v323, %v539
        %v1502 = vsel %vm1481, %v325, %v541
        %v1503 = vsel %vm1481, %v326, %v543
        %v1504 = vsel %vm1481, %v328, %v545
        %v1505 = vsel %vm1481, %v329, %v547
        %v1506 = vsel %vm1481, %v331, %v549
        %v1507 = vsel %vm1481, %v332, %v551
        %v1508 = vsel %vm1481, %v334, %v553
        %v1509 = vsel %vm1481, %v335, %v555
        %v1510 = vsel %vm1481, %v337, %v557
        %v1511 = vsel %vm1481, %v338, %v559
        %v1512 = vsel %vm1481, %v340, %v561
        %v1513 = vsel %vm1481, %v341, %v563
        %v1514 = vsel %vm1481, %v343, %v565
        %v1515 = vsel %vm1481, %v344, %v567
        %v1516 = vsel %vm1481, %v346, %v569
        %v1517 = vsel %vm1481, %v347, %v571
        %vm1518 = vcmask 64512
        %v1519 = vsel %vm1518, %v1482, %v700
        %v1520 = vsel %vm1518, %v1483, %v702
        %v1521 = vsel %vm1518, %v1484, %v704
        %v1522 = vsel %vm1518, %v1485, %v706
        %v1523 = vsel %vm1518, %v1486, %v708
        %v1524 = vsel %vm1518, %v1487, %v710
        %v1525 = vsel %vm1518, %v1488, %v712
        %v1526 = vsel %vm1518, %v1489, %v714
        %v1527 = vsel %vm1518, %v1490, %v716
        %v1528 = vsel %vm1518, %v1491, %v718
        %v1529 = vsel %vm1518, %v1492, %v720
        %v1530 = vsel %vm1518, %v1493, %v722
        %v1531 = vsel %vm1518, %v1494, %v724
        %v1532 = vsel %vm1518, %v1495, %v726
        %v1533 = vsel %vm1518, %v1496, %v728
        %v1534 = vsel %vm1518, %v1497, %v730
        %v1535 = vsel %vm1518, %v1498, %v732
        %v1536 = vsel %vm1518, %v1499, %v734
        %v1537 = vsel %vm1518, %v1500, %v736
        %v1538 = vsel %vm1518, %v1501, %v738
        %v1539 = vsel %vm1518, %v1502, %v740
        %v1540 = vsel %vm1518, %v1503, %v742
        %v1541 = vsel %vm1518, %v1504, %v744
        %v1542 = vsel %vm1518, %v1505, %v746
        %v1543 = vsel %vm1518, %v1506, %v748
        %v1544 = vsel %vm1518, %v1507, %v750
        %v1545 = vsel %vm1518, %v1508, %v752
        %v1546 = vsel %vm1518, %v1509, %v754
        %v1547 = vsel %vm1518, %v1510, %v756
        %v1548 = vsel %vm1518, %v1511, %v758
        %v1549 = vsel %vm1518, %v1512, %v760
        %v1550 = vsel %vm1518, %v1513, %v762
        %v1551 = vsel %vm1518, %v1514, %v764
        %v1552 = vsel %vm1518, %v1515, %v766
        %v1553 = vsel %vm1518, %v1516, %v768
        %v1554 = vsel %vm1518, %v1517, %v770
        %vm1555 = vcmask 97280
        %v1556 = vsel %vm1555, %v1519, %v810
        %v1557 = vsel %vm1555, %v1520, %v812
        %v1558 = vsel %vm1555, %v1521, %v814
        %v1559 = vsel %vm1555, %v1522, %v816
        %v1560 = vsel %vm1555, %v1523, %v818
        %v1561 = vsel %vm1555, %v1524, %v820
        %v1562 = vsel %vm1555, %v1525, %v822
        %v1563 = vsel %vm1555, %v1526, %v824
        %v1564 = vsel %vm1555, %v1527, %v826
        %v1565 = vsel %vm1555, %v1528, %v828
        %v1566 = vsel %vm1555, %v1529, %v830
        %v1567 = vsel %vm1555, %v1530, %v832
        %v1568 = vsel %vm1555, %v1531, %v834
        %v1569 = vsel %vm1555, %v1532, %v836
        %v1570 = vsel %vm1555, %v1533, %v838
        %v1571 = vsel %vm1555, %v1534, %v840
        %v1572 = vsel %vm1555, %v1535, %v842
        %v1573 = vsel %vm1555, %v1536, %v844
        %v1574 = vsel %vm1555, %v1537, %v846
        %v1575 = vsel %vm1555, %v1538, %v848
        %v1576 = vsel %vm1555, %v1539, %v850
        %v1577 = vsel %vm1555, %v1540, %v852
        %v1578 = vsel %vm1555, %v1541, %v854
        %v1579 = vsel %vm1555, %v1542, %v856
        %v1580 = vsel %vm1555, %v1543, %v858
        %v1581 = vsel %vm1555, %v1544, %v860
        %v1582 = vsel %vm1555, %v1545, %v862
        %v1583 = vsel %vm1555, %v1546, %v864
        %v1584 = vsel %vm1555, %v1547, %v866
        %v1585 = vsel %vm1555, %v1548, %v868
        %v1586 = vsel %vm1555, %v1549, %v870
        %v1587 = vsel %vm1555, %v1550, %v872
        %v1588 = vsel %vm1555, %v1551, %v874
        %v1589 = vsel %vm1555, %v1552, %v876
        %v1590 = vsel %vm1555, %v1553, %v878
        %v1591 = vsel %vm1555, %v1554, %v880
        %vm1592 = vcmask 130048
        %v1593 = vsel %vm1592, %v1556, %v924
        %v1594 = vsel %vm1592, %v1557, %v926
        %v1595 = vsel %vm1592, %v1558, %v928
        %v1596 = vsel %vm1592, %v1559, %v930
        %v1597 = vsel %vm1592, %v1560, %v932
        %v1598 = vsel %vm1592, %v1561, %v934
        %v1599 = vsel %vm1592, %v1562, %v936
        %v1600 = vsel %vm1592, %v1563, %v938
        %v1601 = vsel %vm1592, %v1564, %v940
        %v1602 = vsel %vm1592, %v1565, %v942
        %v1603 = vsel %vm1592, %v1566, %v944
        %v1604 = vsel %vm1592, %v1567, %v946
        %v1605 = vsel %vm1592, %v1568, %v948
        %v1606 = vsel %vm1592, %v1569, %v950
        %v1607 = vsel %vm1592, %v1570, %v952
        %v1608 = vsel %vm1592, %v1571, %v954
        %v1609 = vsel %vm1592, %v1572, %v956
        %v1610 = vsel %vm1592, %v1573, %v958
        %v1611 = vsel %vm1592, %v1574, %v960
        %v1612 = vsel %vm1592, %v1575, %v962
        %v1613 = vsel %vm1592, %v1576, %v964
        %v1614 = vsel %vm1592, %v1577, %v966
        %v1615 = vsel %vm1592, %v1578, %v968
        %v1616 = vsel %vm1592, %v1579, %v970
        %v1617 = vsel %vm1592, %v1580, %v972
        %v1618 = vsel %vm1592, %v1581, %v974
        %v1619 = vsel %vm1592, %v1582, %v976
        %v1620 = vsel %vm1592, %v1583, %v978
        %v1621 = vsel %vm1592, %v1584, %v980
        %v1622 = vsel %vm1592, %v1585, %v982
        %v1623 = vsel %vm1592, %v1586, %v984
        %v1624 = vsel %vm1592, %v1587, %v986
        %v1625 = vsel %vm1592, %v1588, %v988
        %v1626 = vsel %vm1592, %v1589, %v990
        %v1627 = vsel %vm1592, %v1590, %v992
        %v1628 = vsel %vm1592, %v1591, %v994
        %vm1629 = vcmask 162816
        %v1630 = vsel %vm1629, %v1593, %v1037
        %v1631 = vsel %vm1629, %v1594, %v1039
        %v1632 = vsel %vm1629, %v1595, %v1041
        %v1633 = vsel %vm1629, %v1596, %v1043
        %v1634 = vsel %vm1629, %v1597, %v1045
        %v1635 = vsel %vm1629, %v1598, %v1047
        %v1636 = vsel %vm1629, %v1599, %v1049
        %v1637 = vsel %vm1629, %v1600, %v1051
        %v1638 = vsel %vm1629, %v1601, %v1053
        %v1639 = vsel %vm1629, %v1602, %v1055
        %v1640 = vsel %vm1629, %v1603, %v1057
        %v1641 = vsel %vm1629, %v1604, %v1059
        %v1642 = vsel %vm1629, %v1605, %v1061
        %v1643 = vsel %vm1629, %v1606, %v1063
        %v1644 = vsel %vm1629, %v1607, %v1065
        %v1645 = vsel %vm1629, %v1608, %v1067
        %v1646 = vsel %vm1629, %v1609, %v1069
        %v1647 = vsel %vm1629, %v1610, %v1071
        %v1648 = vsel %vm1629, %v1611, %v1073
        %v1649 = vsel %vm1629, %v1612, %v1075
        %v1650 = vsel %vm1629, %v1613, %v1077
        %v1651 = vsel %vm1629, %v1614, %v1079
        %v1652 = vsel %vm1629, %v1615, %v1081
        %v1653 = vsel %vm1629, %v1616, %v1083
        %v1654 = vsel %vm1629, %v1617, %v1085
        %v1655 = vsel %vm1629, %v1618, %v1087
        %v1656 = vsel %vm1629, %v1619, %v1089
        %v1657 = vsel %vm1629, %v1620, %v1091
        %v1658 = vsel %vm1629, %v1621, %v1093
        %v1659 = vsel %vm1629, %v1622, %v1095
        %v1660 = vsel %vm1629, %v1623, %v1097
        %v1661 = vsel %vm1629, %v1624, %v1099
        %v1662 = vsel %vm1629, %v1625, %v1101
        %v1663 = vsel %vm1629, %v1626, %v1103
        %v1664 = vsel %vm1629, %v1627, %v1105
        %v1665 = vsel %vm1629, %v1628, %v1107
        %vm1666 = vcmask 195584
        %v1667 = vsel %vm1666, %v1630, %v1147
        %v1668 = vsel %vm1666, %v1631, %v1149
        %v1669 = vsel %vm1666, %v1632, %v1151
        %v1670 = vsel %vm1666, %v1633, %v1153
        %v1671 = vsel %vm1666, %v1634, %v1155
        %v1672 = vsel %vm1666, %v1635, %v1157
        %v1673 = vsel %vm1666, %v1636, %v1159
        %v1674 = vsel %vm1666, %v1637, %v1161
        %v1675 = vsel %vm1666, %v1638, %v1163
        %v1676 = vsel %vm1666, %v1639, %v1165
        %v1677 = vsel %vm1666, %v1640, %v1167
        %v1678 = vsel %vm1666, %v1641, %v1169
        %v1679 = vsel %vm1666, %v1642, %v1171
        %v1680 = vsel %vm1666, %v1643, %v1173
        %v1681 = vsel %vm1666, %v1644, %v1175
        %v1682 = vsel %vm1666, %v1645, %v1177
        %v1683 = vsel %vm1666, %v1646, %v1179
        %v1684 = vsel %vm1666, %v1647, %v1181
        %v1685 = vsel %vm1666, %v1648, %v1183
        %v1686 = vsel %vm1666, %v1649, %v1185
        %v1687 = vsel %vm1666, %v1650, %v1187
        %v1688 = vsel %vm1666, %v1651, %v1189
        %v1689 = vsel %vm1666, %v1652, %v1191
        %v1690 = vsel %vm1666, %v1653, %v1193
        %v1691 = vsel %vm1666, %v1654, %v1195
        %v1692 = vsel %vm1666, %v1655, %v1197
        %v1693 = vsel %vm1666, %v1656, %v1199
        %v1694 = vsel %vm1666, %v1657, %v1201
        %v1695 = vsel %vm1666, %v1658, %v1203
        %v1696 = vsel %vm1666, %v1659, %v1205
        %v1697 = vsel %vm1666, %v1660, %v1207
        %v1698 = vsel %vm1666, %v1661, %v1209
        %v1699 = vsel %vm1666, %v1662, %v1211
        %v1700 = vsel %vm1666, %v1663, %v1213
        %v1701 = vsel %vm1666, %v1664, %v1215
        %v1702 = vsel %vm1666, %v1665, %v1217
        %vm1703 = vcmask 228352
        %v1704 = vsel %vm1703, %v1667, %v1261
        %v1705 = vsel %vm1703, %v1668, %v1263
        %v1706 = vsel %vm1703, %v1669, %v1265
        %v1707 = vsel %vm1703, %v1670, %v1267
        %v1708 = vsel %vm1703, %v1671, %v1269
        %v1709 = vsel %vm1703, %v1672, %v1271
        %v1710 = vsel %vm1703, %v1673, %v1273
        %v1711 = vsel %vm1703, %v1674, %v1275
        %v1712 = vsel %vm1703, %v1675, %v1277
        %v1713 = vsel %vm1703, %v1676, %v1279
        %v1714 = vsel %vm1703, %v1677, %v1281
        %v1715 = vsel %vm1703, %v1678, %v1283
        %v1716 = vsel %vm1703, %v1679, %v1285
        %v1717 = vsel %vm1703, %v1680, %v1287
        %v1718 = vsel %vm1703, %v1681, %v1289
        %v1719 = vsel %vm1703, %v1682, %v1291
        %v1720 = vsel %vm1703, %v1683, %v1293
        %v1721 = vsel %vm1703, %v1684, %v1295
        %v1722 = vsel %vm1703, %v1685, %v1297
        %v1723 = vsel %vm1703, %v1686, %v1299
        %v1724 = vsel %vm1703, %v1687, %v1301
        %v1725 = vsel %vm1703, %v1688, %v1303
        %v1726 = vsel %vm1703, %v1689, %v1305
        %v1727 = vsel %vm1703, %v1690, %v1307
        %v1728 = vsel %vm1703, %v1691, %v1309
        %v1729 = vsel %vm1703, %v1692, %v1311
        %v1730 = vsel %vm1703, %v1693, %v1313
        %v1731 = vsel %vm1703, %v1694, %v1315
        %v1732 = vsel %vm1703, %v1695, %v1317
        %v1733 = vsel %vm1703, %v1696, %v1319
        %v1734 = vsel %vm1703, %v1697, %v1321
        %v1735 = vsel %vm1703, %v1698, %v1323
        %v1736 = vsel %vm1703, %v1699, %v1325
        %v1737 = vsel %vm1703, %v1700, %v1327
        %v1738 = vsel %vm1703, %v1701, %v1329
        %v1739 = vsel %vm1703, %v1702, %v1331
        %vm1740 = vcmask 261120
        %v1741 = vsel %vm1740, %v1704, %v1374
        %v1742 = vsel %vm1740, %v1705, %v1376
        %v1743 = vsel %vm1740, %v1706, %v1378
        %v1744 = vsel %vm1740, %v1707, %v1380
        %v1745 = vsel %vm1740, %v1708, %v1382
        %v1746 = vsel %vm1740, %v1709, %v1384
        %v1747 = vsel %vm1740, %v1710, %v1386
        %v1748 = vsel %vm1740, %v1711, %v1388
        %v1749 = vsel %vm1740, %v1712, %v1390
        %v1750 = vsel %vm1740, %v1713, %v1392
        %v1751 = vsel %vm1740, %v1714, %v1394
        %v1752 = vsel %vm1740, %v1715, %v1396
        %v1753 = vsel %vm1740, %v1716, %v1398
        %v1754 = vsel %vm1740, %v1717, %v1400
        %v1755 = vsel %vm1740, %v1718, %v1402
        %v1756 = vsel %vm1740, %v1719, %v1404
        %v1757 = vsel %vm1740, %v1720, %v1406
        %v1758 = vsel %vm1740, %v1721, %v1408
        %v1759 = vsel %vm1740, %v1722, %v1410
        %v1760 = vsel %vm1740, %v1723, %v1412
        %v1761 = vsel %vm1740, %v1724, %v1414
        %v1762 = vsel %vm1740, %v1725, %v1416
        %v1763 = vsel %vm1740, %v1726, %v1418
        %v1764 = vsel %vm1740, %v1727, %v1420
        %v1765 = vsel %vm1740, %v1728, %v1422
        %v1766 = vsel %vm1740, %v1729, %v1424
        %v1767 = vsel %vm1740, %v1730, %v1426
        %v1768 = vsel %vm1740, %v1731, %v1428
        %v1769 = vsel %vm1740, %v1732, %v1430
        %v1770 = vsel %vm1740, %v1733, %v1432
        %v1771 = vsel %vm1740, %v1734, %v1434
        %v1772 = vsel %vm1740, %v1735, %v1436
        %v1773 = vsel %vm1740, %v1736, %v1438
        %v1774 = vsel %vm1740, %v1737, %v1440
        %v1775 = vsel %vm1740, %v1738, %v1442
        %v1776 = vsel %vm1740, %v1739, %v1444
        %v1777 = vld [vmem:[%s1] sm:$0xff]
        %v1778 = vld [vmem:[%s1 + $0x8] sm:$0xff]
        %v1779 = vld [vmem:[%s1 + $0x10] sm:$0xff]
        %v1780 = vld [vmem:[%s1 + $0x18] sm:$0xff]
        %v1781 = vld [vmem:[%s1 + $0x20] sm:$0xf]
        %vm1782 = vcmask 293888
        %v1784 = vsel %vm1782, %v1741, 0
        %v1787 = vsel %vm1782, %v1742, 0
        %v1790 = vsel %vm1782, %v1743, 0
        %v1793 = vsel %vm1782, %v1744, 0
        %v1796 = vsel %vm1782, %v1745, 0
        %v1799 = vsel %vm1782, %v1746, 0
        %v1802 = vsel %vm1782, %v1747, 0
        %v1805 = vsel %vm1782, %v1748, 0
        %v1808 = vsel %vm1782, %v1749, 0
        %v1811 = vsel %vm1782, %v1750, 0
        %v1814 = vsel %vm1782, %v1751, 0
        %v1817 = vsel %vm1782, %v1752, 0
        %v1820 = vsel %vm1782, %v1753, 0
        %v1823 = vsel %vm1782, %v1754, 0
        %v1826 = vsel %vm1782, %v1755, 0
        %v1829 = vsel %vm1782, %v1756, 0
        %v1832 = vsel %vm1782, %v1757, 0
        %v1835 = vsel %vm1782, %v1758, 0
        %v1838 = vsel %vm1782, %v1759, 0
        %v1841 = vsel %vm1782, %v1760, 0
        %v1844 = vsel %vm1782, %v1761, 0
        %v1847 = vsel %vm1782, %v1762, 0
        %v1850 = vsel %vm1782, %v1763, 0
        %v1853 = vsel %vm1782, %v1764, 0
        %v1856 = vsel %vm1782, %v1765, 0
        %v1859 = vsel %vm1782, %v1766, 0
        %v1862 = vsel %vm1782, %v1767, 0
        %v1865 = vsel %vm1782, %v1768, 0
        %v1868 = vsel %vm1782, %v1769, 0
        %v1871 = vsel %vm1782, %v1770, 0
        %v1874 = vsel %vm1782, %v1771, 0
        %v1877 = vsel %vm1782, %v1772, 0
        %v1880 = vsel %vm1782, %v1773, 0
        %v1883 = vsel %vm1782, %v1774, 0
        %v1886 = vsel %vm1782, %v1775, 0
        %v1889 = vsel %vm1782, %v1776, 0
        %vm1891 = vcmask 1043456
        %v1893 = vsel %vm1891, %v1781, 0
        %1895 = vmatprep.subr.mxu0 0.0
        %1896 = vmatpush1.msra.mxu0 %v1777
        %1897 = vmatprep.subr.mxu0 0.0
        %1898 = vmatpush1.msra.mxu0 %v1778
        %1899 = vmatprep.subr.mxu0 0.0
        %1900 = vmatpush1.msra.mxu0 %v1779
        %1901 = vmatprep.subr.mxu0 0.0
        %1902 = vmatpush1.msra.mxu0 %v1780
        %1903 = vmatprep.subr.mxu0 0.0
        %1904 = vmatpush1.msra.mxu0 %v1893
        %1905 = vmatprep.subr.mxu0 0.0
        %1906 = vmatpush1.msra.mxu0 0.0
        %1907 = vmatprep.subr.mxu0 0.0
        %1908 = vmatpush1.msra.mxu0 0.0
        %1909 = vmatprep.subr.mxu0 0.0
        %1910 = vmatpush1.msra.mxu0 0.0
        %1911 = vmatprep.subr.mxu0 0.0
        %1912 = vmatpush1.msra.mxu0 0.0
        %1913 = vmatprep.subr.mxu0 0.0
        %1914 = vmatpush1.msra.mxu0 0.0
        %1915 = vmatprep.subr.mxu0 0.0
        %1916 = vmatpush1.msra.mxu0 0.0
        %1917 = vmatprep.subr.mxu0 0.0
        %1918 = vmatpush1.msra.mxu0 0.0
        %1919 = vmatprep.subr.mxu0 0.0
        %1920 = vmatpush1.msra.mxu0 0.0
        %1921 = vmatprep.subr.mxu0 0.0
        %1922 = vmatpush1.msra.mxu0 0.0
        %1923 = vmatprep.subr.mxu0 0.0
        %1924 = vmatpush1.msra.mxu0 0.0
        %1925 = vmatprep.subr.mxu0 0.0
        %1926 = vmatpush1.msra.mxu0 0.0
        %1927 = vmatprep.subr.mxu0 0.0
        %1928 = vmatpush1.msra.mxu0 0.0
        %1929 = vmatprep.subr.mxu0 0.0
        %1930 = vmatpush1.msra.mxu0 0.0
        %1931 = vmatprep.subr.mxu0 0.0
        %1932 = vmatpush1.msra.mxu0 0.0
        %1933 = vmatprep.subr.mxu0 0.0
        %1934 = vmatpush1.msra.mxu0 0.0
        %1935 = vmatprep.subr.mxu0 0.0
        %1936 = vmatpush1.msra.mxu0 0.0
        %1937 = vmatprep.subr.mxu0 0.0
        %1938 = vmatpush1.msra.mxu0 0.0
        %1939 = vmatprep.subr.mxu0 0.0
        %1940 = vmatpush1.msra.mxu0 0.0
        %1941 = vmatprep.subr.mxu0 0.0
        %1942 = vmatpush1.msra.mxu0 0.0
        %1943 = vmatprep.subr.mxu0 0.0
        %1944 = vmatpush1.msra.mxu0 0.0
        %1945 = vmatprep.subr.mxu0 0.0
        %1946 = vmatpush1.msra.mxu0 0.0
        %1947 = vmatprep.subr.mxu0 0.0
        %1948 = vmatpush1.msra.mxu0 0.0
        %1949 = vmatprep.subr.mxu0 0.0
        %1950 = vmatpush1.msra.mxu0 0.0
        %1951 = vmatprep.subr.mxu0 0.0
        %1952 = vmatpush1.msra.mxu0 0.0
        %1953 = vmatprep.subr.mxu0 0.0
        %1954 = vmatpush1.msra.mxu0 0.0
        %1955 = vmatprep.subr.mxu0 0.0
        %1956 = vmatpush1.msra.mxu0 0.0
        %1957 = vmatprep.subr.mxu0 0.0
        %1958 = vmatpush1.msra.mxu0 0.0
        %1959 = vmatprep.mubr.f32.mxu0 0.0
        %1960 = vmatmul.mubr.f32.gmra.mrb[0].mxu0 %v1784
        %v1961 = vpop.f32.mrb[0].mxu0
        %v1962 = vadd.f32 0.0, %v1961
        %v1963 = vpop.f32.mrb[0].mxu0
        %1964 = vmatprep.mubr.f32.mxu0 0.0
        %1965 = vmatmul.mubr.f32.gmra.mrb[0].mxu0 %v1787
        %v1966 = vpop.f32.mrb[0].mxu0
        %v1967 = vadd.f32 0.0, %v1966
        %v1968 = vpop.f32.mrb[0].mxu0
        %1969 = vmatprep.mubr.f32.mxu0 0.0
        %1970 = vmatmul.mubr.f32.gmra.mrb[0].mxu0 %v1790
        %v1971 = vpop.f32.mrb[0].mxu0
        %v1972 = vadd.f32 0.0, %v1971
        %v1973 = vpop.f32.mrb[0].mxu0
        %1974 = vmatprep.mubr.f32.mxu0 0.0
        %1975 = vmatmul.mubr.f32.gmra.mrb[0].mxu0 %v1793
        %v1976 = vpop.f32.mrb[0].mxu0
        %v1977 = vadd.f32 0.0, %v1976
        %v1978 = vpop.f32.mrb[0].mxu0
        %1979 = vmatprep.mubr.f32.mxu0 0.0
        %1980 = vmatmul.mubr.f32.gmra.mrb[0].mxu0 %v1796
        %v1981 = vpop.f32.mrb[0].mxu0
        %v1982 = vadd.f32 0.0, %v1981
        %v1983 = vpop.f32.mrb[0].mxu0
        %1984 = vmatprep.mubr.f32.mxu0 0.0
        %1985 = vmatmul.mubr.f32.gmra.mrb[0].mxu0 %v1799
        %v1986 = vpop.f32.mrb[0].mxu0
        %v1987 = vadd.f32 0.0, %v1986
        %v1988 = vpop.f32.mrb[0].mxu0
        %1989 = vmatprep.mubr.f32.mxu0 0.0
        %1990 = vmatmul.mubr.f32.gmra.mrb[0].mxu0 %v1802
        %v1991 = vpop.f32.mrb[0].mxu0
        %v1992 = vadd.f32 0.0, %v1991
        %v1993 = vpop.f32.mrb[0].mxu0
        %1994 = vmatprep.mubr.f32.mxu0 0.0
        %1995 = vmatmul.mubr.f32.gmra.mrb[0].mxu0 %v1805
        %v1996 = vpop.f32.mrb[0].mxu0
        %v1997 = vadd.f32 0.0, %v1996
        %v1998 = vpop.f32.mrb[0].mxu0
        %1999 = vmatprep.mubr.f32.mxu0 0.0
        %2000 = vmatmul.mubr.f32.gmra.mrb[0].mxu0 %v1808
        %v2001 = vpop.f32.mrb[0].mxu0
        %v2002 = vadd.f32 0.0, %v2001
        %v2003 = vpop.f32.mrb[0].mxu0
        %2004 = vmatprep.mubr.f32.mxu0 0.0
        %2005 = vmatmul.mubr.f32.gmra.mrb[0].mxu0 %v1811
        %v2006 = vpop.f32.mrb[0].mxu0
        %v2007 = vadd.f32 0.0, %v2006
        %v2008 = vpop.f32.mrb[0].mxu0
        %2009 = vmatprep.mubr.f32.mxu0 0.0
        %2010 = vmatmul.mubr.f32.gmra.mrb[0].mxu0 %v1814
        %v2011 = vpop.f32.mrb[0].mxu0
        %v2012 = vadd.f32 0.0, %v2011
        %v2013 = vpop.f32.mrb[0].mxu0
        %2014 = vmatprep.mubr.f32.mxu0 0.0
        %2015 = vmatmul.mubr.f32.gmra.mrb[0].mxu0 %v1817
        %v2016 = vpop.f32.mrb[0].mxu0
        %v2017 = vadd.f32 0.0, %v2016
        %v2018 = vpop.f32.mrb[0].mxu0
        %2019 = vmatprep.mubr.f32.mxu0 0.0
        %2020 = vmatmul.mubr.f32.gmra.mrb[0].mxu0 %v1820
        %v2021 = vpop.f32.mrb[0].mxu0
        %v2022 = vadd.f32 0.0, %v2021
        %v2023 = vpop.f32.mrb[0].mxu0
        %2024 = vmatprep.mubr.f32.mxu0 0.0
        %2025 = vmatmul.mubr.f32.gmra.mrb[0].mxu0 %v1823
        %v2026 = vpop.f32.mrb[0].mxu0
        %v2027 = vadd.f32 0.0, %v2026
        %v2028 = vpop.f32.mrb[0].mxu0
        %2029 = vmatprep.mubr.f32.mxu0 0.0
        %2030 = vmatmul.mubr.f32.gmra.mrb[0].mxu0 %v1826
        %v2031 = vpop.f32.mrb[0].mxu0
        %v2032 = vadd.f32 0.0, %v2031
        %v2033 = vpop.f32.mrb[0].mxu0
        %2034 = vmatprep.mubr.f32.mxu0 0.0
        %2035 = vmatmul.mubr.f32.gmra.mrb[0].mxu0 %v1829
        %v2036 = vpop.f32.mrb[0].mxu0
        %v2037 = vadd.f32 0.0, %v2036
        %v2038 = vpop.f32.mrb[0].mxu0
        %2039 = vmatprep.mubr.f32.mxu0 0.0
        %2040 = vmatmul.mubr.f32.gmra.mrb[0].mxu0 %v1832
        %v2041 = vpop.f32.mrb[0].mxu0
        %v2042 = vadd.f32 0.0, %v2041
        %v2043 = vpop.f32.mrb[0].mxu0
        %2044 = vmatprep.mubr.f32.mxu0 0.0
        %2045 = vmatmul.mubr.f32.gmra.mrb[0].mxu0 %v1835
        %v2046 = vpop.f32.mrb[0].mxu0
        %v2047 = vadd.f32 0.0, %v2046
        %v2048 = vpop.f32.mrb[0].mxu0
        %2049 = vmatprep.mubr.f32.mxu0 0.0
        %2050 = vmatmul.mubr.f32.gmra.mrb[0].mxu0 %v1838
        %v2051 = vpop.f32.mrb[0].mxu0
        %v2052 = vadd.f32 0.0, %v2051
        %v2053 = vpop.f32.mrb[0].mxu0
        %2054 = vmatprep.mubr.f32.mxu0 0.0
        %2055 = vmatmul.mubr.f32.gmra.mrb[0].mxu0 %v1841
        %v2056 = vpop.f32.mrb[0].mxu0
        %v2057 = vadd.f32 0.0, %v2056
        %v2058 = vpop.f32.mrb[0].mxu0
        %2059 = vmatprep.mubr.f32.mxu0 0.0
        %2060 = vmatmul.mubr.f32.gmra.mrb[0].mxu0 %v1844
        %v2061 = vpop.f32.mrb[0].mxu0
        %v2062 = vadd.f32 0.0, %v2061
        %v2063 = vpop.f32.mrb[0].mxu0
        %2064 = vmatprep.mubr.f32.mxu0 0.0
        %2065 = vmatmul.mubr.f32.gmra.mrb[0].mxu0 %v1847
        %v2066 = vpop.f32.mrb[0].mxu0
        %v2067 = vadd.f32 0.0, %v2066
        %v2068 = vpop.f32.mrb[0].mxu0
        %2069 = vmatprep.mubr.f32.mxu0 0.0
        %2070 = vmatmul.mubr.f32.gmra.mrb[0].mxu0 %v1850
        %v2071 = vpop.f32.mrb[0].mxu0
        %v2072 = vadd.f32 0.0, %v2071
        %v2073 = vpop.f32.mrb[0].mxu0
        %2074 = vmatprep.mubr.f32.mxu0 0.0
        %2075 = vmatmul.mubr.f32.gmra.mrb[0].mxu0 %v1853
        %v2076 = vpop.f32.mrb[0].mxu0
        %v2077 = vadd.f32 0.0, %v2076
        %v2078 = vpop.f32.mrb[0].mxu0
        %2079 = vmatprep.mubr.f32.mxu0 0.0
        %2080 = vmatmul.mubr.f32.gmra.mrb[0].mxu0 %v1856
        %v2081 = vpop.f32.mrb[0].mxu0
        %v2082 = vadd.f32 0.0, %v2081
        %v2083 = vpop.f32.mrb[0].mxu0
        %2084 = vmatprep.mubr.f32.mxu0 0.0
        %2085 = vmatmul.mubr.f32.gmra.mrb[0].mxu0 %v1859
        %v2086 = vpop.f32.mrb[0].mxu0
        %v2087 = vadd.f32 0.0, %v2086
        %v2088 = vpop.f32.mrb[0].mxu0
        %2089 = vmatprep.mubr.f32.mxu0 0.0
        %2090 = vmatmul.mubr.f32.gmra.mrb[0].mxu0 %v1862
        %v2091 = vpop.f32.mrb[0].mxu0
        %v2092 = vadd.f32 0.0, %v2091
        %v2093 = vpop.f32.mrb[0].mxu0
        %2094 = vmatprep.mubr.f32.mxu0 0.0
        %2095 = vmatmul.mubr.f32.gmra.mrb[0].mxu0 %v1865
        %v2096 = vpop.f32.mrb[0].mxu0
        %v2097 = vadd.f32 0.0, %v2096
        %v2098 = vpop.f32.mrb[0].mxu0
        %2099 = vmatprep.mubr.f32.mxu0 0.0
        %2100 = vmatmul.mubr.f32.gmra.mrb[0].mxu0 %v1868
        %v2101 = vpop.f32.mrb[0].mxu0
        %v2102 = vadd.f32 0.0, %v2101
        %v2103 = vpop.f32.mrb[0].mxu0
        %2104 = vmatprep.mubr.f32.mxu0 0.0
        %2105 = vmatmul.mubr.f32.gmra.mrb[0].mxu0 %v1871
        %v2106 = vpop.f32.mrb[0].mxu0
        %v2107 = vadd.f32 0.0, %v2106
        %v2108 = vpop.f32.mrb[0].mxu0
        %2109 = vmatprep.mubr.f32.mxu0 0.0
        %2110 = vmatmul.mubr.f32.gmra.mrb[0].mxu0 %v1874
        %v2111 = vpop.f32.mrb[0].mxu0
        %v2112 = vadd.f32 0.0, %v2111
        %v2113 = vpop.f32.mrb[0].mxu0
        %2114 = vmatprep.mubr.f32.mxu0 0.0
        %2115 = vmatmul.mubr.f32.gmra.mrb[0].mxu0 %v1877
        %v2116 = vpop.f32.mrb[0].mxu0
        %v2117 = vadd.f32 0.0, %v2116
        %v2118 = vpop.f32.mrb[0].mxu0
        %2119 = vmatprep.mubr.f32.mxu0 0.0
        %2120 = vmatmul.mubr.f32.gmra.mrb[0].mxu0 %v1880
        %v2121 = vpop.f32.mrb[0].mxu0
        %v2122 = vadd.f32 0.0, %v2121
        %v2123 = vpop.f32.mrb[0].mxu0
        %2124 = vmatprep.mubr.f32.mxu0 0.0
        %2125 = vmatmul.mubr.f32.gmra.mrb[0].mxu0 %v1883
        %v2126 = vpop.f32.mrb[0].mxu0
        %v2127 = vadd.f32 0.0, %v2126
        %v2128 = vpop.f32.mrb[0].mxu0
        %2129 = vmatprep.mubr.f32.mxu0 0.0
        %2130 = vmatmul.mubr.f32.gmra.mrb[0].mxu0 %v1886
        %v2131 = vpop.f32.mrb[0].mxu0
        %v2132 = vadd.f32 0.0, %v2131
        %v2133 = vpop.f32.mrb[0].mxu0
        %2134 = vmatprep.mubr.f32.mxu0 0.0
        %2135 = vmatmul.mubr.f32.gmra.mrb[0].mxu0 %v1889
        %v2136 = vpop.f32.mrb[0].mxu0
        %v2137 = vadd.f32 0.0, %v2136
        %v2138 = vpop.f32.mrb[0].mxu0
        %2139 = vdwg.mxu0
        %v2140 = vld [vmem:[%s2] sm:$0x1]
        %v2142 = vlaneseq
        %v2143 = vshrl.u32 %v2142, 7
        %v2144 = vsub.s32 0, %v2143
        %v2145 = vrot.slane %v2140, %v2144
        %v2147 = vmul.f32 %v1962, %v2145
        %v2148 = vmul.f32 %v1967, %v2145
        %v2149 = vmul.f32 %v1972, %v2145
        %v2150 = vmul.f32 %v1977, %v2145
        %v2151 = vmul.f32 %v1982, %v2145
        %v2152 = vmul.f32 %v1987, %v2145
        %v2153 = vmul.f32 %v1992, %v2145
        %v2154 = vmul.f32 %v1997, %v2145
        %v2155 = vmul.f32 %v2002, %v2145
        %v2156 = vmul.f32 %v2007, %v2145
        %v2157 = vmul.f32 %v2012, %v2145
        %v2158 = vmul.f32 %v2017, %v2145
        %v2159 = vmul.f32 %v2022, %v2145
        %v2160 = vmul.f32 %v2027, %v2145
        %v2161 = vmul.f32 %v2032, %v2145
        %v2162 = vmul.f32 %v2037, %v2145
        %v2163 = vmul.f32 %v2042, %v2145
        %v2164 = vmul.f32 %v2047, %v2145
        %v2165 = vmul.f32 %v2052, %v2145
        %v2166 = vmul.f32 %v2057, %v2145
        %v2167 = vmul.f32 %v2062, %v2145
        %v2168 = vmul.f32 %v2067, %v2145
        %v2169 = vmul.f32 %v2072, %v2145
        %v2170 = vmul.f32 %v2077, %v2145
        %v2171 = vmul.f32 %v2082, %v2145
        %v2172 = vmul.f32 %v2087, %v2145
        %v2173 = vmul.f32 %v2092, %v2145
        %v2174 = vmul.f32 %v2097, %v2145
        %v2175 = vmul.f32 %v2102, %v2145
        %v2176 = vmul.f32 %v2107, %v2145
        %v2177 = vmul.f32 %v2112, %v2145
        %v2178 = vmul.f32 %v2117, %v2145
        %v2179 = vmul.f32 %v2122, %v2145
        %v2180 = vmul.f32 %v2127, %v2145
        %v2181 = vmul.f32 %v2132, %v2145
        %v2182 = vmul.f32 %v2137, %v2145
        %v2183 = vld [vmem:[%s3] sm:$0x1]
        %v2185 = vlaneseq
        %v2186 = vshrl.u32 %v2185, 7
        %v2187 = vsub.s32 0, %v2186
        %v2188 = vrot.slane %v2183, %v2187
        %v2190 = vadd.f32 %v2147, %v2188
        %v2191 = vadd.f32 %v2148, %v2188
        %v2192 = vadd.f32 %v2149, %v2188
        %v2193 = vadd.f32 %v2150, %v2188
        %v2194 = vadd.f32 %v2151, %v2188
        %v2195 = vadd.f32 %v2152, %v2188
        %v2196 = vadd.f32 %v2153, %v2188
        %v2197 = vadd.f32 %v2154, %v2188
        %v2198 = vadd.f32 %v2155, %v2188
        %v2199 = vadd.f32 %v2156, %v2188
        %v2200 = vadd.f32 %v2157, %v2188
        %v2201 = vadd.f32 %v2158, %v2188
        %v2202 = vadd.f32 %v2159, %v2188
        %v2203 = vadd.f32 %v2160, %v2188
        %v2204 = vadd.f32 %v2161, %v2188
        %v2205 = vadd.f32 %v2162, %v2188
        %v2206 = vadd.f32 %v2163, %v2188
        %v2207 = vadd.f32 %v2164, %v2188
        %v2208 = vadd.f32 %v2165, %v2188
        %v2209 = vadd.f32 %v2166, %v2188
        %v2210 = vadd.f32 %v2167, %v2188
        %v2211 = vadd.f32 %v2168, %v2188
        %v2212 = vadd.f32 %v2169, %v2188
        %v2213 = vadd.f32 %v2170, %v2188
        %v2214 = vadd.f32 %v2171, %v2188
        %v2215 = vadd.f32 %v2172, %v2188
        %v2216 = vadd.f32 %v2173, %v2188
        %v2217 = vadd.f32 %v2174, %v2188
        %v2218 = vadd.f32 %v2175, %v2188
        %v2219 = vadd.f32 %v2176, %v2188
        %v2220 = vadd.f32 %v2177, %v2188
        %v2221 = vadd.f32 %v2178, %v2188
        %v2222 = vadd.f32 %v2179, %v2188
        %v2223 = vadd.f32 %v2180, %v2188
        %v2224 = vadd.f32 %v2181, %v2188
        %v2225 = vadd.f32 %v2182, %v2188
        %2226 = vst.msk [vmem:[#allocation2 + $0x1] sm:$0xff] %vm1518, %v2190
        %2227 = vst.msk [vmem:[#allocation2 + $0x9] sm:$0xff] %vm1518, %v2191
        %2228 = vst.msk [vmem:[#allocation2 + $0x19] sm:$0xff] %vm1518, %v2192
        %2229 = vst.msk [vmem:[#allocation2 + $0x21] sm:$0xff] %vm1518, %v2193
        %2230 = vst.msk [vmem:[#allocation2 + $0x31] sm:$0xff] %vm1518, %v2194
        %2231 = vst.msk [vmem:[#allocation2 + $0x39] sm:$0xff] %vm1518, %v2195
        %2232 = vst.msk [vmem:[#allocation2 + $0x49] sm:$0xff] %vm1518, %v2196
        %2233 = vst.msk [vmem:[#allocation2 + $0x51] sm:$0xff] %vm1518, %v2197
        %2234 = vst.msk [vmem:[#allocation2 + $0x61] sm:$0xff] %vm1518, %v2198
        %2235 = vst.msk [vmem:[#allocation2 + $0x69] sm:$0xff] %vm1518, %v2199
        %2236 = vst.msk [vmem:[#allocation2 + $0x79] sm:$0xff] %vm1518, %v2200
        %2237 = vst.msk [vmem:[#allocation2 + $0x81] sm:$0xff] %vm1518, %v2201
        %2238 = vst.msk [vmem:[#allocation2 + $0x91] sm:$0xff] %vm1518, %v2202
        %2239 = vst.msk [vmem:[#allocation2 + $0x99] sm:$0xff] %vm1518, %v2203
        %2240 = vst.msk [vmem:[#allocation2 + $0xa9] sm:$0xff] %vm1518, %v2204
        %2241 = vst.msk [vmem:[#allocation2 + $0xb1] sm:$0xff] %vm1518, %v2205
        %2242 = vst.msk [vmem:[#allocation2 + $0xc1] sm:$0xff] %vm1518, %v2206
        %2243 = vst.msk [vmem:[#allocation2 + $0xc9] sm:$0xff] %vm1518, %v2207
        %2244 = vst.msk [vmem:[#allocation2 + $0xd9] sm:$0xff] %vm1518, %v2208
        %2245 = vst.msk [vmem:[#allocation2 + $0xe1] sm:$0xff] %vm1518, %v2209
        %2246 = vst.msk [vmem:[#allocation2 + $0xf1] sm:$0xff] %vm1518, %v2210
        %2247 = vst.msk [vmem:[#allocation2 + $0xf9] sm:$0xff] %vm1518, %v2211
        %2248 = vst.msk [vmem:[#allocation2 + $0x109] sm:$0xff] %vm1518, %v2212
        %2249 = vst.msk [vmem:[#allocation2 + $0x111] sm:$0xff] %vm1518, %v2213
        %2250 = vst.msk [vmem:[#allocation2 + $0x121] sm:$0xff] %vm1518, %v2214
        %2251 = vst.msk [vmem:[#allocation2 + $0x129] sm:$0xff] %vm1518, %v2215
        %2252 = vst.msk [vmem:[#allocation2 + $0x139] sm:$0xff] %vm1518, %v2216
        %2253 = vst.msk [vmem:[#allocation2 + $0x141] sm:$0xff] %vm1518, %v2217
        %2254 = vst.msk [vmem:[#allocation2 + $0x151] sm:$0xff] %vm1518, %v2218
        %2255 = vst.msk [vmem:[#allocation2 + $0x159] sm:$0xff] %vm1518, %v2219
        %2256 = vst.msk [vmem:[#allocation2 + $0x169] sm:$0xff] %vm1518, %v2220
        %2257 = vst.msk [vmem:[#allocation2 + $0x171] sm:$0xff] %vm1518, %v2221
        %2258 = vst.msk [vmem:[#allocation2 + $0x181] sm:$0xff] %vm1518, %v2222
        %2259 = vst.msk [vmem:[#allocation2 + $0x189] sm:$0xff] %vm1518, %v2223
        %2260 = vst.msk [vmem:[#allocation2 + $0x199] sm:$0xff] %vm1518, %v2224
        %2261 = vst.msk [vmem:[#allocation2 + $0x1a1] sm:$0xff] %vm1518, %v2225
        %vm2262 = vcmask 57344
        %2263 = vst.msk [vmem:[#allocation2] sm:$0x1] %vm2262, 0.0
        %2264 = vst.msk [vmem:[#allocation2 + $0x18] sm:$0x1] %vm2262, 0.0
        %2265 = vst.msk [vmem:[#allocation2 + $0x30] sm:$0x1] %vm2262, 0.0
        %2266 = vst.msk [vmem:[#allocation2 + $0x48] sm:$0x1] %vm2262, 0.0
        %2267 = vst.msk [vmem:[#allocation2 + $0x60] sm:$0x1] %vm2262, 0.0
        %2268 = vst.msk [vmem:[#allocation2 + $0x78] sm:$0x1] %vm2262, 0.0
        %2269 = vst.msk [vmem:[#allocation2 + $0x90] sm:$0x1] %vm2262, 0.0
        %2270 = vst.msk [vmem:[#allocation2 + $0xa8] sm:$0x1] %vm2262, 0.0
        %2271 = vst.msk [vmem:[#allocation2 + $0xc0] sm:$0x1] %vm2262, 0.0
        %2272 = vst.msk [vmem:[#allocation2 + $0xd8] sm:$0x1] %vm2262, 0.0
        %2273 = vst.msk [vmem:[#allocation2 + $0xf0] sm:$0x1] %vm2262, 0.0
        %2274 = vst.msk [vmem:[#allocation2 + $0x108] sm:$0x1] %vm2262, 0.0
        %2275 = vst.msk [vmem:[#allocation2 + $0x120] sm:$0x1] %vm2262, 0.0
        %2276 = vst.msk [vmem:[#allocation2 + $0x138] sm:$0x1] %vm2262, 0.0
        %2277 = vst.msk [vmem:[#allocation2 + $0x150] sm:$0x1] %vm2262, 0.0
        %2278 = vst.msk [vmem:[#allocation2 + $0x168] sm:$0x1] %vm2262, 0.0
        %2279 = vst.msk [vmem:[#allocation2 + $0x180] sm:$0x1] %vm2262, 0.0
        %2280 = vst.msk [vmem:[#allocation2 + $0x198] sm:$0x1] %vm2262, 0.0
        %2281 = vst.msk [vmem:[#allocation2 + $0x11] sm:$0x1] %vm2262, 0.0
        %2282 = vst.msk [vmem:[#allocation2 + $0x29] sm:$0x1] %vm2262, 0.0
        %2283 = vst.msk [vmem:[#allocation2 + $0x41] sm:$0x1] %vm2262, 0.0
        %2284 = vst.msk [vmem:[#allocation2 + $0x59] sm:$0x1] %vm2262, 0.0
        %2285 = vst.msk [vmem:[#allocation2 + $0x71] sm:$0x1] %vm2262, 0.0
        %2286 = vst.msk [vmem:[#allocation2 + $0x89] sm:$0x1] %vm2262, 0.0
        %2287 = vst.msk [vmem:[#allocation2 + $0xa1] sm:$0x1] %vm2262, 0.0
        %2288 = vst.msk [vmem:[#allocation2 + $0xb9] sm:$0x1] %vm2262, 0.0
        %2289 = vst.msk [vmem:[#allocation2 + $0xd1] sm:$0x1] %vm2262, 0.0
        %2290 = vst.msk [vmem:[#allocation2 + $0xe9] sm:$0x1] %vm2262, 0.0
        %2291 = vst.msk [vmem:[#allocation2 + $0x101] sm:$0x1] %vm2262, 0.0
        %2292 = vst.msk [vmem:[#allocation2 + $0x119] sm:$0x1] %vm2262, 0.0
        %2293 = vst.msk [vmem:[#allocation2 + $0x131] sm:$0x1] %vm2262, 0.0
        %2294 = vst.msk [vmem:[#allocation2 + $0x149] sm:$0x1] %vm2262, 0.0
        %2295 = vst.msk [vmem:[#allocation2 + $0x161] sm:$0x1] %vm2262, 0.0
        %2296 = vst.msk [vmem:[#allocation2 + $0x179] sm:$0x1] %vm2262, 0.0
        %2297 = vst.msk [vmem:[#allocation2 + $0x191] sm:$0x1] %vm2262, 0.0
        %2298 = vst.msk [vmem:[#allocation2 + $0x1a9] sm:$0x1] %vm2262, 0.0
        %p2299 = scmp.eq.s32.totalorder %s26, 0
        // Predicated region
        $region49: #{tpu_custom_call.1} parent=47 // pred_check
          %p2300 = pneg %p2299
        $region50: #{tpu_custom_call.1} parent=47 // pred_check_branch
          %2302 = sbr.rel (%p2300) target = $region52
        $region51: #{tpu_custom_call.1} parent=47 // pred_region
          %2303 = vst.msk [vmem:[#allocation2] sm:$0xff] %vm1518, 0.0
          %2304 = vst.msk [vmem:[#allocation2 + $0x8] sm:$0xff] %vm1518, 0.0
          %vm2305 = vcmask 58368
          %2306 = vst.msk [vmem:[#allocation2 + $0x10] sm:$0x3] %vm2305, 0.0
          %s2307 = scalar_lea.vmem [#allocation2], 408
          %2308 = vst.msk [vmem:[%s2307] sm:$0xff] %vm1518, 0.0
          %2309 = vst.msk [vmem:[%s2307 + $0x8] sm:$0xff] %vm1518, 0.0
          %2310 = vst.msk [vmem:[%s2307 + $0x10] sm:$0x3] %vm2305, 0.0
        $region52: #{tpu_custom_call.1} parent=47 // pred_fallthru
          _
        %v2311 = vld [vmem:[#allocation2] sm:$0xff]
        %v2312 = vld [vmem:[#allocation2 + $0x8] sm:$0xff]
        %v2313 = vld [vmem:[#allocation2 + $0x10] sm:$0x3]
        %v2314 = vld [vmem:[#allocation2 + $0x18] sm:$0xff]
        %v2315 = vld [vmem:[#allocation2 + $0x20] sm:$0xff]
        %v2316 = vld [vmem:[#allocation2 + $0x28] sm:$0x3]
        %v2317 = vld [vmem:[#allocation2 + $0x30] sm:$0xff]
        %v2318 = vld [vmem:[#allocation2 + $0x38] sm:$0xff]
        %v2319 = vld [vmem:[#allocation2 + $0x40] sm:$0x3]
        %v2320 = vld [vmem:[#allocation2 + $0x48] sm:$0xff]
        %v2321 = vld [vmem:[#allocation2 + $0x50] sm:$0xff]
        %v2322 = vld [vmem:[#allocation2 + $0x58] sm:$0x3]
        %v2323 = vld [vmem:[#allocation2 + $0x60] sm:$0xff]
        %v2324 = vld [vmem:[#allocation2 + $0x68] sm:$0xff]
        %v2325 = vld [vmem:[#allocation2 + $0x70] sm:$0x3]
        %v2326 = vld [vmem:[#allocation2 + $0x78] sm:$0xff]
        %v2327 = vld [vmem:[#allocation2 + $0x80] sm:$0xff]
        %v2328 = vld [vmem:[#allocation2 + $0x88] sm:$0x3]
        %v2329 = vld [vmem:[#allocation2 + $0x90] sm:$0xff]
        %v2330 = vld [vmem:[#allocation2 + $0x98] sm:$0xff]
        %v2331 = vld [vmem:[#allocation2 + $0xa0] sm:$0x3]
        %v2332 = vld [vmem:[#allocation2 + $0xa8] sm:$0xff]
        %v2333 = vld [vmem:[#allocation2 + $0xb0] sm:$0xff]
        %v2334 = vld [vmem:[#allocation2 + $0xb8] sm:$0x3]
        %v2335 = vld [vmem:[#allocation2 + $0xc0] sm:$0xff]
        %v2336 = vld [vmem:[#allocation2 + $0xc8] sm:$0xff]
        %v2337 = vld [vmem:[#allocation2 + $0xd0] sm:$0x3]
        %v2338 = vld [vmem:[#allocation2 + $0xd8] sm:$0xff]
        %v2339 = vld [vmem:[#allocation2 + $0xe0] sm:$0xff]
        %v2340 = vld [vmem:[#allocation2 + $0xe8] sm:$0x3]
        %v2341 = vld [vmem:[#allocation2 + $0xf0] sm:$0xff]
        %v2342 = vld [vmem:[#allocation2 + $0xf8] sm:$0xff]
        %v2343 = vld [vmem:[#allocation2 + $0x100] sm:$0x3]
        %v2344 = vld [vmem:[#allocation2 + $0x108] sm:$0xff]
        %v2345 = vld [vmem:[#allocation2 + $0x110] sm:$0xff]
        %v2346 = vld [vmem:[#allocation2 + $0x118] sm:$0x3]
        %v2347 = vld [vmem:[#allocation2 + $0x120] sm:$0xff]
        %v2348 = vld [vmem:[#allocation2 + $0x128] sm:$0xff]
        %v2349 = vld [vmem:[#allocation2 + $0x130] sm:$0x3]
        %v2350 = vld [vmem:[#allocation2 + $0x138] sm:$0xff]
        %v2351 = vld [vmem:[#allocation2 + $0x140] sm:$0xff]
        %v2352 = vld [vmem:[#allocation2 + $0x148] sm:$0x3]
        %v2353 = vld [vmem:[#allocation2 + $0x150] sm:$0xff]
        %v2354 = vld [vmem:[#allocation2 + $0x158] sm:$0xff]
        %v2355 = vld [vmem:[#allocation2 + $0x160] sm:$0x3]
        %v2356 = vld [vmem:[#allocation2 + $0x168] sm:$0xff]
        %v2357 = vld [vmem:[#allocation2 + $0x170] sm:$0xff]
        %v2358 = vld [vmem:[#allocation2 + $0x178] sm:$0x3]
        %v2359 = vld [vmem:[#allocation2 + $0x180] sm:$0xff]
        %v2360 = vld [vmem:[#allocation2 + $0x188] sm:$0xff]
        %v2361 = vld [vmem:[#allocation2 + $0x190] sm:$0x3]
        %v2362 = vld [vmem:[#allocation2 + $0x198] sm:$0xff]
        %v2363 = vld [vmem:[#allocation2 + $0x1a0] sm:$0xff]
        %v2364 = vld [vmem:[#allocation2 + $0x1a8] sm:$0x3]
        %v2413 = vrot.slane %v2311, 1
        %v2414 = vrot.slane %v2312, 1
        %v2415 = vsel %vm409, %v2413, %v2414
        %v2416 = vrot.slane %v2313, 1
        %v2417 = vsel %vm409, %v2414, %v2416
        %v2418 = vrot.slane %v2314, 1
        %v2419 = vrot.slane %v2315, 1
        %v2420 = vsel %vm409, %v2418, %v2419
        %v2421 = vrot.slane %v2316, 1
        %v2422 = vsel %vm409, %v2419, %v2421
        %v2423 = vrot.slane %v2317, 1
        %v2424 = vrot.slane %v2318, 1
        %v2425 = vsel %vm409, %v2423, %v2424
        %v2426 = vrot.slane %v2319, 1
        %v2427 = vsel %vm409, %v2424, %v2426
        %v2428 = vrot.slane %v2320, 1
        %v2429 = vrot.slane %v2321, 1
        %v2430 = vsel %vm409, %v2428, %v2429
        %v2431 = vrot.slane %v2322, 1
        %v2432 = vsel %vm409, %v2429, %v2431
        %v2433 = vrot.slane %v2323, 1
        %v2434 = vrot.slane %v2324, 1
        %v2435 = vsel %vm409, %v2433, %v2434
        %v2436 = vrot.slane %v2325, 1
        %v2437 = vsel %vm409, %v2434, %v2436
        %v2438 = vrot.slane %v2326, 1
        %v2439 = vrot.slane %v2327, 1
        %v2440 = vsel %vm409, %v2438, %v2439
        %v2441 = vrot.slane %v2328, 1
        %v2442 = vsel %vm409, %v2439, %v2441
        %v2443 = vrot.slane %v2329, 1
        %v2444 = vrot.slane %v2330, 1
        %v2445 = vsel %vm409, %v2443, %v2444
        %v2446 = vrot.slane %v2331, 1
        %v2447 = vsel %vm409, %v2444, %v2446
        %v2448 = vrot.slane %v2332, 1
        %v2449 = vrot.slane %v2333, 1
        %v2450 = vsel %vm409, %v2448, %v2449
        %v2451 = vrot.slane %v2334, 1
        %v2452 = vsel %vm409, %v2449, %v2451
        %v2453 = vrot.slane %v2335, 1
        %v2454 = vrot.slane %v2336, 1
        %v2455 = vsel %vm409, %v2453, %v2454
        %v2456 = vrot.slane %v2337, 1
        %v2457 = vsel %vm409, %v2454, %v2456
        %v2458 = vrot.slane %v2338, 1
        %v2459 = vrot.slane %v2339, 1
        %v2460 = vsel %vm409, %v2458, %v2459
        %v2461 = vrot.slane %v2340, 1
        %v2462 = vsel %vm409, %v2459, %v2461
        %v2463 = vrot.slane %v2341, 1
        %v2464 = vrot.slane %v2342, 1
        %v2465 = vsel %vm409, %v2463, %v2464
        %v2466 = vrot.slane %v2343, 1
        %v2467 = vsel %vm409, %v2464, %v2466
        %v2468 = vrot.slane %v2344, 1
        %v2469 = vrot.slane %v2345, 1
        %v2470 = vsel %vm409, %v2468, %v2469
        %v2471 = vrot.slane %v2346, 1
        %v2472 = vsel %vm409, %v2469, %v2471
        %v2473 = vrot.slane %v2347, 1
        %v2474 = vrot.slane %v2348, 1
        %v2475 = vsel %vm409, %v2473, %v2474
        %v2476 = vrot.slane %v2349, 1
        %v2477 = vsel %vm409, %v2474, %v2476
        %v2478 = vrot.slane %v2350, 1
        %v2479 = vrot.slane %v2351, 1
        %v2480 = vsel %vm409, %v2478, %v2479
        %v2481 = vrot.slane %v2352, 1
        %v2482 = vsel %vm409, %v2479, %v2481
        %v2483 = vrot.slane %v2353, 1
        %v2484 = vrot.slane %v2354, 1
        %v2485 = vsel %vm409, %v2483, %v2484
        %v2486 = vrot.slane %v2355, 1
        %v2487 = vsel %vm409, %v2484, %v2486
        %v2488 = vrot.slane %v2356, 1
        %v2489 = vrot.slane %v2357, 1
        %v2490 = vsel %vm409, %v2488, %v2489
        %v2491 = vrot.slane %v2358, 1
        %v2492 = vsel %vm409, %v2489, %v2491
        %2493 = vrot.lane.b32.xlu0 %v2415, 8
        %v2494 = vpop.permute.xlu0 %2493
        %2495 = vrot.lane.b32.xlu0 %v2417, 8
        %v2496 = vpop.permute.xlu0 %2495
        %2497 = vrot.lane.b32.xlu0 %v2420, 8
        %v2498 = vpop.permute.xlu0 %2497
        %2499 = vrot.lane.b32.xlu0 %v2422, 8
        %v2500 = vpop.permute.xlu0 %2499
        %2501 = vrot.lane.b32.xlu0 %v2425, 8
        %v2502 = vpop.permute.xlu0 %2501
        %2503 = vrot.lane.b32.xlu0 %v2427, 8
        %v2504 = vpop.permute.xlu0 %2503
        %2505 = vrot.lane.b32.xlu0 %v2430, 8
        %v2506 = vpop.permute.xlu0 %2505
        %2507 = vrot.lane.b32.xlu0 %v2432, 8
        %v2508 = vpop.permute.xlu0 %2507
        %2509 = vrot.lane.b32.xlu0 %v2435, 8
        %v2510 = vpop.permute.xlu0 %2509
        %2511 = vrot.lane.b32.xlu0 %v2437, 8
        %v2512 = vpop.permute.xlu0 %2511
        %2513 = vrot.lane.b32.xlu0 %v2440, 8
        %v2514 = vpop.permute.xlu0 %2513
        %2515 = vrot.lane.b32.xlu0 %v2442, 8
        %v2516 = vpop.permute.xlu0 %2515
        %2517 = vrot.lane.b32.xlu0 %v2445, 8
        %v2518 = vpop.permute.xlu0 %2517
        %2519 = vrot.lane.b32.xlu0 %v2447, 8
        %v2520 = vpop.permute.xlu0 %2519
        %2521 = vrot.lane.b32.xlu0 %v2450, 8
        %v2522 = vpop.permute.xlu0 %2521
        %2523 = vrot.lane.b32.xlu0 %v2452, 8
        %v2524 = vpop.permute.xlu0 %2523
        %2525 = vrot.lane.b32.xlu0 %v2455, 8
        %v2526 = vpop.permute.xlu0 %2525
        %2527 = vrot.lane.b32.xlu0 %v2457, 8
        %v2528 = vpop.permute.xlu0 %2527
        %2529 = vrot.lane.b32.xlu0 %v2460, 8
        %v2530 = vpop.permute.xlu0 %2529
        %2531 = vrot.lane.b32.xlu0 %v2462, 8
        %v2532 = vpop.permute.xlu0 %2531
        %2533 = vrot.lane.b32.xlu0 %v2465, 8
        %v2534 = vpop.permute.xlu0 %2533
        %2535 = vrot.lane.b32.xlu0 %v2467, 8
        %v2536 = vpop.permute.xlu0 %2535
        %2537 = vrot.lane.b32.xlu0 %v2470, 8
        %v2538 = vpop.permute.xlu0 %2537
        %2539 = vrot.lane.b32.xlu0 %v2472, 8
        %v2540 = vpop.permute.xlu0 %2539
        %2541 = vrot.lane.b32.xlu0 %v2475, 8
        %v2542 = vpop.permute.xlu0 %2541
        %2543 = vrot.lane.b32.xlu0 %v2477, 8
        %v2544 = vpop.permute.xlu0 %2543
        %2545 = vrot.lane.b32.xlu0 %v2480, 8
        %v2546 = vpop.permute.xlu0 %2545
        %2547 = vrot.lane.b32.xlu0 %v2482, 8
        %v2548 = vpop.permute.xlu0 %2547
        %2549 = vrot.lane.b32.xlu0 %v2485, 8
        %v2550 = vpop.permute.xlu0 %2549
        %2551 = vrot.lane.b32.xlu0 %v2487, 8
        %v2552 = vpop.permute.xlu0 %2551
        %2553 = vrot.lane.b32.xlu0 %v2490, 8
        %v2554 = vpop.permute.xlu0 %2553
        %2555 = vrot.lane.b32.xlu0 %v2492, 8
        %v2556 = vpop.permute.xlu0 %2555
        %v2589 = vrot.slane %v2311, 2
        %v2590 = vrot.slane %v2312, 2
        %v2591 = vsel %vm608, %v2589, %v2590
        %v2592 = vrot.slane %v2313, 2
        %v2593 = vsel %vm608, %v2590, %v2592
        %v2594 = vrot.slane %v2314, 2
        %v2595 = vrot.slane %v2315, 2
        %v2596 = vsel %vm608, %v2594, %v2595
        %v2597 = vrot.slane %v2316, 2
        %v2598 = vsel %vm608, %v2595, %v2597
        %v2599 = vrot.slane %v2317, 2
        %v2600 = vrot.slane %v2318, 2
        %v2601 = vsel %vm608, %v2599, %v2600
        %v2602 = vrot.slane %v2319, 2
        %v2603 = vsel %vm608, %v2600, %v2602
        %v2604 = vrot.slane %v2320, 2
        %v2605 = vrot.slane %v2321, 2
        %v2606 = vsel %vm608, %v2604, %v2605
        %v2607 = vrot.slane %v2322, 2
        %v2608 = vsel %vm608, %v2605, %v2607
        %v2609 = vrot.slane %v2323, 2
        %v2610 = vrot.slane %v2324, 2
        %v2611 = vsel %vm608, %v2609, %v2610
        %v2612 = vrot.slane %v2325, 2
        %v2613 = vsel %vm608, %v2610, %v2612
        %v2614 = vrot.slane %v2326, 2
        %v2615 = vrot.slane %v2327, 2
        %v2616 = vsel %vm608, %v2614, %v2615
        %v2617 = vrot.slane %v2328, 2
        %v2618 = vsel %vm608, %v2615, %v2617
        %v2619 = vrot.slane %v2329, 2
        %v2620 = vrot.slane %v2330, 2
        %v2621 = vsel %vm608, %v2619, %v2620
        %v2622 = vrot.slane %v2331, 2
        %v2623 = vsel %vm608, %v2620, %v2622
        %v2624 = vrot.slane %v2332, 2
        %v2625 = vrot.slane %v2333, 2
        %v2626 = vsel %vm608, %v2624, %v2625
        %v2627 = vrot.slane %v2334, 2
        %v2628 = vsel %vm608, %v2625, %v2627
        %v2629 = vrot.slane %v2335, 2
        %v2630 = vrot.slane %v2336, 2
        %v2631 = vsel %vm608, %v2629, %v2630
        %v2632 = vrot.slane %v2337, 2
        %v2633 = vsel %vm608, %v2630, %v2632
        %v2634 = vrot.slane %v2338, 2
        %v2635 = vrot.slane %v2339, 2
        %v2636 = vsel %vm608, %v2634, %v2635
        %v2637 = vrot.slane %v2340, 2
        %v2638 = vsel %vm608, %v2635, %v2637
        %v2639 = vrot.slane %v2341, 2
        %v2640 = vrot.slane %v2342, 2
        %v2641 = vsel %vm608, %v2639, %v2640
        %v2642 = vrot.slane %v2343, 2
        %v2643 = vsel %vm608, %v2640, %v2642
        %v2644 = vrot.slane %v2344, 2
        %v2645 = vrot.slane %v2345, 2
        %v2646 = vsel %vm608, %v2644, %v2645
        %v2647 = vrot.slane %v2346, 2
        %v2648 = vsel %vm608, %v2645, %v2647
        %v2649 = vrot.slane %v2347, 2
        %v2650 = vrot.slane %v2348, 2
        %v2651 = vsel %vm608, %v2649, %v2650
        %v2652 = vrot.slane %v2349, 2
        %v2653 = vsel %vm608, %v2650, %v2652
        %v2654 = vrot.slane %v2350, 2
        %v2655 = vrot.slane %v2351, 2
        %v2656 = vsel %vm608, %v2654, %v2655
        %v2657 = vrot.slane %v2352, 2
        %v2658 = vsel %vm608, %v2655, %v2657
        %v2659 = vrot.slane %v2353, 2
        %v2660 = vrot.slane %v2354, 2
        %v2661 = vsel %vm608, %v2659, %v2660
        %v2662 = vrot.slane %v2355, 2
        %v2663 = vsel %vm608, %v2660, %v2662
        %v2664 = vrot.slane %v2356, 2
        %v2665 = vrot.slane %v2357, 2
        %v2666 = vsel %vm608, %v2664, %v2665
        %v2667 = vrot.slane %v2358, 2
        %v2668 = vsel %vm608, %v2665, %v2667
        %2669 = vrot.lane.b32.xlu0 %v2591, 16
        %v2670 = vpop.permute.xlu0 %2669
        %2671 = vrot.lane.b32.xlu0 %v2593, 16
        %v2672 = vpop.permute.xlu0 %2671
        %2673 = vrot.lane.b32.xlu0 %v2596, 16
        %v2674 = vpop.permute.xlu0 %2673
        %2675 = vrot.lane.b32.xlu0 %v2598, 16
        %v2676 = vpop.permute.xlu0 %2675
        %2677 = vrot.lane.b32.xlu0 %v2601, 16
        %v2678 = vpop.permute.xlu0 %2677
        %2679 = vrot.lane.b32.xlu0 %v2603, 16
        %v2680 = vpop.permute.xlu0 %2679
        %2681 = vrot.lane.b32.xlu0 %v2606, 16
        %v2682 = vpop.permute.xlu0 %2681
        %2683 = vrot.lane.b32.xlu0 %v2608, 16
        %v2684 = vpop.permute.xlu0 %2683
        %2685 = vrot.lane.b32.xlu0 %v2611, 16
        %v2686 = vpop.permute.xlu0 %2685
        %2687 = vrot.lane.b32.xlu0 %v2613, 16
        %v2688 = vpop.permute.xlu0 %2687
        %2689 = vrot.lane.b32.xlu0 %v2616, 16
        %v2690 = vpop.permute.xlu0 %2689
        %2691 = vrot.lane.b32.xlu0 %v2618, 16
        %v2692 = vpop.permute.xlu0 %2691
        %2693 = vrot.lane.b32.xlu0 %v2621, 16
        %v2694 = vpop.permute.xlu0 %2693
        %2695 = vrot.lane.b32.xlu0 %v2623, 16
        %v2696 = vpop.permute.xlu0 %2695
        %2697 = vrot.lane.b32.xlu0 %v2626, 16
        %v2698 = vpop.permute.xlu0 %2697
        %2699 = vrot.lane.b32.xlu0 %v2628, 16
        %v2700 = vpop.permute.xlu0 %2699
        %2701 = vrot.lane.b32.xlu0 %v2631, 16
        %v2702 = vpop.permute.xlu0 %2701
        %2703 = vrot.lane.b32.xlu0 %v2633, 16
        %v2704 = vpop.permute.xlu0 %2703
        %2705 = vrot.lane.b32.xlu0 %v2636, 16
        %v2706 = vpop.permute.xlu0 %2705
        %2707 = vrot.lane.b32.xlu0 %v2638, 16
        %v2708 = vpop.permute.xlu0 %2707
        %2709 = vrot.lane.b32.xlu0 %v2641, 16
        %v2710 = vpop.permute.xlu0 %2709
        %2711 = vrot.lane.b32.xlu0 %v2643, 16
        %v2712 = vpop.permute.xlu0 %2711
        %2713 = vrot.lane.b32.xlu0 %v2646, 16
        %v2714 = vpop.permute.xlu0 %2713
        %2715 = vrot.lane.b32.xlu0 %v2648, 16
        %v2716 = vpop.permute.xlu0 %2715
        %2717 = vrot.lane.b32.xlu0 %v2651, 16
        %v2718 = vpop.permute.xlu0 %2717
        %2719 = vrot.lane.b32.xlu0 %v2653, 16
        %v2720 = vpop.permute.xlu0 %2719
        %2721 = vrot.lane.b32.xlu0 %v2656, 16
        %v2722 = vpop.permute.xlu0 %2721
        %2723 = vrot.lane.b32.xlu0 %v2658, 16
        %v2724 = vpop.permute.xlu0 %2723
        %2725 = vrot.lane.b32.xlu0 %v2661, 16
        %v2726 = vpop.permute.xlu0 %2725
        %2727 = vrot.lane.b32.xlu0 %v2663, 16
        %v2728 = vpop.permute.xlu0 %2727
        %2729 = vrot.lane.b32.xlu0 %v2666, 16
        %v2730 = vpop.permute.xlu0 %2729
        %2731 = vrot.lane.b32.xlu0 %v2668, 16
        %v2732 = vpop.permute.xlu0 %2731
        %2767 = vrot.lane.b32.xlu0 %v2314, 24
        %v2768 = vpop.permute.xlu0 %2767
        %2769 = vrot.lane.b32.xlu0 %v2315, 24
        %v2770 = vpop.permute.xlu0 %2769
        %2771 = vrot.lane.b32.xlu0 %v2317, 24
        %v2772 = vpop.permute.xlu0 %2771
        %2773 = vrot.lane.b32.xlu0 %v2318, 24
        %v2774 = vpop.permute.xlu0 %2773
        %2775 = vrot.lane.b32.xlu0 %v2320, 24
        %v2776 = vpop.permute.xlu0 %2775
        %2777 = vrot.lane.b32.xlu0 %v2321, 24
        %v2778 = vpop.permute.xlu0 %2777
        %2779 = vrot.lane.b32.xlu0 %v2323, 24
        %v2780 = vpop.permute.xlu0 %2779
        %2781 = vrot.lane.b32.xlu0 %v2324, 24
        %v2782 = vpop.permute.xlu0 %2781
        %2783 = vrot.lane.b32.xlu0 %v2326, 24
        %v2784 = vpop.permute.xlu0 %2783
        %2785 = vrot.lane.b32.xlu0 %v2327, 24
        %v2786 = vpop.permute.xlu0 %2785
        %2787 = vrot.lane.b32.xlu0 %v2329, 24
        %v2788 = vpop.permute.xlu0 %2787
        %2789 = vrot.lane.b32.xlu0 %v2330, 24
        %v2790 = vpop.permute.xlu0 %2789
        %2791 = vrot.lane.b32.xlu0 %v2332, 24
        %v2792 = vpop.permute.xlu0 %2791
        %2793 = vrot.lane.b32.xlu0 %v2333, 24
        %v2794 = vpop.permute.xlu0 %2793
        %2795 = vrot.lane.b32.xlu0 %v2335, 24
        %v2796 = vpop.permute.xlu0 %2795
        %2797 = vrot.lane.b32.xlu0 %v2336, 24
        %v2798 = vpop.permute.xlu0 %2797
        %2799 = vrot.lane.b32.xlu0 %v2338, 24
        %v2800 = vpop.permute.xlu0 %2799
        %2801 = vrot.lane.b32.xlu0 %v2339, 24
        %v2802 = vpop.permute.xlu0 %2801
        %2803 = vrot.lane.b32.xlu0 %v2341, 24
        %v2804 = vpop.permute.xlu0 %2803
        %2805 = vrot.lane.b32.xlu0 %v2342, 24
        %v2806 = vpop.permute.xlu0 %2805
        %2807 = vrot.lane.b32.xlu0 %v2344, 24
        %v2808 = vpop.permute.xlu0 %2807
        %2809 = vrot.lane.b32.xlu0 %v2345, 24
        %v2810 = vpop.permute.xlu0 %2809
        %2811 = vrot.lane.b32.xlu0 %v2347, 24
        %v2812 = vpop.permute.xlu0 %2811
        %2813 = vrot.lane.b32.xlu0 %v2348, 24
        %v2814 = vpop.permute.xlu0 %2813
        %2815 = vrot.lane.b32.xlu0 %v2350, 24
        %v2816 = vpop.permute.xlu0 %2815
        %2817 = vrot.lane.b32.xlu0 %v2351, 24
        %v2818 = vpop.permute.xlu0 %2817
        %2819 = vrot.lane.b32.xlu0 %v2353, 24
        %v2820 = vpop.permute.xlu0 %2819
        %2821 = vrot.lane.b32.xlu0 %v2354, 24
        %v2822 = vpop.permute.xlu0 %2821
        %2823 = vrot.lane.b32.xlu0 %v2356, 24
        %v2824 = vpop.permute.xlu0 %2823
        %2825 = vrot.lane.b32.xlu0 %v2357, 24
        %v2826 = vpop.permute.xlu0 %2825
        %2827 = vrot.lane.b32.xlu0 %v2359, 24
        %v2828 = vpop.permute.xlu0 %2827
        %2829 = vrot.lane.b32.xlu0 %v2360, 24
        %v2830 = vpop.permute.xlu0 %2829
        %v2864 = vrot.slane %v2359, 1
        %v2865 = vrot.slane %v2360, 1
        %v2866 = vsel %vm409, %v2864, %v2865
        %v2867 = vrot.slane %v2361, 1
        %v2868 = vsel %vm409, %v2865, %v2867
        %2869 = vrot.lane.b32.xlu0 %v2420, 32
        %v2870 = vpop.permute.xlu0 %2869
        %2871 = vrot.lane.b32.xlu0 %v2422, 32
        %v2872 = vpop.permute.xlu0 %2871
        %2873 = vrot.lane.b32.xlu0 %v2425, 32
        %v2874 = vpop.permute.xlu0 %2873
        %2875 = vrot.lane.b32.xlu0 %v2427, 32
        %v2876 = vpop.permute.xlu0 %2875
        %2877 = vrot.lane.b32.xlu0 %v2430, 32
        %v2878 = vpop.permute.xlu0 %2877
        %2879 = vrot.lane.b32.xlu0 %v2432, 32
        %v2880 = vpop.permute.xlu0 %2879
        %2881 = vrot.lane.b32.xlu0 %v2435, 32
        %v2882 = vpop.permute.xlu0 %2881
        %2883 = vrot.lane.b32.xlu0 %v2437, 32
        %v2884 = vpop.permute.xlu0 %2883
        %2885 = vrot.lane.b32.xlu0 %v2440, 32
        %v2886 = vpop.permute.xlu0 %2885
        %2887 = vrot.lane.b32.xlu0 %v2442, 32
        %v2888 = vpop.permute.xlu0 %2887
        %2889 = vrot.lane.b32.xlu0 %v2445, 32
        %v2890 = vpop.permute.xlu0 %2889
        %2891 = vrot.lane.b32.xlu0 %v2447, 32
        %v2892 = vpop.permute.xlu0 %2891
        %2893 = vrot.lane.b32.xlu0 %v2450, 32
        %v2894 = vpop.permute.xlu0 %2893
        %2895 = vrot.lane.b32.xlu0 %v2452, 32
        %v2896 = vpop.permute.xlu0 %2895
        %2897 = vrot.lane.b32.xlu0 %v2455, 32
        %v2898 = vpop.permute.xlu0 %2897
        %2899 = vrot.lane.b32.xlu0 %v2457, 32
        %v2900 = vpop.permute.xlu0 %2899
        %2901 = vrot.lane.b32.xlu0 %v2460, 32
        %v2902 = vpop.permute.xlu0 %2901
        %2903 = vrot.lane.b32.xlu0 %v2462, 32
        %v2904 = vpop.permute.xlu0 %2903
        %2905 = vrot.lane.b32.xlu0 %v2465, 32
        %v2906 = vpop.permute.xlu0 %2905
        %2907 = vrot.lane.b32.xlu0 %v2467, 32
        %v2908 = vpop.permute.xlu0 %2907
        %2909 = vrot.lane.b32.xlu0 %v2470, 32
        %v2910 = vpop.permute.xlu0 %2909
        %2911 = vrot.lane.b32.xlu0 %v2472, 32
        %v2912 = vpop.permute.xlu0 %2911
        %2913 = vrot.lane.b32.xlu0 %v2475, 32
        %v2914 = vpop.permute.xlu0 %2913
        %2915 = vrot.lane.b32.xlu0 %v2477, 32
        %v2916 = vpop.permute.xlu0 %2915
        %2917 = vrot.lane.b32.xlu0 %v2480, 32
        %v2918 = vpop.permute.xlu0 %2917
        %2919 = vrot.lane.b32.xlu0 %v2482, 32
        %v2920 = vpop.permute.xlu0 %2919
        %2921 = vrot.lane.b32.xlu0 %v2485, 32
        %v2922 = vpop.permute.xlu0 %2921
        %2923 = vrot.lane.b32.xlu0 %v2487, 32
        %v2924 = vpop.permute.xlu0 %2923
        %2925 = vrot.lane.b32.xlu0 %v2490, 32
        %v2926 = vpop.permute.xlu0 %2925
        %2927 = vrot.lane.b32.xlu0 %v2492, 32
        %v2928 = vpop.permute.xlu0 %2927
        %2929 = vrot.lane.b32.xlu0 %v2866, 32
        %v2930 = vpop.permute.xlu0 %2929
        %2931 = vrot.lane.b32.xlu0 %v2868, 32
        %v2932 = vpop.permute.xlu0 %2931
        %v2965 = vrot.slane %v2359, 2
        %v2966 = vrot.slane %v2360, 2
        %v2967 = vsel %vm608, %v2965, %v2966
        %v2968 = vrot.slane %v2361, 2
        %v2969 = vsel %vm608, %v2966, %v2968
        %2970 = vrot.lane.b32.xlu0 %v2596, 40
        %v2971 = vpop.permute.xlu0 %2970
        %2972 = vrot.lane.b32.xlu0 %v2598, 40
        %v2973 = vpop.permute.xlu0 %2972
        %2974 = vrot.lane.b32.xlu0 %v2601, 40
        %v2975 = vpop.permute.xlu0 %2974
        %2976 = vrot.lane.b32.xlu0 %v2603, 40
        %v2977 = vpop.permute.xlu0 %2976
        %2978 = vrot.lane.b32.xlu0 %v2606, 40
        %v2979 = vpop.permute.xlu0 %2978
        %2980 = vrot.lane.b32.xlu0 %v2608, 40
        %v2981 = vpop.permute.xlu0 %2980
        %2982 = vrot.lane.b32.xlu0 %v2611, 40
        %v2983 = vpop.permute.xlu0 %2982
        %2984 = vrot.lane.b32.xlu0 %v2613, 40
        %v2985 = vpop.permute.xlu0 %2984
        %2986 = vrot.lane.b32.xlu0 %v2616, 40
        %v2987 = vpop.permute.xlu0 %2986
        %2988 = vrot.lane.b32.xlu0 %v2618, 40
        %v2989 = vpop.permute.xlu0 %2988
        %2990 = vrot.lane.b32.xlu0 %v2621, 40
        %v2991 = vpop.permute.xlu0 %2990
        %2992 = vrot.lane.b32.xlu0 %v2623, 40
        %v2993 = vpop.permute.xlu0 %2992
        %2994 = vrot.lane.b32.xlu0 %v2626, 40
        %v2995 = vpop.permute.xlu0 %2994
        %2996 = vrot.lane.b32.xlu0 %v2628, 40
        %v2997 = vpop.permute.xlu0 %2996
        %2998 = vrot.lane.b32.xlu0 %v2631, 40
        %v2999 = vpop.permute.xlu0 %2998
        %3000 = vrot.lane.b32.xlu0 %v2633, 40
        %v3001 = vpop.permute.xlu0 %3000
        %3002 = vrot.lane.b32.xlu0 %v2636, 40
        %v3003 = vpop.permute.xlu0 %3002
        %3004 = vrot.lane.b32.xlu0 %v2638, 40
        %v3005 = vpop.permute.xlu0 %3004
        %3006 = vrot.lane.b32.xlu0 %v2641, 40
        %v3007 = vpop.permute.xlu0 %3006
        %3008 = vrot.lane.b32.xlu0 %v2643, 40
        %v3009 = vpop.permute.xlu0 %3008
        %3010 = vrot.lane.b32.xlu0 %v2646, 40
        %v3011 = vpop.permute.xlu0 %3010
        %3012 = vrot.lane.b32.xlu0 %v2648, 40
        %v3013 = vpop.permute.xlu0 %3012
        %3014 = vrot.lane.b32.xlu0 %v2651, 40
        %v3015 = vpop.permute.xlu0 %3014
        %3016 = vrot.lane.b32.xlu0 %v2653, 40
        %v3017 = vpop.permute.xlu0 %3016
        %3018 = vrot.lane.b32.xlu0 %v2656, 40
        %v3019 = vpop.permute.xlu0 %3018
        %3020 = vrot.lane.b32.xlu0 %v2658, 40
        %v3021 = vpop.permute.xlu0 %3020
        %3022 = vrot.lane.b32.xlu0 %v2661, 40
        %v3023 = vpop.permute.xlu0 %3022
        %3024 = vrot.lane.b32.xlu0 %v2663, 40
        %v3025 = vpop.permute.xlu0 %3024
        %3026 = vrot.lane.b32.xlu0 %v2666, 40
        %v3027 = vpop.permute.xlu0 %3026
        %3028 = vrot.lane.b32.xlu0 %v2668, 40
        %v3029 = vpop.permute.xlu0 %3028
        %3030 = vrot.lane.b32.xlu0 %v2967, 40
        %v3031 = vpop.permute.xlu0 %3030
        %3032 = vrot.lane.b32.xlu0 %v2969, 40
        %v3033 = vpop.permute.xlu0 %3032
        %3068 = vrot.lane.b32.xlu0 %v2317, 48
        %v3069 = vpop.permute.xlu0 %3068
        %3070 = vrot.lane.b32.xlu0 %v2318, 48
        %v3071 = vpop.permute.xlu0 %3070
        %3072 = vrot.lane.b32.xlu0 %v2320, 48
        %v3073 = vpop.permute.xlu0 %3072
        %3074 = vrot.lane.b32.xlu0 %v2321, 48
        %v3075 = vpop.permute.xlu0 %3074
        %3076 = vrot.lane.b32.xlu0 %v2323, 48
        %v3077 = vpop.permute.xlu0 %3076
        %3078 = vrot.lane.b32.xlu0 %v2324, 48
        %v3079 = vpop.permute.xlu0 %3078
        %3080 = vrot.lane.b32.xlu0 %v2326, 48
        %v3081 = vpop.permute.xlu0 %3080
        %3082 = vrot.lane.b32.xlu0 %v2327, 48
        %v3083 = vpop.permute.xlu0 %3082
        %3084 = vrot.lane.b32.xlu0 %v2329, 48
        %v3085 = vpop.permute.xlu0 %3084
        %3086 = vrot.lane.b32.xlu0 %v2330, 48
        %v3087 = vpop.permute.xlu0 %3086
        %3088 = vrot.lane.b32.xlu0 %v2332, 48
        %v3089 = vpop.permute.xlu0 %3088
        %3090 = vrot.lane.b32.xlu0 %v2333, 48
        %v3091 = vpop.permute.xlu0 %3090
        %3092 = vrot.lane.b32.xlu0 %v2335, 48
        %v3093 = vpop.permute.xlu0 %3092
        %3094 = vrot.lane.b32.xlu0 %v2336, 48
        %v3095 = vpop.permute.xlu0 %3094
        %3096 = vrot.lane.b32.xlu0 %v2338, 48
        %v3097 = vpop.permute.xlu0 %3096
        %3098 = vrot.lane.b32.xlu0 %v2339, 48
        %v3099 = vpop.permute.xlu0 %3098
        %3100 = vrot.lane.b32.xlu0 %v2341, 48
        %v3101 = vpop.permute.xlu0 %3100
        %3102 = vrot.lane.b32.xlu0 %v2342, 48
        %v3103 = vpop.permute.xlu0 %3102
        %3104 = vrot.lane.b32.xlu0 %v2344, 48
        %v3105 = vpop.permute.xlu0 %3104
        %3106 = vrot.lane.b32.xlu0 %v2345, 48
        %v3107 = vpop.permute.xlu0 %3106
        %3108 = vrot.lane.b32.xlu0 %v2347, 48
        %v3109 = vpop.permute.xlu0 %3108
        %3110 = vrot.lane.b32.xlu0 %v2348, 48
        %v3111 = vpop.permute.xlu0 %3110
        %3112 = vrot.lane.b32.xlu0 %v2350, 48
        %v3113 = vpop.permute.xlu0 %3112
        %3114 = vrot.lane.b32.xlu0 %v2351, 48
        %v3115 = vpop.permute.xlu0 %3114
        %3116 = vrot.lane.b32.xlu0 %v2353, 48
        %v3117 = vpop.permute.xlu0 %3116
        %3118 = vrot.lane.b32.xlu0 %v2354, 48
        %v3119 = vpop.permute.xlu0 %3118
        %3120 = vrot.lane.b32.xlu0 %v2356, 48
        %v3121 = vpop.permute.xlu0 %3120
        %3122 = vrot.lane.b32.xlu0 %v2357, 48
        %v3123 = vpop.permute.xlu0 %3122
        %3124 = vrot.lane.b32.xlu0 %v2359, 48
        %v3125 = vpop.permute.xlu0 %3124
        %3126 = vrot.lane.b32.xlu0 %v2360, 48
        %v3127 = vpop.permute.xlu0 %3126
        %3128 = vrot.lane.b32.xlu0 %v2362, 48
        %v3129 = vpop.permute.xlu0 %3128
        %3130 = vrot.lane.b32.xlu0 %v2363, 48
        %v3131 = vpop.permute.xlu0 %3130
        %v3165 = vrot.slane %v2362, 1
        %v3166 = vrot.slane %v2363, 1
        %v3167 = vsel %vm409, %v3165, %v3166
        %v3168 = vrot.slane %v2364, 1
        %v3169 = vsel %vm409, %v3166, %v3168
        %3170 = vrot.lane.b32.xlu0 %v2425, 56
        %v3171 = vpop.permute.xlu0 %3170
        %3172 = vrot.lane.b32.xlu0 %v2427, 56
        %v3173 = vpop.permute.xlu0 %3172
        %3174 = vrot.lane.b32.xlu0 %v2430, 56
        %v3175 = vpop.permute.xlu0 %3174
        %3176 = vrot.lane.b32.xlu0 %v2432, 56
        %v3177 = vpop.permute.xlu0 %3176
        %3178 = vrot.lane.b32.xlu0 %v2435, 56
        %v3179 = vpop.permute.xlu0 %3178
        %3180 = vrot.lane.b32.xlu0 %v2437, 56
        %v3181 = vpop.permute.xlu0 %3180
        %3182 = vrot.lane.b32.xlu0 %v2440, 56
        %v3183 = vpop.permute.xlu0 %3182
        %3184 = vrot.lane.b32.xlu0 %v2442, 56
        %v3185 = vpop.permute.xlu0 %3184
        %3186 = vrot.lane.b32.xlu0 %v2445, 56
        %v3187 = vpop.permute.xlu0 %3186
        %3188 = vrot.lane.b32.xlu0 %v2447, 56
        %v3189 = vpop.permute.xlu0 %3188
        %3190 = vrot.lane.b32.xlu0 %v2450, 56
        %v3191 = vpop.permute.xlu0 %3190
        %3192 = vrot.lane.b32.xlu0 %v2452, 56
        %v3193 = vpop.permute.xlu0 %3192
        %3194 = vrot.lane.b32.xlu0 %v2455, 56
        %v3195 = vpop.permute.xlu0 %3194
        %3196 = vrot.lane.b32.xlu0 %v2457, 56
        %v3197 = vpop.permute.xlu0 %3196
        %3198 = vrot.lane.b32.xlu0 %v2460, 56
        %v3199 = vpop.permute.xlu0 %3198
        %3200 = vrot.lane.b32.xlu0 %v2462, 56
        %v3201 = vpop.permute.xlu0 %3200
        %3202 = vrot.lane.b32.xlu0 %v2465, 56
        %v3203 = vpop.permute.xlu0 %3202
        %3204 = vrot.lane.b32.xlu0 %v2467, 56
        %v3205 = vpop.permute.xlu0 %3204
        %3206 = vrot.lane.b32.xlu0 %v2470, 56
        %v3207 = vpop.permute.xlu0 %3206
        %3208 = vrot.lane.b32.xlu0 %v2472, 56
        %v3209 = vpop.permute.xlu0 %3208
        %3210 = vrot.lane.b32.xlu0 %v2475, 56
        %v3211 = vpop.permute.xlu0 %3210
        %3212 = vrot.lane.b32.xlu0 %v2477, 56
        %v3213 = vpop.permute.xlu0 %3212
        %3214 = vrot.lane.b32.xlu0 %v2480, 56
        %v3215 = vpop.permute.xlu0 %3214
        %3216 = vrot.lane.b32.xlu0 %v2482, 56
        %v3217 = vpop.permute.xlu0 %3216
        %3218 = vrot.lane.b32.xlu0 %v2485, 56
        %v3219 = vpop.permute.xlu0 %3218
        %3220 = vrot.lane.b32.xlu0 %v2487, 56
        %v3221 = vpop.permute.xlu0 %3220
        %3222 = vrot.lane.b32.xlu0 %v2490, 56
        %v3223 = vpop.permute.xlu0 %3222
        %3224 = vrot.lane.b32.xlu0 %v2492, 56
        %v3225 = vpop.permute.xlu0 %3224
        %3226 = vrot.lane.b32.xlu0 %v2866, 56
        %v3227 = vpop.permute.xlu0 %3226
        %3228 = vrot.lane.b32.xlu0 %v2868, 56
        %v3229 = vpop.permute.xlu0 %3228
        %3230 = vrot.lane.b32.xlu0 %v3167, 56
        %v3231 = vpop.permute.xlu0 %3230
        %3232 = vrot.lane.b32.xlu0 %v3169, 56
        %v3233 = vpop.permute.xlu0 %3232
        %v3266 = vrot.slane %v2362, 2
        %v3267 = vrot.slane %v2363, 2
        %v3268 = vsel %vm608, %v3266, %v3267
        %v3269 = vrot.slane %v2364, 2
        %v3270 = vsel %vm608, %v3267, %v3269
        %3271 = vrot.lane.b32.xlu0 %v2601, 64
        %v3272 = vpop.permute.xlu0 %3271
        %3273 = vrot.lane.b32.xlu0 %v2603, 64
        %v3274 = vpop.permute.xlu0 %3273
        %3275 = vrot.lane.b32.xlu0 %v2606, 64
        %v3276 = vpop.permute.xlu0 %3275
        %3277 = vrot.lane.b32.xlu0 %v2608, 64
        %v3278 = vpop.permute.xlu0 %3277
        %3279 = vrot.lane.b32.xlu0 %v2611, 64
        %v3280 = vpop.permute.xlu0 %3279
        %3281 = vrot.lane.b32.xlu0 %v2613, 64
        %v3282 = vpop.permute.xlu0 %3281
        %3283 = vrot.lane.b32.xlu0 %v2616, 64
        %v3284 = vpop.permute.xlu0 %3283
        %3285 = vrot.lane.b32.xlu0 %v2618, 64
        %v3286 = vpop.permute.xlu0 %3285
        %3287 = vrot.lane.b32.xlu0 %v2621, 64
        %v3288 = vpop.permute.xlu0 %3287
        %3289 = vrot.lane.b32.xlu0 %v2623, 64
        %v3290 = vpop.permute.xlu0 %3289
        %3291 = vrot.lane.b32.xlu0 %v2626, 64
        %v3292 = vpop.permute.xlu0 %3291
        %3293 = vrot.lane.b32.xlu0 %v2628, 64
        %v3294 = vpop.permute.xlu0 %3293
        %3295 = vrot.lane.b32.xlu0 %v2631, 64
        %v3296 = vpop.permute.xlu0 %3295
        %3297 = vrot.lane.b32.xlu0 %v2633, 64
        %v3298 = vpop.permute.xlu0 %3297
        %3299 = vrot.lane.b32.xlu0 %v2636, 64
        %v3300 = vpop.permute.xlu0 %3299
        %3301 = vrot.lane.b32.xlu0 %v2638, 64
        %v3302 = vpop.permute.xlu0 %3301
        %3303 = vrot.lane.b32.xlu0 %v2641, 64
        %v3304 = vpop.permute.xlu0 %3303
        %3305 = vrot.lane.b32.xlu0 %v2643, 64
        %v3306 = vpop.permute.xlu0 %3305
        %3307 = vrot.lane.b32.xlu0 %v2646, 64
        %v3308 = vpop.permute.xlu0 %3307
        %3309 = vrot.lane.b32.xlu0 %v2648, 64
        %v3310 = vpop.permute.xlu0 %3309
        %3311 = vrot.lane.b32.xlu0 %v2651, 64
        %v3312 = vpop.permute.xlu0 %3311
        %3313 = vrot.lane.b32.xlu0 %v2653, 64
        %v3314 = vpop.permute.xlu0 %3313
        %3315 = vrot.lane.b32.xlu0 %v2656, 64
        %v3316 = vpop.permute.xlu0 %3315
        %3317 = vrot.lane.b32.xlu0 %v2658, 64
        %v3318 = vpop.permute.xlu0 %3317
        %3319 = vrot.lane.b32.xlu0 %v2661, 64
        %v3320 = vpop.permute.xlu0 %3319
        %3321 = vrot.lane.b32.xlu0 %v2663, 64
        %v3322 = vpop.permute.xlu0 %3321
        %3323 = vrot.lane.b32.xlu0 %v2666, 64
        %v3324 = vpop.permute.xlu0 %3323
        %3325 = vrot.lane.b32.xlu0 %v2668, 64
        %v3326 = vpop.permute.xlu0 %3325
        %3327 = vrot.lane.b32.xlu0 %v2967, 64
        %v3328 = vpop.permute.xlu0 %3327
        %3329 = vrot.lane.b32.xlu0 %v2969, 64
        %v3330 = vpop.permute.xlu0 %3329
        %3331 = vrot.lane.b32.xlu0 %v3268, 64
        %v3332 = vpop.permute.xlu0 %3331
        %3333 = vrot.lane.b32.xlu0 %v3270, 64
        %v3334 = vpop.permute.xlu0 %3333
        %v3367 = vsel %vm1518, %v2311, %v2494
        %v3368 = vsel %vm1518, %v2312, %v2496
        %v3369 = vsel %vm1518, %v2314, %v2498
        %v3370 = vsel %vm1518, %v2315, %v2500
        %v3371 = vsel %vm1518, %v2317, %v2502
        %v3372 = vsel %vm1518, %v2318, %v2504
        %v3373 = vsel %vm1518, %v2320, %v2506
        %v3374 = vsel %vm1518, %v2321, %v2508
        %v3375 = vsel %vm1518, %v2323, %v2510
        %v3376 = vsel %vm1518, %v2324, %v2512
        %v3377 = vsel %vm1518, %v2326, %v2514
        %v3378 = vsel %vm1518, %v2327, %v2516
        %v3379 = vsel %vm1518, %v2329, %v2518
        %v3380 = vsel %vm1518, %v2330, %v2520
        %v3381 = vsel %vm1518, %v2332, %v2522
        %v3382 = vsel %vm1518, %v2333, %v2524
        %v3383 = vsel %vm1518, %v2335, %v2526
        %v3384 = vsel %vm1518, %v2336, %v2528
        %v3385 = vsel %vm1518, %v2338, %v2530
        %v3386 = vsel %vm1518, %v2339, %v2532
        %v3387 = vsel %vm1518, %v2341, %v2534
        %v3388 = vsel %vm1518, %v2342, %v2536
        %v3389 = vsel %vm1518, %v2344, %v2538
        %v3390 = vsel %vm1518, %v2345, %v2540
        %v3391 = vsel %vm1518, %v2347, %v2542
        %v3392 = vsel %vm1518, %v2348, %v2544
        %v3393 = vsel %vm1518, %v2350, %v2546
        %v3394 = vsel %vm1518, %v2351, %v2548
        %v3395 = vsel %vm1518, %v2353, %v2550
        %v3396 = vsel %vm1518, %v2354, %v2552
        %v3397 = vsel %vm1518, %v2356, %v2554
        %v3398 = vsel %vm1518, %v2357, %v2556
        %v3399 = vsel %vm1592, %v3367, %v2670
        %v3400 = vsel %vm1592, %v3368, %v2672
        %v3401 = vsel %vm1592, %v3369, %v2674
        %v3402 = vsel %vm1592, %v3370, %v2676
        %v3403 = vsel %vm1592, %v3371, %v2678
        %v3404 = vsel %vm1592, %v3372, %v2680
        %v3405 = vsel %vm1592, %v3373, %v2682
        %v3406 = vsel %vm1592, %v3374, %v2684
        %v3407 = vsel %vm1592, %v3375, %v2686
        %v3408 = vsel %vm1592, %v3376, %v2688
        %v3409 = vsel %vm1592, %v3377, %v2690
        %v3410 = vsel %vm1592, %v3378, %v2692
        %v3411 = vsel %vm1592, %v3379, %v2694
        %v3412 = vsel %vm1592, %v3380, %v2696
        %v3413 = vsel %vm1592, %v3381, %v2698
        %v3414 = vsel %vm1592, %v3382, %v2700
        %v3415 = vsel %vm1592, %v3383, %v2702
        %v3416 = vsel %vm1592, %v3384, %v2704
        %v3417 = vsel %vm1592, %v3385, %v2706
        %v3418 = vsel %vm1592, %v3386, %v2708
        %v3419 = vsel %vm1592, %v3387, %v2710
        %v3420 = vsel %vm1592, %v3388, %v2712
        %v3421 = vsel %vm1592, %v3389, %v2714
        %v3422 = vsel %vm1592, %v3390, %v2716
        %v3423 = vsel %vm1592, %v3391, %v2718
        %v3424 = vsel %vm1592, %v3392, %v2720
        %v3425 = vsel %vm1592, %v3393, %v2722
        %v3426 = vsel %vm1592, %v3394, %v2724
        %v3427 = vsel %vm1592, %v3395, %v2726
        %v3428 = vsel %vm1592, %v3396, %v2728
        %v3429 = vsel %vm1592, %v3397, %v2730
        %v3430 = vsel %vm1592, %v3398, %v2732
        %v3431 = vsel %vm1666, %v3399, %v2768
        %v3432 = vsel %vm1666, %v3400, %v2770
        %v3433 = vsel %vm1666, %v3401, %v2772
        %v3434 = vsel %vm1666, %v3402, %v2774
        %v3435 = vsel %vm1666, %v3403, %v2776
        %v3436 = vsel %vm1666, %v3404, %v2778
        %v3437 = vsel %vm1666, %v3405, %v2780
        %v3438 = vsel %vm1666, %v3406, %v2782
        %v3439 = vsel %vm1666, %v3407, %v2784
        %v3440 = vsel %vm1666, %v3408, %v2786
        %v3441 = vsel %vm1666, %v3409, %v2788
        %v3442 = vsel %vm1666, %v3410, %v2790
        %v3443 = vsel %vm1666, %v3411, %v2792
        %v3444 = vsel %vm1666, %v3412, %v2794
        %v3445 = vsel %vm1666, %v3413, %v2796
        %v3446 = vsel %vm1666, %v3414, %v2798
        %v3447 = vsel %vm1666, %v3415, %v2800
        %v3448 = vsel %vm1666, %v3416, %v2802
        %v3449 = vsel %vm1666, %v3417, %v2804
        %v3450 = vsel %vm1666, %v3418, %v2806
        %v3451 = vsel %vm1666, %v3419, %v2808
        %v3452 = vsel %vm1666, %v3420, %v2810
        %v3453 = vsel %vm1666, %v3421, %v2812
        %v3454 = vsel %vm1666, %v3422, %v2814
        %v3455 = vsel %vm1666, %v3423, %v2816
        %v3456 = vsel %vm1666, %v3424, %v2818
        %v3457 = vsel %vm1666, %v3425, %v2820
        %v3458 = vsel %vm1666, %v3426, %v2822
        %v3459 = vsel %vm1666, %v3427, %v2824
        %v3460 = vsel %vm1666, %v3428, %v2826
        %v3461 = vsel %vm1666, %v3429, %v2828
        %v3462 = vsel %vm1666, %v3430, %v2830
        %v3463 = vsel %vm1740, %v3431, %v2870
        %v3464 = vsel %vm1740, %v3432, %v2872
        %v3465 = vsel %vm1740, %v3433, %v2874
        %v3466 = vsel %vm1740, %v3434, %v2876
        %v3467 = vsel %vm1740, %v3435, %v2878
        %v3468 = vsel %vm1740, %v3436, %v2880
        %v3469 = vsel %vm1740, %v3437, %v2882
        %v3470 = vsel %vm1740, %v3438, %v2884
        %v3471 = vsel %vm1740, %v3439, %v2886
        %v3472 = vsel %vm1740, %v3440, %v2888
        %v3473 = vsel %vm1740, %v3441, %v2890
        %v3474 = vsel %vm1740, %v3442, %v2892
        %v3475 = vsel %vm1740, %v3443, %v2894
        %v3476 = vsel %vm1740, %v3444, %v2896
        %v3477 = vsel %vm1740, %v3445, %v2898
        %v3478 = vsel %vm1740, %v3446, %v2900
        %v3479 = vsel %vm1740, %v3447, %v2902
        %v3480 = vsel %vm1740, %v3448, %v2904
        %v3481 = vsel %vm1740, %v3449, %v2906
        %v3482 = vsel %vm1740, %v3450, %v2908
        %v3483 = vsel %vm1740, %v3451, %v2910
        %v3484 = vsel %vm1740, %v3452, %v2912
        %v3485 = vsel %vm1740, %v3453, %v2914
        %v3486 = vsel %vm1740, %v3454, %v2916
        %v3487 = vsel %vm1740, %v3455, %v2918
        %v3488 = vsel %vm1740, %v3456, %v2920
        %v3489 = vsel %vm1740, %v3457, %v2922
        %v3490 = vsel %vm1740, %v3458, %v2924
        %v3491 = vsel %vm1740, %v3459, %v2926
        %v3492 = vsel %vm1740, %v3460, %v2928
        %v3493 = vsel %vm1740, %v3461, %v2930
        %v3494 = vsel %vm1740, %v3462, %v2932
        %vm3495 = vcmask 326656
        %v3496 = vsel %vm3495, %v3463, %v2971
        %v3497 = vsel %vm3495, %v3464, %v2973
        %v3498 = vsel %vm3495, %v3465, %v2975
        %v3499 = vsel %vm3495, %v3466, %v2977
        %v3500 = vsel %vm3495, %v3467, %v2979
        %v3501 = vsel %vm3495, %v3468, %v2981
        %v3502 = vsel %vm3495, %v3469, %v2983
        %v3503 = vsel %vm3495, %v3470, %v2985
        %v3504 = vsel %vm3495, %v3471, %v2987
        %v3505 = vsel %vm3495, %v3472, %v2989
        %v3506 = vsel %vm3495, %v3473, %v2991
        %v3507 = vsel %vm3495, %v3474, %v2993
        %v3508 = vsel %vm3495, %v3475, %v2995
        %v3509 = vsel %vm3495, %v3476, %v2997
        %v3510 = vsel %vm3495, %v3477, %v2999
        %v3511 = vsel %vm3495, %v3478, %v3001
        %v3512 = vsel %vm3495, %v3479, %v3003
        %v3513 = vsel %vm3495, %v3480, %v3005
        %v3514 = vsel %vm3495, %v3481, %v3007
        %v3515 = vsel %vm3495, %v3482, %v3009
        %v3516 = vsel %vm3495, %v3483, %v3011
        %v3517 = vsel %vm3495, %v3484, %v3013
        %v3518 = vsel %vm3495, %v3485, %v3015
        %v3519 = vsel %vm3495, %v3486, %v3017
        %v3520 = vsel %vm3495, %v3487, %v3019
        %v3521 = vsel %vm3495, %v3488, %v3021
        %v3522 = vsel %vm3495, %v3489, %v3023
        %v3523 = vsel %vm3495, %v3490, %v3025
        %v3524 = vsel %vm3495, %v3491, %v3027
        %v3525 = vsel %vm3495, %v3492, %v3029
        %v3526 = vsel %vm3495, %v3493, %v3031
        %v3527 = vsel %vm3495, %v3494, %v3033
        %vm3528 = vcmask 392192
        %v3529 = vsel %vm3528, %v3496, %v3069
        %v3530 = vsel %vm3528, %v3497, %v3071
        %v3531 = vsel %vm3528, %v3498, %v3073
        %v3532 = vsel %vm3528, %v3499, %v3075
        %v3533 = vsel %vm3528, %v3500, %v3077
        %v3534 = vsel %vm3528, %v3501, %v3079
        %v3535 = vsel %vm3528, %v3502, %v3081
        %v3536 = vsel %vm3528, %v3503, %v3083
        %v3537 = vsel %vm3528, %v3504, %v3085
        %v3538 = vsel %vm3528, %v3505, %v3087
        %v3539 = vsel %vm3528, %v3506, %v3089
        %v3540 = vsel %vm3528, %v3507, %v3091
        %v3541 = vsel %vm3528, %v3508, %v3093
        %v3542 = vsel %vm3528, %v3509, %v3095
        %v3543 = vsel %vm3528, %v3510, %v3097
        %v3544 = vsel %vm3528, %v3511, %v3099
        %v3545 = vsel %vm3528, %v3512, %v3101
        %v3546 = vsel %vm3528, %v3513, %v3103
        %v3547 = vsel %vm3528, %v3514, %v3105
        %v3548 = vsel %vm3528, %v3515, %v3107
        %v3549 = vsel %vm3528, %v3516, %v3109
        %v3550 = vsel %vm3528, %v3517, %v3111
        %v3551 = vsel %vm3528, %v3518, %v3113
        %v3552 = vsel %vm3528, %v3519, %v3115
        %v3553 = vsel %vm3528, %v3520, %v3117
        %v3554 = vsel %vm3528, %v3521, %v3119
        %v3555 = vsel %vm3528, %v3522, %v3121
        %v3556 = vsel %vm3528, %v3523, %v3123
        %v3557 = vsel %vm3528, %v3524, %v3125
        %v3558 = vsel %vm3528, %v3525, %v3127
        %v3559 = vsel %vm3528, %v3526, %v3129
        %v3560 = vsel %vm3528, %v3527, %v3131
        %vm3561 = vcmask 457728
        %v3562 = vsel %vm3561, %v3529, %v3171
        %v3563 = vsel %vm3561, %v3530, %v3173
        %v3564 = vsel %vm3561, %v3531, %v3175
        %v3565 = vsel %vm3561, %v3532, %v3177
        %v3566 = vsel %vm3561, %v3533, %v3179
        %v3567 = vsel %vm3561, %v3534, %v3181
        %v3568 = vsel %vm3561, %v3535, %v3183
        %v3569 = vsel %vm3561, %v3536, %v3185
        %v3570 = vsel %vm3561, %v3537, %v3187
        %v3571 = vsel %vm3561, %v3538, %v3189
        %v3572 = vsel %vm3561, %v3539, %v3191
        %v3573 = vsel %vm3561, %v3540, %v3193
        %v3574 = vsel %vm3561, %v3541, %v3195
        %v3575 = vsel %vm3561, %v3542, %v3197
        %v3576 = vsel %vm3561, %v3543, %v3199
        %v3577 = vsel %vm3561, %v3544, %v3201
        %v3578 = vsel %vm3561, %v3545, %v3203
        %v3579 = vsel %vm3561, %v3546, %v3205
        %v3580 = vsel %vm3561, %v3547, %v3207
        %v3581 = vsel %vm3561, %v3548, %v3209
        %v3582 = vsel %vm3561, %v3549, %v3211
        %v3583 = vsel %vm3561, %v3550, %v3213
        %v3584 = vsel %vm3561, %v3551, %v3215
        %v3585 = vsel %vm3561, %v3552, %v3217
        %v3586 = vsel %vm3561, %v3553, %v3219
        %v3587 = vsel %vm3561, %v3554, %v3221
        %v3588 = vsel %vm3561, %v3555, %v3223
        %v3589 = vsel %vm3561, %v3556, %v3225
        %v3590 = vsel %vm3561, %v3557, %v3227
        %v3591 = vsel %vm3561, %v3558, %v3229
        %v3592 = vsel %vm3561, %v3559, %v3231
        %v3593 = vsel %vm3561, %v3560, %v3233
        %vm3594 = vcmask 523264
        %v3595 = vsel %vm3594, %v3562, %v3272
        %v3596 = vsel %vm3594, %v3563, %v3274
        %v3597 = vsel %vm3594, %v3564, %v3276
        %v3598 = vsel %vm3594, %v3565, %v3278
        %v3599 = vsel %vm3594, %v3566, %v3280
        %v3600 = vsel %vm3594, %v3567, %v3282
        %v3601 = vsel %vm3594, %v3568, %v3284
        %v3602 = vsel %vm3594, %v3569, %v3286
        %v3603 = vsel %vm3594, %v3570, %v3288
        %v3604 = vsel %vm3594, %v3571, %v3290
        %v3605 = vsel %vm3594, %v3572, %v3292
        %v3606 = vsel %vm3594, %v3573, %v3294
        %v3607 = vsel %vm3594, %v3574, %v3296
        %v3608 = vsel %vm3594, %v3575, %v3298
        %v3609 = vsel %vm3594, %v3576, %v3300
        %v3610 = vsel %vm3594, %v3577, %v3302
        %v3611 = vsel %vm3594, %v3578, %v3304
        %v3612 = vsel %vm3594, %v3579, %v3306
        %v3613 = vsel %vm3594, %v3580, %v3308
        %v3614 = vsel %vm3594, %v3581, %v3310
        %v3615 = vsel %vm3594, %v3582, %v3312
        %v3616 = vsel %vm3594, %v3583, %v3314
        %v3617 = vsel %vm3594, %v3584, %v3316
        %v3618 = vsel %vm3594, %v3585, %v3318
        %v3619 = vsel %vm3594, %v3586, %v3320
        %v3620 = vsel %vm3594, %v3587, %v3322
        %v3621 = vsel %vm3594, %v3588, %v3324
        %v3622 = vsel %vm3594, %v3589, %v3326
        %v3623 = vsel %vm3594, %v3590, %v3328
        %v3624 = vsel %vm3594, %v3591, %v3330
        %v3625 = vsel %vm3594, %v3592, %v3332
        %v3626 = vsel %vm3594, %v3593, %v3334
        %v3627 = vld [vmem:[%s4] sm:$0xff]
        %v3628 = vld [vmem:[%s4 + $0x8] sm:$0xff]
        %v3629 = vld [vmem:[%s4 + $0x10] sm:$0xff]
        %v3630 = vld [vmem:[%s4 + $0x18] sm:$0xff]
        %v3631 = vld [vmem:[%s4 + $0x20] sm:$0xff]
        %v3632 = vld [vmem:[%s4 + $0x28] sm:$0xff]
        %v3633 = vld [vmem:[%s4 + $0x30] sm:$0xff]
        %v3634 = vld [vmem:[%s4 + $0x38] sm:$0xff]
        %v3635 = vld [vmem:[%s4 + $0x40] sm:$0xff]
        %v3636 = vld [vmem:[%s4 + $0x48] sm:$0xff]
        %v3637 = vld [vmem:[%s4 + $0x50] sm:$0xff]
        %v3638 = vld [vmem:[%s4 + $0x58] sm:$0xff]
        %v3639 = vld [vmem:[%s4 + $0x60] sm:$0xff]
        %v3640 = vld [vmem:[%s4 + $0x68] sm:$0xff]
        %v3641 = vld [vmem:[%s4 + $0x70] sm:$0xff]
        %v3642 = vld [vmem:[%s4 + $0x78] sm:$0xff]
        %v3643 = vld [vmem:[%s4 + $0x80] sm:$0xff]
        %v3644 = vld [vmem:[%s4 + $0x88] sm:$0xff]
        %vm3645 = vcmask 588800
        %v3647 = vsel %vm3645, %v3595, 0
        %v3650 = vsel %vm3645, %v3596, 0
        %v3653 = vsel %vm3645, %v3597, 0
        %v3656 = vsel %vm3645, %v3598, 0
        %v3659 = vsel %vm3645, %v3599, 0
        %v3662 = vsel %vm3645, %v3600, 0
        %v3665 = vsel %vm3645, %v3601, 0
        %v3668 = vsel %vm3645, %v3602, 0
        %v3671 = vsel %vm3645, %v3603, 0
        %v3674 = vsel %vm3645, %v3604, 0
        %v3677 = vsel %vm3645, %v3605, 0
        %v3680 = vsel %vm3645, %v3606, 0
        %v3683 = vsel %vm3645, %v3607, 0
        %v3686 = vsel %vm3645, %v3608, 0
        %v3689 = vsel %vm3645, %v3609, 0
        %v3692 = vsel %vm3645, %v3610, 0
        %v3695 = vsel %vm3645, %v3611, 0
        %v3698 = vsel %vm3645, %v3612, 0
        %v3701 = vsel %vm3645, %v3613, 0
        %v3704 = vsel %vm3645, %v3614, 0
        %v3707 = vsel %vm3645, %v3615, 0
        %v3710 = vsel %vm3645, %v3616, 0
        %v3713 = vsel %vm3645, %v3617, 0
        %v3716 = vsel %vm3645, %v3618, 0
        %v3719 = vsel %vm3645, %v3619, 0
        %v3722 = vsel %vm3645, %v3620, 0
        %v3725 = vsel %vm3645, %v3621, 0
        %v3728 = vsel %vm3645, %v3622, 0
        %v3731 = vsel %vm3645, %v3623, 0
        %v3734 = vsel %vm3645, %v3624, 0
        %v3737 = vsel %vm3645, %v3625, 0
        %v3740 = vsel %vm3645, %v3626, 0
        %3742 = vmatprep.subr.mxu0 %v3628
        %3743 = vmatpush1.msra.mxu0 %v3627
        %3744 = vmatprep.subr.mxu0 %v3630
        %3745 = vmatpush1.msra.mxu0 %v3629
        %3746 = vmatprep.subr.mxu0 %v3632
        %3747 = vmatpush1.msra.mxu0 %v3631
        %3748 = vmatprep.subr.mxu0 %v3634
        %3749 = vmatpush1.msra.mxu0 %v3633
        %3750 = vmatprep.subr.mxu0 %v3636
        %3751 = vmatpush1.msra.mxu0 %v3635
        %3752 = vmatprep.subr.mxu0 %v3638
        %3753 = vmatpush1.msra.mxu0 %v3637
        %3754 = vmatprep.subr.mxu0 %v3640
        %3755 = vmatpush1.msra.mxu0 %v3639
        %3756 = vmatprep.subr.mxu0 %v3642
        %3757 = vmatpush1.msra.mxu0 %v3641
        %3758 = vmatprep.subr.mxu0 %v3644
        %3759 = vmatpush1.msra.mxu0 %v3643
        %3760 = vmatprep.subr.mxu0 0.0
        %3761 = vmatpush1.msra.mxu0 0.0
        %3762 = vmatprep.subr.mxu0 0.0
        %3763 = vmatpush1.msra.mxu0 0.0
        %3764 = vmatprep.subr.mxu0 0.0
        %3765 = vmatpush1.msra.mxu0 0.0
        %3766 = vmatprep.subr.mxu0 0.0
        %3767 = vmatpush1.msra.mxu0 0.0
        %3768 = vmatprep.subr.mxu0 0.0
        %3769 = vmatpush1.msra.mxu0 0.0
        %3770 = vmatprep.subr.mxu0 0.0
        %3771 = vmatpush1.msra.mxu0 0.0
        %3772 = vmatprep.subr.mxu0 0.0
        %3773 = vmatpush1.msra.mxu0 0.0
        %3774 = vmatprep.subr.mxu0 0.0
        %3775 = vmatpush1.msra.mxu0 0.0
        %3776 = vmatprep.subr.mxu0 0.0
        %3777 = vmatpush1.msra.mxu0 0.0
        %3778 = vmatprep.subr.mxu0 0.0
        %3779 = vmatpush1.msra.mxu0 0.0
        %3780 = vmatprep.subr.mxu0 0.0
        %3781 = vmatpush1.msra.mxu0 0.0
        %3782 = vmatprep.subr.mxu0 0.0
        %3783 = vmatpush1.msra.mxu0 0.0
        %3784 = vmatprep.subr.mxu0 0.0
        %3785 = vmatpush1.msra.mxu0 0.0
        %3786 = vmatprep.subr.mxu0 0.0
        %3787 = vmatpush1.msra.mxu0 0.0
        %3788 = vmatprep.subr.mxu0 0.0
        %3789 = vmatpush1.msra.mxu0 0.0
        %3790 = vmatprep.subr.mxu0 0.0
        %3791 = vmatpush1.msra.mxu0 0.0
        %3792 = vmatprep.subr.mxu0 0.0
        %3793 = vmatpush1.msra.mxu0 0.0
        %3794 = vmatprep.subr.mxu0 0.0
        %3795 = vmatpush1.msra.mxu0 0.0
        %3796 = vmatprep.subr.mxu0 0.0
        %3797 = vmatpush1.msra.mxu0 0.0
        %3798 = vmatprep.subr.mxu0 0.0
        %3799 = vmatpush1.msra.mxu0 0.0
        %3800 = vmatprep.subr.mxu0 0.0
        %3801 = vmatpush1.msra.mxu0 0.0
        %3802 = vmatprep.subr.mxu0 0.0
        %3803 = vmatpush1.msra.mxu0 0.0
        %3804 = vmatprep.subr.mxu0 0.0
        %3805 = vmatpush1.msra.mxu0 0.0
        %3806 = vmatprep.mubr.f32.mxu0 0.0
        %3807 = vmatmul.mubr.f32.gmra.mrb[0].mxu0 %v3647
        %v3808 = vpop.f32.mrb[0].mxu0
        %v3809 = vadd.f32 0.0, %v3808
        %v3810 = vpop.f32.mrb[0].mxu0
        %v3811 = vadd.f32 0.0, %v3810
        %3812 = vmatprep.mubr.f32.mxu0 0.0
        %3813 = vmatmul.mubr.f32.gmra.mrb[0].mxu0 %v3650
        %v3814 = vpop.f32.mrb[0].mxu0
        %v3815 = vadd.f32 0.0, %v3814
        %v3816 = vpop.f32.mrb[0].mxu0
        %v3817 = vadd.f32 0.0, %v3816
        %3818 = vmatprep.mubr.f32.mxu0 0.0
        %3819 = vmatmul.mubr.f32.gmra.mrb[0].mxu0 %v3653
        %v3820 = vpop.f32.mrb[0].mxu0
        %v3821 = vadd.f32 0.0, %v3820
        %v3822 = vpop.f32.mrb[0].mxu0
        %v3823 = vadd.f32 0.0, %v3822
        %3824 = vmatprep.mubr.f32.mxu0 0.0
        %3825 = vmatmul.mubr.f32.gmra.mrb[0].mxu0 %v3656
        %v3826 = vpop.f32.mrb[0].mxu0
        %v3827 = vadd.f32 0.0, %v3826
        %v3828 = vpop.f32.mrb[0].mxu0
        %v3829 = vadd.f32 0.0, %v3828
        %3830 = vmatprep.mubr.f32.mxu0 0.0
        %3831 = vmatmul.mubr.f32.gmra.mrb[0].mxu0 %v3659
        %v3832 = vpop.f32.mrb[0].mxu0
        %v3833 = vadd.f32 0.0, %v3832
        %v3834 = vpop.f32.mrb[0].mxu0
        %v3835 = vadd.f32 0.0, %v3834
        %3836 = vmatprep.mubr.f32.mxu0 0.0
        %3837 = vmatmul.mubr.f32.gmra.mrb[0].mxu0 %v3662
        %v3838 = vpop.f32.mrb[0].mxu0
        %v3839 = vadd.f32 0.0, %v3838
        %v3840 = vpop.f32.mrb[0].mxu0
        %v3841 = vadd.f32 0.0, %v3840
        %3842 = vmatprep.mubr.f32.mxu0 0.0
        %3843 = vmatmul.mubr.f32.gmra.mrb[0].mxu0 %v3665
        %v3844 = vpop.f32.mrb[0].mxu0
        %v3845 = vadd.f32 0.0, %v3844
        %v3846 = vpop.f32.mrb[0].mxu0
        %v3847 = vadd.f32 0.0, %v3846
        %3848 = vmatprep.mubr.f32.mxu0 0.0
        %3849 = vmatmul.mubr.f32.gmra.mrb[0].mxu0 %v3668
        %v3850 = vpop.f32.mrb[0].mxu0
        %v3851 = vadd.f32 0.0, %v3850
        %v3852 = vpop.f32.mrb[0].mxu0
        %v3853 = vadd.f32 0.0, %v3852
        %3854 = vmatprep.mubr.f32.mxu0 0.0
        %3855 = vmatmul.mubr.f32.gmra.mrb[0].mxu0 %v3671
        %v3856 = vpop.f32.mrb[0].mxu0
        %v3857 = vadd.f32 0.0, %v3856
        %v3858 = vpop.f32.mrb[0].mxu0
        %v3859 = vadd.f32 0.0, %v3858
        %3860 = vmatprep.mubr.f32.mxu0 0.0
        %3861 = vmatmul.mubr.f32.gmra.mrb[0].mxu0 %v3674
        %v3862 = vpop.f32.mrb[0].mxu0
        %v3863 = vadd.f32 0.0, %v3862
        %v3864 = vpop.f32.mrb[0].mxu0
        %v3865 = vadd.f32 0.0, %v3864
        %3866 = vmatprep.mubr.f32.mxu0 0.0
        %3867 = vmatmul.mubr.f32.gmra.mrb[0].mxu0 %v3677
        %v3868 = vpop.f32.mrb[0].mxu0
        %v3869 = vadd.f32 0.0, %v3868
        %v3870 = vpop.f32.mrb[0].mxu0
        %v3871 = vadd.f32 0.0, %v3870
        %3872 = vmatprep.mubr.f32.mxu0 0.0
        %3873 = vmatmul.mubr.f32.gmra.mrb[0].mxu0 %v3680
        %v3874 = vpop.f32.mrb[0].mxu0
        %v3875 = vadd.f32 0.0, %v3874
        %v3876 = vpop.f32.mrb[0].mxu0
        %v3877 = vadd.f32 0.0, %v3876
        %3878 = vmatprep.mubr.f32.mxu0 0.0
        %3879 = vmatmul.mubr.f32.gmra.mrb[0].mxu0 %v3683
        %v3880 = vpop.f32.mrb[0].mxu0
        %v3881 = vadd.f32 0.0, %v3880
        %v3882 = vpop.f32.mrb[0].mxu0
        %v3883 = vadd.f32 0.0, %v3882
        %3884 = vmatprep.mubr.f32.mxu0 0.0
        %3885 = vmatmul.mubr.f32.gmra.mrb[0].mxu0 %v3686
        %v3886 = vpop.f32.mrb[0].mxu0
        %v3887 = vadd.f32 0.0, %v3886
        %v3888 = vpop.f32.mrb[0].mxu0
        %v3889 = vadd.f32 0.0, %v3888
        %3890 = vmatprep.mubr.f32.mxu0 0.0
        %3891 = vmatmul.mubr.f32.gmra.mrb[0].mxu0 %v3689
        %v3892 = vpop.f32.mrb[0].mxu0
        %v3893 = vadd.f32 0.0, %v3892
        %v3894 = vpop.f32.mrb[0].mxu0
        %v3895 = vadd.f32 0.0, %v3894
        %3896 = vmatprep.mubr.f32.mxu0 0.0
        %3897 = vmatmul.mubr.f32.gmra.mrb[0].mxu0 %v3692
        %v3898 = vpop.f32.mrb[0].mxu0
        %v3899 = vadd.f32 0.0, %v3898
        %v3900 = vpop.f32.mrb[0].mxu0
        %v3901 = vadd.f32 0.0, %v3900
        %3902 = vmatprep.mubr.f32.mxu0 0.0
        %3903 = vmatmul.mubr.f32.gmra.mrb[0].mxu0 %v3695
        %v3904 = vpop.f32.mrb[0].mxu0
        %v3905 = vadd.f32 0.0, %v3904
        %v3906 = vpop.f32.mrb[0].mxu0
        %v3907 = vadd.f32 0.0, %v3906
        %3908 = vmatprep.mubr.f32.mxu0 0.0
        %3909 = vmatmul.mubr.f32.gmra.mrb[0].mxu0 %v3698
        %v3910 = vpop.f32.mrb[0].mxu0
        %v3911 = vadd.f32 0.0, %v3910
        %v3912 = vpop.f32.mrb[0].mxu0
        %v3913 = vadd.f32 0.0, %v3912
        %3914 = vmatprep.mubr.f32.mxu0 0.0
        %3915 = vmatmul.mubr.f32.gmra.mrb[0].mxu0 %v3701
        %v3916 = vpop.f32.mrb[0].mxu0
        %v3917 = vadd.f32 0.0, %v3916
        %v3918 = vpop.f32.mrb[0].mxu0
        %v3919 = vadd.f32 0.0, %v3918
        %3920 = vmatprep.mubr.f32.mxu0 0.0
        %3921 = vmatmul.mubr.f32.gmra.mrb[0].mxu0 %v3704
        %v3922 = vpop.f32.mrb[0].mxu0
        %v3923 = vadd.f32 0.0, %v3922
        %v3924 = vpop.f32.mrb[0].mxu0
        %v3925 = vadd.f32 0.0, %v3924
        %3926 = vmatprep.mubr.f32.mxu0 0.0
        %3927 = vmatmul.mubr.f32.gmra.mrb[0].mxu0 %v3707
        %v3928 = vpop.f32.mrb[0].mxu0
        %v3929 = vadd.f32 0.0, %v3928
        %v3930 = vpop.f32.mrb[0].mxu0
        %v3931 = vadd.f32 0.0, %v3930
        %3932 = vmatprep.mubr.f32.mxu0 0.0
        %3933 = vmatmul.mubr.f32.gmra.mrb[0].mxu0 %v3710
        %v3934 = vpop.f32.mrb[0].mxu0
        %v3935 = vadd.f32 0.0, %v3934
        %v3936 = vpop.f32.mrb[0].mxu0
        %v3937 = vadd.f32 0.0, %v3936
        %3938 = vmatprep.mubr.f32.mxu0 0.0
        %3939 = vmatmul.mubr.f32.gmra.mrb[0].mxu0 %v3713
        %v3940 = vpop.f32.mrb[0].mxu0
        %v3941 = vadd.f32 0.0, %v3940
        %v3942 = vpop.f32.mrb[0].mxu0
        %v3943 = vadd.f32 0.0, %v3942
        %3944 = vmatprep.mubr.f32.mxu0 0.0
        %3945 = vmatmul.mubr.f32.gmra.mrb[0].mxu0 %v3716
        %v3946 = vpop.f32.mrb[0].mxu0
        %v3947 = vadd.f32 0.0, %v3946
        %v3948 = vpop.f32.mrb[0].mxu0
        %v3949 = vadd.f32 0.0, %v3948
        %3950 = vmatprep.mubr.f32.mxu0 0.0
        %3951 = vmatmul.mubr.f32.gmra.mrb[0].mxu0 %v3719
        %v3952 = vpop.f32.mrb[0].mxu0
        %v3953 = vadd.f32 0.0, %v3952
        %v3954 = vpop.f32.mrb[0].mxu0
        %v3955 = vadd.f32 0.0, %v3954
        %3956 = vmatprep.mubr.f32.mxu0 0.0
        %3957 = vmatmul.mubr.f32.gmra.mrb[0].mxu0 %v3722
        %v3958 = vpop.f32.mrb[0].mxu0
        %v3959 = vadd.f32 0.0, %v3958
        %v3960 = vpop.f32.mrb[0].mxu0
        %v3961 = vadd.f32 0.0, %v3960
        %3962 = vmatprep.mubr.f32.mxu0 0.0
        %3963 = vmatmul.mubr.f32.gmra.mrb[0].mxu0 %v3725
        %v3964 = vpop.f32.mrb[0].mxu0
        %v3965 = vadd.f32 0.0, %v3964
        %v3966 = vpop.f32.mrb[0].mxu0
        %v3967 = vadd.f32 0.0, %v3966
        %3968 = vmatprep.mubr.f32.mxu0 0.0
        %3969 = vmatmul.mubr.f32.gmra.mrb[0].mxu0 %v3728
        %v3970 = vpop.f32.mrb[0].mxu0
        %v3971 = vadd.f32 0.0, %v3970
        %v3972 = vpop.f32.mrb[0].mxu0
        %v3973 = vadd.f32 0.0, %v3972
        %3974 = vmatprep.mubr.f32.mxu0 0.0
        %3975 = vmatmul.mubr.f32.gmra.mrb[0].mxu0 %v3731
        %v3976 = vpop.f32.mrb[0].mxu0
        %v3977 = vadd.f32 0.0, %v3976
        %v3978 = vpop.f32.mrb[0].mxu0
        %v3979 = vadd.f32 0.0, %v3978
        %3980 = vmatprep.mubr.f32.mxu0 0.0
        %3981 = vmatmul.mubr.f32.gmra.mrb[0].mxu0 %v3734
        %v3982 = vpop.f32.mrb[0].mxu0
        %v3983 = vadd.f32 0.0, %v3982
        %v3984 = vpop.f32.mrb[0].mxu0
        %v3985 = vadd.f32 0.0, %v3984
        %3986 = vmatprep.mubr.f32.mxu0 0.0
        %3987 = vmatmul.mubr.f32.gmra.mrb[0].mxu0 %v3737
        %v3988 = vpop.f32.mrb[0].mxu0
        %v3989 = vadd.f32 0.0, %v3988
        %v3990 = vpop.f32.mrb[0].mxu0
        %v3991 = vadd.f32 0.0, %v3990
        %3992 = vmatprep.mubr.f32.mxu0 0.0
        %3993 = vmatmul.mubr.f32.gmra.mrb[0].mxu0 %v3740
        %v3994 = vpop.f32.mrb[0].mxu0
        %v3995 = vadd.f32 0.0, %v3994
        %v3996 = vpop.f32.mrb[0].mxu0
        %v3997 = vadd.f32 0.0, %v3996
        %3998 = vdwg.mxu0
        %v3999 = vld [vmem:[%s5] sm:$0x3]
        %v4001 = vlaneseq
        %v4002 = vshrl.u32 %v4001, 7
        %v4003 = vsub.s32 0, %v4002
        %v4004 = vrot.slane %v3999, %v4003
        %v4005 = vlaneseq
        %v4006 = vshrl.u32 %v4005, 7
        %v4007 = vsub.s32 1, %v4006
        %v4008 = vrot.slane %v3999, %v4007
        %v4011 = vmul.f32 %v3809, %v4004
        %v4012 = vmul.f32 %v3811, %v4008
        %v4013 = vmul.f32 %v3815, %v4004
        %v4014 = vmul.f32 %v3817, %v4008
        %v4015 = vmul.f32 %v3821, %v4004
        %v4016 = vmul.f32 %v3823, %v4008
        %v4017 = vmul.f32 %v3827, %v4004
        %v4018 = vmul.f32 %v3829, %v4008
        %v4019 = vmul.f32 %v3833, %v4004
        %v4020 = vmul.f32 %v3835, %v4008
        %v4021 = vmul.f32 %v3839, %v4004
        %v4022 = vmul.f32 %v3841, %v4008
        %v4023 = vmul.f32 %v3845, %v4004
        %v4024 = vmul.f32 %v3847, %v4008
        %v4025 = vmul.f32 %v3851, %v4004
        %v4026 = vmul.f32 %v3853, %v4008
        %v4027 = vmul.f32 %v3857, %v4004
        %v4028 = vmul.f32 %v3859, %v4008
        %v4029 = vmul.f32 %v3863, %v4004
        %v4030 = vmul.f32 %v3865, %v4008
        %v4031 = vmul.f32 %v3869, %v4004
        %v4032 = vmul.f32 %v3871, %v4008
        %v4033 = vmul.f32 %v3875, %v4004
        %v4034 = vmul.f32 %v3877, %v4008
        %v4035 = vmul.f32 %v3881, %v4004
        %v4036 = vmul.f32 %v3883, %v4008
        %v4037 = vmul.f32 %v3887, %v4004
        %v4038 = vmul.f32 %v3889, %v4008
        %v4039 = vmul.f32 %v3893, %v4004
        %v4040 = vmul.f32 %v3895, %v4008
        %v4041 = vmul.f32 %v3899, %v4004
        %v4042 = vmul.f32 %v3901, %v4008
        %v4043 = vmul.f32 %v3905, %v4004
        %v4044 = vmul.f32 %v3907, %v4008
        %v4045 = vmul.f32 %v3911, %v4004
        %v4046 = vmul.f32 %v3913, %v4008
        %v4047 = vmul.f32 %v3917, %v4004
        %v4048 = vmul.f32 %v3919, %v4008
        %v4049 = vmul.f32 %v3923, %v4004
        %v4050 = vmul.f32 %v3925, %v4008
        %v4051 = vmul.f32 %v3929, %v4004
        %v4052 = vmul.f32 %v3931, %v4008
        %v4053 = vmul.f32 %v3935, %v4004
        %v4054 = vmul.f32 %v3937, %v4008
        %v4055 = vmul.f32 %v3941, %v4004
        %v4056 = vmul.f32 %v3943, %v4008
        %v4057 = vmul.f32 %v3947, %v4004
        %v4058 = vmul.f32 %v3949, %v4008
        %v4059 = vmul.f32 %v3953, %v4004
        %v4060 = vmul.f32 %v3955, %v4008
        %v4061 = vmul.f32 %v3959, %v4004
        %v4062 = vmul.f32 %v3961, %v4008
        %v4063 = vmul.f32 %v3965, %v4004
        %v4064 = vmul.f32 %v3967, %v4008
        %v4065 = vmul.f32 %v3971, %v4004
        %v4066 = vmul.f32 %v3973, %v4008
        %v4067 = vmul.f32 %v3977, %v4004
        %v4068 = vmul.f32 %v3979, %v4008
        %v4069 = vmul.f32 %v3983, %v4004
        %v4070 = vmul.f32 %v3985, %v4008
        %v4071 = vmul.f32 %v3989, %v4004
        %v4072 = vmul.f32 %v3991, %v4008
        %v4073 = vmul.f32 %v3995, %v4004
        %v4074 = vmul.f32 %v3997, %v4008
        %v4075 = vld [vmem:[%s6] sm:$0x3]
        %v4077 = vlaneseq
        %v4078 = vshrl.u32 %v4077, 7
        %v4079 = vsub.s32 0, %v4078
        %v4080 = vrot.slane %v4075, %v4079
        %v4081 = vlaneseq
        %v4082 = vshrl.u32 %v4081, 7
        %v4083 = vsub.s32 1, %v4082
        %v4084 = vrot.slane %v4075, %v4083
        %v4087 = vadd.f32 %v4011, %v4080
        %v4088 = vadd.f32 %v4012, %v4084
        %v4089 = vadd.f32 %v4013, %v4080
        %v4090 = vadd.f32 %v4014, %v4084
        %v4091 = vadd.f32 %v4015, %v4080
        %v4092 = vadd.f32 %v4016, %v4084
        %v4093 = vadd.f32 %v4017, %v4080
        %v4094 = vadd.f32 %v4018, %v4084
        %v4095 = vadd.f32 %v4019, %v4080
        %v4096 = vadd.f32 %v4020, %v4084
        %v4097 = vadd.f32 %v4021, %v4080
        %v4098 = vadd.f32 %v4022, %v4084
        %v4099 = vadd.f32 %v4023, %v4080
        %v4100 = vadd.f32 %v4024, %v4084
        %v4101 = vadd.f32 %v4025, %v4080
        %v4102 = vadd.f32 %v4026, %v4084
        %v4103 = vadd.f32 %v4027, %v4080
        %v4104 = vadd.f32 %v4028, %v4084
        %v4105 = vadd.f32 %v4029, %v4080
        %v4106 = vadd.f32 %v4030, %v4084
        %v4107 = vadd.f32 %v4031, %v4080
        %v4108 = vadd.f32 %v4032, %v4084
        %v4109 = vadd.f32 %v4033, %v4080
        %v4110 = vadd.f32 %v4034, %v4084
        %v4111 = vadd.f32 %v4035, %v4080
        %v4112 = vadd.f32 %v4036, %v4084
        %v4113 = vadd.f32 %v4037, %v4080
        %v4114 = vadd.f32 %v4038, %v4084
        %v4115 = vadd.f32 %v4039, %v4080
        %v4116 = vadd.f32 %v4040, %v4084
        %v4117 = vadd.f32 %v4041, %v4080
        %v4118 = vadd.f32 %v4042, %v4084
        %v4119 = vadd.f32 %v4043, %v4080
        %v4120 = vadd.f32 %v4044, %v4084
        %v4121 = vadd.f32 %v4045, %v4080
        %v4122 = vadd.f32 %v4046, %v4084
        %v4123 = vadd.f32 %v4047, %v4080
        %v4124 = vadd.f32 %v4048, %v4084
        %v4125 = vadd.f32 %v4049, %v4080
        %v4126 = vadd.f32 %v4050, %v4084
        %v4127 = vadd.f32 %v4051, %v4080
        %v4128 = vadd.f32 %v4052, %v4084
        %v4129 = vadd.f32 %v4053, %v4080
        %v4130 = vadd.f32 %v4054, %v4084
        %v4131 = vadd.f32 %v4055, %v4080
        %v4132 = vadd.f32 %v4056, %v4084
        %v4133 = vadd.f32 %v4057, %v4080
        %v4134 = vadd.f32 %v4058, %v4084
        %v4135 = vadd.f32 %v4059, %v4080
        %v4136 = vadd.f32 %v4060, %v4084
        %v4137 = vadd.f32 %v4061, %v4080
        %v4138 = vadd.f32 %v4062, %v4084
        %v4139 = vadd.f32 %v4063, %v4080
        %v4140 = vadd.f32 %v4064, %v4084
        %v4141 = vadd.f32 %v4065, %v4080
        %v4142 = vadd.f32 %v4066, %v4084
        %v4143 = vadd.f32 %v4067, %v4080
        %v4144 = vadd.f32 %v4068, %v4084
        %v4145 = vadd.f32 %v4069, %v4080
        %v4146 = vadd.f32 %v4070, %v4084
        %v4147 = vadd.f32 %v4071, %v4080
        %v4148 = vadd.f32 %v4072, %v4084
        %v4149 = vadd.f32 %v4073, %v4080
        %v4150 = vadd.f32 %v4074, %v4084
        %v4151 = vmax.f32 %v4087, 0.0
        %v4152 = vmax.f32 %v4088, 0.0
        %v4153 = vmax.f32 %v4089, 0.0
        %v4154 = vmax.f32 %v4090, 0.0
        %v4155 = vmax.f32 %v4091, 0.0
        %v4156 = vmax.f32 %v4092, 0.0
        %v4157 = vmax.f32 %v4093, 0.0
        %v4158 = vmax.f32 %v4094, 0.0
        %v4159 = vmax.f32 %v4095, 0.0
        %v4160 = vmax.f32 %v4096, 0.0
        %v4161 = vmax.f32 %v4097, 0.0
        %v4162 = vmax.f32 %v4098, 0.0
        %v4163 = vmax.f32 %v4099, 0.0
        %v4164 = vmax.f32 %v4100, 0.0
        %v4165 = vmax.f32 %v4101, 0.0
        %v4166 = vmax.f32 %v4102, 0.0
        %v4167 = vmax.f32 %v4103, 0.0
        %v4168 = vmax.f32 %v4104, 0.0
        %v4169 = vmax.f32 %v4105, 0.0
        %v4170 = vmax.f32 %v4106, 0.0
        %v4171 = vmax.f32 %v4107, 0.0
        %v4172 = vmax.f32 %v4108, 0.0
        %v4173 = vmax.f32 %v4109, 0.0
        %v4174 = vmax.f32 %v4110, 0.0
        %v4175 = vmax.f32 %v4111, 0.0
        %v4176 = vmax.f32 %v4112, 0.0
        %v4177 = vmax.f32 %v4113, 0.0
        %v4178 = vmax.f32 %v4114, 0.0
        %v4179 = vmax.f32 %v4115, 0.0
        %v4180 = vmax.f32 %v4116, 0.0
        %v4181 = vmax.f32 %v4117, 0.0
        %v4182 = vmax.f32 %v4118, 0.0
        %v4183 = vmax.f32 %v4119, 0.0
        %v4184 = vmax.f32 %v4120, 0.0
        %v4185 = vmax.f32 %v4121, 0.0
        %v4186 = vmax.f32 %v4122, 0.0
        %v4187 = vmax.f32 %v4123, 0.0
        %v4188 = vmax.f32 %v4124, 0.0
        %v4189 = vmax.f32 %v4125, 0.0
        %v4190 = vmax.f32 %v4126, 0.0
        %v4191 = vmax.f32 %v4127, 0.0
        %v4192 = vmax.f32 %v4128, 0.0
        %v4193 = vmax.f32 %v4129, 0.0
        %v4194 = vmax.f32 %v4130, 0.0
        %v4195 = vmax.f32 %v4131, 0.0
        %v4196 = vmax.f32 %v4132, 0.0
        %v4197 = vmax.f32 %v4133, 0.0
        %v4198 = vmax.f32 %v4134, 0.0
        %v4199 = vmax.f32 %v4135, 0.0
        %v4200 = vmax.f32 %v4136, 0.0
        %v4201 = vmax.f32 %v4137, 0.0
        %v4202 = vmax.f32 %v4138, 0.0
        %v4203 = vmax.f32 %v4139, 0.0
        %v4204 = vmax.f32 %v4140, 0.0
        %v4205 = vmax.f32 %v4141, 0.0
        %v4206 = vmax.f32 %v4142, 0.0
        %v4207 = vmax.f32 %v4143, 0.0
        %v4208 = vmax.f32 %v4144, 0.0
        %v4209 = vmax.f32 %v4145, 0.0
        %v4210 = vmax.f32 %v4146, 0.0
        %v4211 = vmax.f32 %v4147, 0.0
        %v4212 = vmax.f32 %v4148, 0.0
        %v4213 = vmax.f32 %v4149, 0.0
        %v4214 = vmax.f32 %v4150, 0.0
        %4215 = vst [vmem:[%s285] sm:$0xff] %v4151
        %4216 = vst [vmem:[%s285 + $0x8] sm:$0xff] %v4152
        %4217 = vst [vmem:[%s285 + $0x10] sm:$0xff] %v4153
        %4218 = vst [vmem:[%s285 + $0x18] sm:$0xff] %v4154
        %4219 = vst [vmem:[%s285 + $0x20] sm:$0xff] %v4155
        %4220 = vst [vmem:[%s285 + $0x28] sm:$0xff] %v4156
        %4221 = vst [vmem:[%s285 + $0x30] sm:$0xff] %v4157
        %4222 = vst [vmem:[%s285 + $0x38] sm:$0xff] %v4158
        %4223 = vst [vmem:[%s285 + $0x40] sm:$0xff] %v4159
        %4224 = vst [vmem:[%s285 + $0x48] sm:$0xff] %v4160
        %4225 = vst [vmem:[%s285 + $0x50] sm:$0xff] %v4161
        %4226 = vst [vmem:[%s285 + $0x58] sm:$0xff] %v4162
        %4227 = vst [vmem:[%s285 + $0x60] sm:$0xff] %v4163
        %4228 = vst [vmem:[%s285 + $0x68] sm:$0xff] %v4164
        %4229 = vst [vmem:[%s285 + $0x70] sm:$0xff] %v4165
        %4230 = vst [vmem:[%s285 + $0x78] sm:$0xff] %v4166
        %4231 = vst [vmem:[%s285 + $0x80] sm:$0xff] %v4167
        %4232 = vst [vmem:[%s285 + $0x88] sm:$0xff] %v4168
        %4233 = vst [vmem:[%s285 + $0x90] sm:$0xff] %v4169
        %4234 = vst [vmem:[%s285 + $0x98] sm:$0xff] %v4170
        %4235 = vst [vmem:[%s285 + $0xa0] sm:$0xff] %v4171
        %4236 = vst [vmem:[%s285 + $0xa8] sm:$0xff] %v4172
        %4237 = vst [vmem:[%s285 + $0xb0] sm:$0xff] %v4173
        %4238 = vst [vmem:[%s285 + $0xb8] sm:$0xff] %v4174
        %4239 = vst [vmem:[%s285 + $0xc0] sm:$0xff] %v4175
        %4240 = vst [vmem:[%s285 + $0xc8] sm:$0xff] %v4176
        %4241 = vst [vmem:[%s285 + $0xd0] sm:$0xff] %v4177
        %4242 = vst [vmem:[%s285 + $0xd8] sm:$0xff] %v4178
        %4243 = vst [vmem:[%s285 + $0xe0] sm:$0xff] %v4179
        %4244 = vst [vmem:[%s285 + $0xe8] sm:$0xff] %v4180
        %4245 = vst [vmem:[%s285 + $0xf0] sm:$0xff] %v4181
        %4246 = vst [vmem:[%s285 + $0xf8] sm:$0xff] %v4182
        %4247 = vst [vmem:[%s285 + $0x100] sm:$0xff] %v4183
        %4248 = vst [vmem:[%s285 + $0x108] sm:$0xff] %v4184
        %4249 = vst [vmem:[%s285 + $0x110] sm:$0xff] %v4185
        %4250 = vst [vmem:[%s285 + $0x118] sm:$0xff] %v4186
        %4251 = vst [vmem:[%s285 + $0x120] sm:$0xff] %v4187
        %4252 = vst [vmem:[%s285 + $0x128] sm:$0xff] %v4188
        %4253 = vst [vmem:[%s285 + $0x130] sm:$0xff] %v4189
        %4254 = vst [vmem:[%s285 + $0x138] sm:$0xff] %v4190
        %4255 = vst [vmem:[%s285 + $0x140] sm:$0xff] %v4191
        %4256 = vst [vmem:[%s285 + $0x148] sm:$0xff] %v4192
        %4257 = vst [vmem:[%s285 + $0x150] sm:$0xff] %v4193
        %4258 = vst [vmem:[%s285 + $0x158] sm:$0xff] %v4194
        %4259 = vst [vmem:[%s285 + $0x160] sm:$0xff] %v4195
        %4260 = vst [vmem:[%s285 + $0x168] sm:$0xff] %v4196
        %4261 = vst [vmem:[%s285 + $0x170] sm:$0xff] %v4197
        %4262 = vst [vmem:[%s285 + $0x178] sm:$0xff] %v4198
        %4263 = vst [vmem:[%s285 + $0x180] sm:$0xff] %v4199
        %4264 = vst [vmem:[%s285 + $0x188] sm:$0xff] %v4200
        %4265 = vst [vmem:[%s285 + $0x190] sm:$0xff] %v4201
        %4266 = vst [vmem:[%s285 + $0x198] sm:$0xff] %v4202
        %4267 = vst [vmem:[%s285 + $0x1a0] sm:$0xff] %v4203
        %4268 = vst [vmem:[%s285 + $0x1a8] sm:$0xff] %v4204
        %4269 = vst [vmem:[%s285 + $0x1b0] sm:$0xff] %v4205
        %4270 = vst [vmem:[%s285 + $0x1b8] sm:$0xff] %v4206
        %4271 = vst [vmem:[%s285 + $0x1c0] sm:$0xff] %v4207
        %4272 = vst [vmem:[%s285 + $0x1c8] sm:$0xff] %v4208
        %4273 = vst [vmem:[%s285 + $0x1d0] sm:$0xff] %v4209
        %4274 = vst [vmem:[%s285 + $0x1d8] sm:$0xff] %v4210
        %4275 = vst [vmem:[%s285 + $0x1e0] sm:$0xff] %v4211
        %4276 = vst [vmem:[%s285 + $0x1e8] sm:$0xff] %v4212
        %4277 = vst [vmem:[%s285 + $0x1f0] sm:$0xff] %v4213
        %4278 = vst [vmem:[%s285 + $0x1f8] sm:$0xff] %v4214
        %s4279 = sand.u32 %s195, 1
        %s4280 = scalar_lea.sflag [#allocation4], %s4279
        %s4281 = sand.u32 %s195, 1
        %s4282 = smul.addr %s4281, 512
        %s4283 = scalar_lea.vmem [#allocation3], %s4282
        // Predicated region
        $region53: #{tpu_custom_call.1} parent=47 // pred_check
          %p4284 = pneg %p205
        $region54: #{tpu_custom_call.1} parent=47 // pred_check_branch
          %4286 = sbr.rel (%p4284) target = $region56
        $region55: #{tpu_custom_call.1} parent=47 // pred_region
          %s4287 = smul.u32 16, %s26
          %s4289 = ssub.s32 8192, 8192
          %4290 = vsyncadd %s4280, %s4289
          %s4291 = smul.addr %s4287, 4
          %s4292 = smul.addr %s25, 64
          %s4293 = sadd.s32 %s4291, %s4292
          %s4294 = smul.addr %s4293, 128
          %s4295 = scalar_lea.hbm %s7, %s4294
          %s4296 = sshll.u32 %s4283, 4
          %s4297 = int_to_ptr.vmem [resolvable:$true] %s4296
          %4302 = dma.vmem_to_hbm [thread:$0]  %s4297, 8192, %s4295, %s4280, 256, 256, 16
        $region56: #{tpu_custom_call.1} parent=47 // pred_fallthru
          _
      $region48: #{tpu_custom_call.1} parent=5 // pred_fallthru
        _
      %p4303 = scmp.le.s32.totalorder 2, %s16
      // Predicated region
      $region57: #{tpu_custom_call.1} parent=5 // pred_check
        %p4304 = pneg %p4303
      $region58: #{tpu_custom_call.1} parent=5 // pred_check_branch
        %4306 = sbr.rel (%p4304) target = $region60
      $region59: #{tpu_custom_call.1} parent=5 // pred_region
        %s4307 = ssub.s32 %s16, 2
        // Predicated region
        $region61: #{tpu_custom_call.1} parent=59 // pred_check
          %p4308 = pneg %p211
        $region62: #{tpu_custom_call.1} parent=59 // pred_check_branch
          %4310 = sbr.rel (%p4308) target = $region64
        $region63: #{tpu_custom_call.1} parent=59 // pred_region
          %s4311 = sand.u32 %s196, 1
          %s4312 = scalar_lea.sflag [#allocation4], %s4311
          %s4313 = sand.u32 %s196, 1
          %s4314 = smul.addr %s4313, 512
          %s4315 = scalar_lea.vmem [#allocation3], %s4314
          %4316 = dma.done %s4312, 8192
        $region64: #{tpu_custom_call.1} parent=59 // pred_fallthru
          _
      $region60: #{tpu_custom_call.1} parent=5 // pred_fallthru
        _
    $region6: #{tpu_custom_call.1} parent=1 // loop_footer
      %s20 = sadd.s32 1, %s16
    $region7: #{tpu_custom_call.1} parent=1 // loop_footer_branch
      %15 = sbr.rel target = $region3
    $region8: #{tpu_custom_call.1} parent=1 // loop_exit
      _
    %4317 = vsyncpa [#allocation4], 1
    %s4318 = scalar_lea.sflag [#allocation4], 1
    %4319 = vsyncpa %s4318, 1

</llo_original>
